<compile_context>
chip_gen: v7x
topology: tpu7x:2x2x1
jax: 0.10.0
libtpu: 0.0.40
codegen_flags: <defaults>
</compile_context>

<pallas_src>
import functools

import jax
import jax.numpy as jnp
from jax.experimental import pallas as pl
from jax.experimental.pallas import tpu as pltpu


# ----------------------------------------------------------------------------
# Pallas kernels
# ----------------------------------------------------------------------------
def _conv_kernel(*refs, has_bias, relu, has_res):
    """matmul (bf16 MXU, f32 acc) -> [+bias] -> [ReLU] -> [+residual] -> store."""
    refs = list(refs)
    o_ref = refs.pop()            # (Cout, bm) output block
    x_ref = refs.pop(0)           # (K, bm)  bf16 im2col patches
    w_ref = refs.pop(0)           # (Cout, K) bf16 weights (BN scale pre-folded)
    y = jnp.dot(w_ref[...], x_ref[...], preferred_element_type=jnp.float32)
    if has_bias:                  # folded BN shift, f32 (Cout, 1)
        y = y + refs.pop(0)[...]
    if relu:
        y = jnp.maximum(y, 0.0)
    if has_res:                   # fused residual add (bf16 in, f32 add)
        y = y + refs.pop(0)[...].astype(jnp.float32)
    o_ref[...] = y.astype(o_ref.dtype)


def _dual_conv_kernel(x1_ref, w1_ref, b1_ref, x2_ref, w2_ref, b2_ref,
                      o1_ref, o2_ref):
    """Block conv1 (3x3 +bias +ReLU) and its 1x1 downsample (+bias) in one call."""
    y1 = jnp.dot(w1_ref[...], x1_ref[...], preferred_element_type=jnp.float32)
    o1_ref[...] = jnp.maximum(y1 + b1_ref[...], 0.0).astype(o1_ref.dtype)
    y2 = jnp.dot(w2_ref[...], x2_ref[...], preferred_element_type=jnp.float32)
    o2_ref[...] = (y2 + b2_ref[...]).astype(o2_ref.dtype)


# ----------------------------------------------------------------------------
# pallas_call wrappers
# ----------------------------------------------------------------------------
def _pick_bm(m):
    # Full-M lane block (grid=1, zero per-step overhead) for everything small;
    # split the big early convs in two so v7x can shard them across its 2 TCs.
    if 1024 <= m <= 4096 and m % 256 == 0:
        return m // 2
    if m <= 2048:
        return m
    return 2048


def _conv_pallas(xmat, wmat, bias, *, relu, res=None, out_dtype=jnp.bfloat16):
    K, M = xmat.shape
    Cout = wmat.shape[0]
    bm = _pick_bm(M)
    grid = (pl.cdiv(M, bm),)

    inputs = [xmat, wmat]
    in_specs = [pl.BlockSpec((K, bm), lambda i: (0, i)),
                pl.BlockSpec((Cout, K), lambda i: (0, 0))]
    if bias is not None:
        inputs.append(bias)
        in_specs.append(pl.BlockSpec((Cout, 1), lambda i: (0, 0)))
    io_alias = {}
    if res is not None:
        inputs.append(res)
        in_specs.append(pl.BlockSpec((Cout, bm), lambda i: (0, i)))
        if res.dtype == out_dtype and res.shape == (Cout, M):
            io_alias = {len(inputs) - 1: 0}        # residual add done in place

    kern = functools.partial(_conv_kernel, has_bias=bias is not None,
                             relu=relu, has_res=res is not None)
    return pl.pallas_call(
        kern,
        out_shape=jax.ShapeDtypeStruct((Cout, M), out_dtype),
        grid=grid,
        in_specs=in_specs,
        out_specs=pl.BlockSpec((Cout, bm), lambda i: (0, i)),
        input_output_aliases=io_alias,
        compiler_params=pltpu.CompilerParams(dimension_semantics=("parallel",)),
    )(*inputs)


def _dual_conv_pallas(x1, w1, b1, x2, w2, b2, out_dtype=jnp.bfloat16):
    K1, M = x1.shape
    K2, M2 = x2.shape
    assert M == M2
    C1, C2 = w1.shape[0], w2.shape[0]
    bm = _pick_bm(M)
    grid = (pl.cdiv(M, bm),)
    return pl.pallas_call(
        _dual_conv_kernel,
        out_shape=(jax.ShapeDtypeStruct((C1, M), out_dtype),
                   jax.ShapeDtypeStruct((C2, M), out_dtype)),
        grid=grid,
        in_specs=[pl.BlockSpec((K1, bm), lambda i: (0, i)),
                  pl.BlockSpec((C1, K1), lambda i: (0, 0)),
                  pl.BlockSpec((C1, 1), lambda i: (0, 0)),
                  pl.BlockSpec((K2, bm), lambda i: (0, i)),
                  pl.BlockSpec((C2, K2), lambda i: (0, 0)),
                  pl.BlockSpec((C2, 1), lambda i: (0, 0))],
        out_specs=(pl.BlockSpec((C1, bm), lambda i: (0, i)),
                   pl.BlockSpec((C2, bm), lambda i: (0, i))),
        compiler_params=pltpu.CompilerParams(dimension_semantics=("parallel",)),
    )(x1, w1, b1, x2, w2, b2)


# ----------------------------------------------------------------------------
# XLA glue (fuses with the pad / im2col slices; no extra HBM round trips)
# ----------------------------------------------------------------------------
def _bn_relu(x, aff):
    """Pre-conv BatchNorm(eval)+ReLU, channel-first (C, N, H, W), f32 math."""
    s, t = aff
    y = x.astype(jnp.float32) * s.reshape(-1, 1, 1, 1) + t.reshape(-1, 1, 1, 1)
    return jnp.maximum(y, 0.0)


def _im2col(x, ksize, stride, padding):
    """(C, N, H, W) -> bf16 (KH*KW*C, N*Ho*Wo) im2col matrix (zero padding)."""
    C, N, H, W = x.shape
    KH, KW = ksize
    sh, sw = stride
    ph, pw = padding
    Ho = (H + 2 * ph - KH) // sh + 1
    Wo = (W + 2 * pw - KW) // sw + 1
    M = N * Ho * Wo
    xb = x.astype(jnp.bfloat16)
    if ph or pw:
        xb = jnp.pad(xb, ((0, 0), (0, 0), (ph, ph), (pw, pw)))
    taps = [xb[:, :, kh:kh + sh * (Ho - 1) + 1:sh,
                     kw:kw + sw * (Wo - 1) + 1:sw].reshape(C, M)
            for kh in range(KH) for kw in range(KW)]
    xmat = taps[0] if len(taps) == 1 else jnp.concatenate(taps, axis=0)
    return xmat, (Ho, Wo)


def _avgpool2x2(x, stride, padding):
    """AvgPool2d(kernel_size=2), count_include_pad=True. Left to XLA (tiny)."""
    C, N, H, W = x.shape
    sh, sw = stride
    ph, pw = padding
    Ho = (H + 2 * ph - 2) // sh + 1
    Wo = (W + 2 * pw - 2) // sw + 1
    xf = x.astype(jnp.float32)
    if ph or pw:
        xf = jnp.pad(xf, ((0, 0), (0, 0), (ph, ph), (pw, pw)))
    acc = sum(xf[:, :, dh:dh + sh * (Ho - 1) + 1:sh,
                       dw:dw + sw * (Wo - 1) + 1:sw]
              for dh in range(2) for dw in range(2))
    return (0.25 * acc).astype(jnp.bfloat16)


# ----------------------------------------------------------------------------
# Parameter preparation (one-time, outside jit): BN folding + bf16 weight layout
# ----------------------------------------------------------------------------
def _bn_affine(bn, eps=1e-5):
    s = bn["gamma"] * jax.lax.rsqrt(bn["var"] + eps)
    t = bn["beta"] - bn["mean"] * s
    return s, t


def _fold_w(w, *, pre=None, post=None):
    """Fold BN affines into a conv weight.

    pre : affine on the conv INPUT (only valid when the conv has no padding and
          no ReLU sits between the BN and the conv — i.e. the 1x1 downsample).
    post: affine on the conv OUTPUT.
    Returns bf16 (Cout, K) weight (columns ordered tap-major then input channel,
    matching _im2col rows) and an f32 (Cout, 1) bias or None.
    """
    Cout, Cin, KH, KW = w.shape
    wf = w.astype(jnp.float32)
    bias = jnp.zeros((Cout,), jnp.float32)
    if pre is not None:
        s, t = pre
        bias = bias + jnp.einsum("oikl,i->o", wf, t)
        wf = wf * s.reshape(1, Cin, 1, 1)
    if post is not None:
        s, t = post
        wf = wf * s.reshape(Cout, 1, 1, 1)
        bias = bias * s + t
    wmat = jnp.transpose(wf, (0, 2, 3, 1)).reshape(Cout, KH * KW * Cin)
    b = bias.reshape(Cout, 1) if (pre is not None or post is not None) else None
    return wmat.astype(jnp.bfloat16), b


def _prep_conv(w, pre=None, post=None):
    wmat, b = _fold_w(w, pre=pre, post=post)
    return {"w": wmat, "b": b}


def _prep_block(bp):
    ds = None
    if bp["downsample"] is not None:
        ds = _prep_conv(bp["downsample"]["conv"],
                        pre=_bn_affine(bp["downsample"]["bn"]))
    w1, b1 = _fold_w(bp["conv1"], post=_bn_affine(bp["bn2"]))  # bn2+relu fused in
    w2, _ = _fold_w(bp["conv2"])
    return {"bn1_aff": _bn_affine(bp["bn1"]), "w1": w1, "b1": b1, "w2": w2, "ds": ds}


def prepare_params(p):
    prep = {
        "conv0_1": _prep_conv(p["conv0_1"], post=_bn_affine(p["bn0_1"])),
        "conv0_2": _prep_conv(p["conv0_2"]),
        "bn1_aff": _bn_affine(p["bn1"]), "conv1": _prep_conv(p["conv1"]),
        "bn2_aff": _bn_affine(p["bn2"]), "conv2": _prep_conv(p["conv2"]),
        "bn3_aff": _bn_affine(p["bn3"]), "conv3": _prep_conv(p["conv3"]),
        "bn4_1_aff": _bn_affine(p["bn4_1"]),
        "conv4_1": _prep_conv(p["conv4_1"], post=_bn_affine(p["bn4_2"])),
        "conv4_2": _prep_conv(p["conv4_2"], post=_bn_affine(p["bn4_3"])),
    }
    for name in ("layer1", "layer2", "layer3", "layer4"):
        prep[name] = [_prep_block(bp) for bp in p[name]]
    return prep


# ----------------------------------------------------------------------------
# Forward pass
# ----------------------------------------------------------------------------
def _conv_layer(x, cp, ksize, stride, padding, *, relu, out_dtype=jnp.bfloat16):
    N = x.shape[1]
    xmat, (Ho, Wo) = _im2col(x, ksize, stride, padding)
    out = _conv_pallas(xmat, cp["w"], cp["b"], relu=relu, out_dtype=out_dtype)
    return out.reshape(cp["w"].shape[0], N, Ho, Wo)


def _block_forward(bp, x):
    # pre-activation BasicBlock, 2 pallas_calls:
    #   o1 = relu(bn2(conv1(pad(relu(bn1(x))))))     (conv1 [+ fused downsample])
    #   r  = conv1x1(bn_ds(x))  or  x                (BN folded into ds weights)
    #   y  = conv2(pad(o1)) + r                      (residual added in place)
    C, N, H, W = x.shape
    M = N * H * W
    x1, _ = _im2col(_bn_relu(x, bp["bn1_aff"]), (3, 3), (1, 1), (1, 1))
    if bp["ds"] is not None:
        o1, r = _dual_conv_pallas(x1, bp["w1"], bp["b1"],
                                  x.reshape(C, M).astype(jnp.bfloat16),
                                  bp["ds"]["w"], bp["ds"]["b"])
    else:
        o1 = _conv_pallas(x1, bp["w1"], bp["b1"], relu=True)
        r = x.reshape(C, M).astype(jnp.bfloat16)
    planes = bp["w1"].shape[0]
    x2, _ = _im2col(o1.reshape(planes, N, H, W), (3, 3), (1, 1), (1, 1))
    y = _conv_pallas(x2, bp["w2"], None, relu=False, res=r)
    return y.reshape(planes, N, H, W)


def _run_layer(blocks, x):
    for bp in blocks:
        x = _block_forward(bp, x)
    return x


def resnet_forward(prep, x_nchw):
    # NCHW -> channel-first (C, N, H, W); kernels see lane-dense (C, M) tiles.
    x = jnp.transpose(x_nchw.astype(jnp.float32), (1, 0, 2, 3))
    x = _conv_layer(x, prep["conv0_1"], (3, 3), (1, 1), (1, 1), relu=True)   # conv0_1+bn0_1+relu
    x = _conv_layer(x, prep["conv0_2"], (3, 3), (1, 1), (1, 1), relu=False)  # conv0_2
    x = _avgpool2x2(x, (2, 2), (0, 0))                                       # maxpool1 (AvgPool2d)
    x = _run_layer(prep["layer1"], x)
    x = _conv_layer(_bn_relu(x, prep["bn1_aff"]), prep["conv1"],
                    (3, 3), (1, 1), (1, 1), relu=False)                      # bn1+relu+conv1
    x = _avgpool2x2(x, (2, 2), (0, 0))                                       # maxpool2
    x = _run_layer(prep["layer2"], x)
    x = _conv_layer(_bn_relu(x, prep["bn2_aff"]), prep["conv2"],
                    (3, 3), (1, 1), (1, 1), relu=False)                      # bn2+relu+conv2
    x = _avgpool2x2(x, (2, 1), (0, 1))                                       # maxpool3
    x = _run_layer(prep["layer3"], x)
    x = _conv_layer(_bn_relu(x, prep["bn3_aff"]), prep["conv3"],
                    (3, 3), (1, 1), (1, 1), relu=False)                      # bn3+relu+conv3
    x = _run_layer(prep["layer4"], x)
    # TODO(synk): conv4_1 -> conv4_2 could be one pallas_call with a VMEM scratch
    #             intermediate; the in-kernel 2x2 re-windowing of the tiny
    #             (C, N, 2, W) block needs a Mosaic relayout, so it stays 2 calls.
    x = _conv_layer(_bn_relu(x, prep["bn4_1_aff"]), prep["conv4_1"],
                    (2, 2), (2, 1), (0, 1), relu=True)                       # bn4_1+relu+conv4_1+bn4_2+relu
    x = _conv_layer(x, prep["conv4_2"], (2, 2), (1, 1), (0, 0),
                    relu=False, out_dtype=jnp.float32)                       # conv4_2+bn4_3
    return jnp.transpose(x, (1, 0, 2, 3))                                    # -> NCHW


# ----------------------------------------------------------------------------
# Parameter init (PyTorch layout: OIHW conv weights, BN running stats)
# ----------------------------------------------------------------------------
class _KeyGen:
    def __init__(self, key):
        self.key = key

    def __call__(self):
        self.key, sub = jax.random.split(self.key)
        return sub


def init_resnet_params(key, input_channel, output_channel, layers):
    kg = _KeyGen(key)
    ocb = [output_channel // 4, output_channel // 2, output_channel, output_channel]
    inplanes = [output_channel // 8]

    def conv_w(cin, cout, kh, kw):
        fan_in = cin * kh * kw
        std = (2.0 / fan_in) ** 0.5
        return std * jax.random.normal(kg(), (cout, cin, kh, kw), jnp.float32)

    def bn_p(c):
        return dict(
            gamma=1.0 + 0.1 * jax.random.normal(kg(), (c,), jnp.float32),
            beta=0.1 * jax.random.normal(kg(), (c,), jnp.float32),
            mean=0.1 * jax.random.normal(kg(), (c,), jnp.float32),
            var=jnp.abs(1.0 + 0.1 * jax.random.normal(kg(), (c,), jnp.float32)),
        )

    def make_block(cin, planes):
        ds = None
        if cin != planes:   # expansion == 1, stride == 1 throughout this net
            ds = dict(bn=bn_p(cin), conv=conv_w(cin, planes, 1, 1))
        return dict(bn1=bn_p(cin), conv1=conv_w(cin, planes, 3, 3),
                    bn2=bn_p(planes), conv2=conv_w(planes, planes, 3, 3),
                    downsample=ds)

    def make_layer(planes, nblocks):
        blocks = [make_block(inplanes[0], planes)]
        inplanes[0] = planes
        for _ in range(1, nblocks):
            blocks.append(make_block(planes, planes))
        return blocks

    p = {}
    p["conv0_1"] = conv_w(input_channel, output_channel // 8, 3, 3)
    p["bn0_1"] = bn_p(output_channel // 8)
    p["conv0_2"] = conv_w(output_channel // 8, inplanes[0], 3, 3)
    p["layer1"] = make_layer(ocb[0], layers[0])
    p["bn1"] = bn_p(ocb[0]); p["conv1"] = conv_w(ocb[0], ocb[0], 3, 3)
    p["layer2"] = make_layer(ocb[1], layers[1])
    p["bn2"] = bn_p(ocb[1]); p["conv2"] = conv_w(ocb[1], ocb[1], 3, 3)
    p["layer3"] = make_layer(ocb[2], layers[2])
    p["bn3"] = bn_p(ocb[2]); p["conv3"] = conv_w(ocb[2], ocb[2], 3, 3)
    p["layer4"] = make_layer(ocb[3], layers[3])
    p["bn4_1"] = bn_p(ocb[3]); p["conv4_1"] = conv_w(ocb[3], ocb[3], 2, 2)
    p["bn4_2"] = bn_p(ocb[3]); p["conv4_2"] = conv_w(ocb[3], ocb[3], 2, 2)
    p["bn4_3"] = bn_p(ocb[3])
    return p


# ----------------------------------------------------------------------------
if __name__ == "__main__":
    key = jax.random.PRNGKey(0)
    pkey, xkey = jax.random.split(key)

    # small shapes: height must be >= 32 (the "32px" pipeline halves H 5 times)
    N, Cin, H, W = 2, 3, 32, 16
    output_channel = 32
    layers = [1, 1, 1, 1]

    params = init_resnet_params(pkey, Cin, output_channel, layers)
    prep = prepare_params(params)       # one-time BN folding / bf16 weight layout
    x = jax.random.normal(xkey, (N, Cin, H, W), jnp.float32)

    fwd = jax.jit(resnet_forward)
    y = fwd(prep, x)
    jax.block_until_ready(y)

    assert y.shape == (N, output_channel, 1, 5), y.shape
    assert bool(jnp.all(jnp.isfinite(y)))
    print("KERNEL_OK")
</pallas_src>

<mosaic_0001>
module attributes {stable_mosaic.version = 11 : i64} {
  func.func @_conv_kernel(%arg0: i32, %arg1: memref<27x512xbf16, #tpu.memory_space<vmem>>, %arg2: memref<4x27xbf16, #tpu.memory_space<vmem>>, %arg3: memref<4x1xf32, #tpu.memory_space<vmem>>, %arg4: memref<4x512xbf16, #tpu.memory_space<vmem>>) attributes {dimension_semantics = [#tpu.dimension_semantics<parallel>], iteration_bounds = array<i64: 2>, scalar_prefetch = 0 : i64, scratch_operands = 0 : i64, tpu.core_type = #tpu.core_type<tc>, window_params = [{transform_indices = @transform_0, window_bounds = array<i64: 27, 512>}, {pipeline_mode = #tpu.pipeline_mode<synchronous>, transform_indices = @transform_1, window_bounds = array<i64: 4, 27>}, {pipeline_mode = #tpu.pipeline_mode<synchronous>, transform_indices = @transform_2, window_bounds = array<i64: 4, 1>}, {transform_indices = @transform_3, window_bounds = array<i64: 4, 512>}]} {
    %c0 = arith.constant 0 : index
    %c0_0 = arith.constant 0 : index
    %0 = vector.load %arg2[%c0, %c0_0] : memref<4x27xbf16, #tpu.memory_space<vmem>>, vector<4x27xbf16>
    %c0_1 = arith.constant 0 : index
    %c0_2 = arith.constant 0 : index
    %1 = vector.load %arg1[%c0_1, %c0_2] : memref<27x512xbf16, #tpu.memory_space<vmem>>, vector<27x512xbf16>
    %cst = arith.constant dense<0.000000e+00> : vector<4x512xf32>
    %2 = tpu.matmul %0, %1, %cst {dimension_numbers = #tpu.dot_dimension_numbers<[1], [0], [0], [1], [0, 0, 1, 1], [], []>} : vector<4x27xbf16>, vector<27x512xbf16>, vector<4x512xf32> -> vector<4x512xf32>
    %c0_3 = arith.constant 0 : index
    %c0_4 = arith.constant 0 : index
    %3 = vector.load %arg3[%c0_3, %c0_4] : memref<4x1xf32, #tpu.memory_space<vmem>>, vector<4x1xf32>
    %4 = vector.broadcast %3 : vector<4x1xf32> to vector<4x512xf32>
    %5 = arith.addf %2, %4 : vector<4x512xf32>
    %cst_5 = arith.constant 0.000000e+00 : f32
    %6 = vector.broadcast %cst_5 : f32 to vector<4x512xf32>
    %7 = arith.maximumf %5, %6 : vector<4x512xf32>
    %8 = arith.truncf %7 : vector<4x512xf32> to vector<4x512xbf16>
    %c0_6 = arith.constant 0 : index
    %c0_7 = arith.constant 0 : index
    %9 = vector.load %arg4[%c0_6, %c0_7] : memref<4x512xbf16, #tpu.memory_space<vmem>>, vector<4x512xbf16>
    tpu.vector_store %arg4[%c0_6, %c0_7], %8 {strides = array<i32>} : memref<4x512xbf16, #tpu.memory_space<vmem>>, vector<4x512xbf16>,
    return
  }
  func.func @transform_0(%arg0: i32) -> (i32, i32) {
    %c0_i32 = arith.constant 0 : i32
    %c0_i32_0 = arith.constant 0 : i32
    return %c0_i32, %arg0 : i32, i32
  }
  func.func @transform_1(%arg0: i32) -> (i32, i32) {
    %c0_i32 = arith.constant 0 : i32
    %c0_i32_0 = arith.constant 0 : i32
    %c0_i32_1 = arith.constant 0 : i32
    return %c0_i32, %c0_i32_0 : i32, i32
  }
  func.func @transform_2(%arg0: i32) -> (i32, i32) {
    %c0_i32 = arith.constant 0 : i32
    %c0_i32_0 = arith.constant 0 : i32
    %c0_i32_1 = arith.constant 0 : i32
    return %c0_i32, %c0_i32_0 : i32, i32
  }
  func.func @transform_3(%arg0: i32) -> (i32, i32) {
    %c0_i32 = arith.constant 0 : i32
    %c0_i32_0 = arith.constant 0 : i32
    return %c0_i32, %arg0 : i32, i32
  }
}

module attributes {stable_mosaic.version = 11 : i64} {
  func.func @_conv_kernel(%arg0: i32, %arg1: memref<36x512xbf16, #tpu.memory_space<vmem>>, %arg2: memref<4x36xbf16, #tpu.memory_space<vmem>>, %arg3: memref<4x512xbf16, #tpu.memory_space<vmem>>) attributes {dimension_semantics = [#tpu.dimension_semantics<parallel>], iteration_bounds = array<i64: 2>, scalar_prefetch = 0 : i64, scratch_operands = 0 : i64, tpu.core_type = #tpu.core_type<tc>, window_params = [{transform_indices = @transform_0, window_bounds = array<i64: 36, 512>}, {pipeline_mode = #tpu.pipeline_mode<synchronous>, transform_indices = @transform_1, window_bounds = array<i64: 4, 36>}, {transform_indices = @transform_2, window_bounds = array<i64: 4, 512>}]} {
    %c0 = arith.constant 0 : index
    %c0_0 = arith.constant 0 : index
    %0 = vector.load %arg2[%c0, %c0_0] : memref<4x36xbf16, #tpu.memory_space<vmem>>, vector<4x36xbf16>
    %c0_1 = arith.constant 0 : index
    %c0_2 = arith.constant 0 : index
    %1 = vector.load %arg1[%c0_1, %c0_2] : memref<36x512xbf16, #tpu.memory_space<vmem>>, vector<36x512xbf16>
    %cst = arith.constant dense<0.000000e+00> : vector<4x512xf32>
    %2 = tpu.matmul %0, %1, %cst {dimension_numbers = #tpu.dot_dimension_numbers<[1], [0], [0], [1], [0, 0, 1, 1], [], []>} : vector<4x36xbf16>, vector<36x512xbf16>, vector<4x512xf32> -> vector<4x512xf32>
    %3 = arith.truncf %2 : vector<4x512xf32> to vector<4x512xbf16>
    %c0_3 = arith.constant 0 : index
    %c0_4 = arith.constant 0 : index
    %4 = vector.load %arg3[%c0_3, %c0_4] : memref<4x512xbf16, #tpu.memory_space<vmem>>, vector<4x512xbf16>
    tpu.vector_store %arg3[%c0_3, %c0_4], %3 {strides = array<i32>} : memref<4x512xbf16, #tpu.memory_space<vmem>>, vector<4x512xbf16>,
    return
  }
  func.func @transform_0(%arg0: i32) -> (i32, i32) {
    %c0_i32 = arith.constant 0 : i32
    %c0_i32_0 = arith.constant 0 : i32
    return %c0_i32, %arg0 : i32, i32
  }
  func.func @transform_1(%arg0: i32) -> (i32, i32) {
    %c0_i32 = arith.constant 0 : i32
    %c0_i32_0 = arith.constant 0 : i32
    %c0_i32_1 = arith.constant 0 : i32
    return %c0_i32, %c0_i32_0 : i32, i32
  }
  func.func @transform_2(%arg0: i32) -> (i32, i32) {
    %c0_i32 = arith.constant 0 : i32
    %c0_i32_0 = arith.constant 0 : i32
    return %c0_i32, %arg0 : i32, i32
  }
}

module attributes {stable_mosaic.version = 11 : i64} {
  func.func @_dual_conv_kernel(%arg0: i32, %arg1: memref<36x256xbf16, #tpu.memory_space<vmem>>, %arg2: memref<8x36xbf16, #tpu.memory_space<vmem>>, %arg3: memref<8x1xf32, #tpu.memory_space<vmem>>, %arg4: memref<4x256xbf16, #tpu.memory_space<vmem>>, %arg5: memref<8x4xbf16, #tpu.memory_space<vmem>>, %arg6: memref<8x1xf32, #tpu.memory_space<vmem>>, %arg7: memref<8x256xbf16, #tpu.memory_space<vmem>>, %arg8: memref<8x256xbf16, #tpu.memory_space<vmem>>) attributes {dimension_semantics = [#tpu.dimension_semantics<parallel>], iteration_bounds = array<i64: 1>, scalar_prefetch = 0 : i64, scratch_operands = 0 : i64, tpu.core_type = #tpu.core_type<tc>, window_params = [{transform_indices = @transform_0, window_bounds = array<i64: 36, 256>}, {pipeline_mode = #tpu.pipeline_mode<synchronous>, transform_indices = @transform_1, window_bounds = array<i64: 8, 36>}, {pipeline_mode = #tpu.pipeline_mode<synchronous>, transform_indices = @transform_2, window_bounds = array<i64: 8, 1>}, {transform_indices = @transform_3, window_bounds = array<i64: 4, 256>}, {pipeline_mode = #tpu.pipeline_mode<synchronous>, transform_indices = @transform_4, window_bounds = array<i64: 8, 4>}, {pipeline_mode = #tpu.pipeline_mode<synchronous>, transform_indices = @transform_5, window_bounds = array<i64: 8, 1>}, {transform_indices = @transform_6, window_bounds = array<i64: 8, 256>}, {transform_indices = @transform_7, window_bounds = array<i64: 8, 256>}]} {
    %c0 = arith.constant 0 : index
    %c0_0 = arith.constant 0 : index
    %0 = vector.load %arg2[%c0, %c0_0] : memref<8x36xbf16, #tpu.memory_space<vmem>>, vector<8x36xbf16>
    %c0_1 = arith.constant 0 : index
    %c0_2 = arith.constant 0 : index
    %1 = vector.load %arg1[%c0_1, %c0_2] : memref<36x256xbf16, #tpu.memory_space<vmem>>, vector<36x256xbf16>
    %cst = arith.constant dense<0.000000e+00> : vector<8x256xf32>
    %2 = tpu.matmul %0, %1, %cst {dimension_numbers = #tpu.dot_dimension_numbers<[1], [0], [0], [1], [0, 0, 1, 1], [], []>} : vector<8x36xbf16>, vector<36x256xbf16>, vector<8x256xf32> -> vector<8x256xf32>
    %c0_3 = arith.constant 0 : index
    %c0_4 = arith.constant 0 : index
    %3 = vector.load %arg3[%c0_3, %c0_4] : memref<8x1xf32, #tpu.memory_space<vmem>>, vector<8x1xf32>
    %4 = vector.broadcast %3 : vector<8x1xf32> to vector<8x256xf32>
    %5 = arith.addf %2, %4 : vector<8x256xf32>
    %cst_5 = arith.constant 0.000000e+00 : f32
    %6 = vector.broadcast %cst_5 : f32 to vector<8x256xf32>
    %7 = arith.maximumf %5, %6 : vector<8x256xf32>
    %8 = arith.truncf %7 : vector<8x256xf32> to vector<8x256xbf16>
    %c0_6 = arith.constant 0 : index
    %c0_7 = arith.constant 0 : index
    %9 = vector.load %arg7[%c0_6, %c0_7] : memref<8x256xbf16, #tpu.memory_space<vmem>>, vector<8x256xbf16>
    tpu.vector_store %arg7[%c0_6, %c0_7], %8 {strides = array<i32>} : memref<8x256xbf16, #tpu.memory_space<vmem>>, vector<8x256xbf16>,
    %c0_8 = arith.constant 0 : index
    %c0_9 = arith.constant 0 : index
    %10 = vector.load %arg5[%c0_8, %c0_9] : memref<8x4xbf16, #tpu.memory_space<vmem>>, vector<8x4xbf16>
    %c0_10 = arith.constant 0 : index
    %c0_11 = arith.constant 0 : index
    %11 = vector.load %arg4[%c0_10, %c0_11] : memref<4x256xbf16, #tpu.memory_space<vmem>>, vector<4x256xbf16>
    %cst_12 = arith.constant dense<0.000000e+00> : vector<8x256xf32>
    %12 = tpu.matmul %10, %11, %cst_12 {dimension_numbers = #tpu.dot_dimension_numbers<[1], [0], [0], [1], [0, 0, 1, 1], [], []>} : vector<8x4xbf16>, vector<4x256xbf16>, vector<8x256xf32> -> vector<8x256xf32>
    %c0_13 = arith.constant 0 : index
    %c0_14 = arith.constant 0 : index
    %13 = vector.load %arg6[%c0_13, %c0_14] : memref<8x1xf32, #tpu.memory_space<vmem>>, vector<8x1xf32>
    %14 = vector.broadcast %13 : vector<8x1xf32> to vector<8x256xf32>
    %15 = arith.addf %12, %14 : vector<8x256xf32>
    %16 = arith.truncf %15 : vector<8x256xf32> to vector<8x256xbf16>
    %c0_15 = arith.constant 0 : index
    %c0_16 = arith.constant 0 : index
    %17 = vector.load %arg8[%c0_15, %c0_16] : memref<8x256xbf16, #tpu.memory_space<vmem>>, vector<8x256xbf16>
    tpu.vector_store %arg8[%c0_15, %c0_16], %16 {strides = array<i32>} : memref<8x256xbf16, #tpu.memory_space<vmem>>, vector<8x256xbf16>,
    return
  }
  func.func @transform_0(%arg0: i32) -> (i32, i32) {
    %c0_i32 = arith.constant 0 : i32
    %c0_i32_0 = arith.constant 0 : i32
    return %c0_i32, %arg0 : i32, i32
  }
  func.func @transform_1(%arg0: i32) -> (i32, i32) {
    %c0_i32 = arith.constant 0 : i32
    %c0_i32_0 = arith.constant 0 : i32
    %c0_i32_1 = arith.constant 0 : i32
    return %c0_i32, %c0_i32_0 : i32, i32
  }
  func.func @transform_2(%arg0: i32) -> (i32, i32) {
    %c0_i32 = arith.constant 0 : i32
    %c0_i32_0 = arith.constant 0 : i32
    %c0_i32_1 = arith.constant 0 : i32
    return %c0_i32, %c0_i32_0 : i32, i32
  }
  func.func @transform_3(%arg0: i32) -> (i32, i32) {
    %c0_i32 = arith.constant 0 : i32
    %c0_i32_0 = arith.constant 0 : i32
    return %c0_i32, %arg0 : i32, i32
  }
  func.func @transform_4(%arg0: i32) -> (i32, i32) {
    %c0_i32 = arith.constant 0 : i32
    %c0_i32_0 = arith.constant 0 : i32
    %c0_i32_1 = arith.constant 0 : i32
    return %c0_i32, %c0_i32_0 : i32, i32
  }
  func.func @transform_5(%arg0: i32) -> (i32, i32) {
    %c0_i32 = arith.constant 0 : i32
    %c0_i32_0 = arith.constant 0 : i32
    %c0_i32_1 = arith.constant 0 : i32
    return %c0_i32, %c0_i32_0 : i32, i32
  }
  func.func @transform_6(%arg0: i32) -> (i32, i32) {
    %c0_i32 = arith.constant 0 : i32
    %c0_i32_0 = arith.constant 0 : i32
    return %c0_i32, %arg0 : i32, i32
  }
  func.func @transform_7(%arg0: i32) -> (i32, i32) {
    %c0_i32 = arith.constant 0 : i32
    %c0_i32_0 = arith.constant 0 : i32
    return %c0_i32, %arg0 : i32, i32
  }
}

module attributes {stable_mosaic.version = 11 : i64} {
  func.func @_conv_kernel(%arg0: i32, %arg1: memref<72x256xbf16, #tpu.memory_space<vmem>>, %arg2: memref<8x72xbf16, #tpu.memory_space<vmem>>, %arg3: memref<8x256xbf16, #tpu.memory_space<vmem>>, %arg4: memref<8x256xbf16, #tpu.memory_space<vmem>>) attributes {dimension_semantics = [#tpu.dimension_semantics<parallel>], iteration_bounds = array<i64: 1>, scalar_prefetch = 0 : i64, scratch_operands = 0 : i64, tpu.core_type = #tpu.core_type<tc>, window_params = [{transform_indices = @transform_0, window_bounds = array<i64: 72, 256>}, {pipeline_mode = #tpu.pipeline_mode<synchronous>, transform_indices = @transform_1, window_bounds = array<i64: 8, 72>}, {transform_indices = @transform_2, window_bounds = array<i64: 8, 256>}, {transform_indices = @transform_3, window_bounds = array<i64: 8, 256>}]} {
    %c0 = arith.constant 0 : index
    %c0_0 = arith.constant 0 : index
    %0 = vector.load %arg2[%c0, %c0_0] : memref<8x72xbf16, #tpu.memory_space<vmem>>, vector<8x72xbf16>
    %c0_1 = arith.constant 0 : index
    %c0_2 = arith.constant 0 : index
    %1 = vector.load %arg1[%c0_1, %c0_2] : memref<72x256xbf16, #tpu.memory_space<vmem>>, vector<72x256xbf16>
    %cst = arith.constant dense<0.000000e+00> : vector<8x256xf32>
    %2 = tpu.matmul %0, %1, %cst {dimension_numbers = #tpu.dot_dimension_numbers<[1], [0], [0], [1], [0, 0, 1, 1], [], []>} : vector<8x72xbf16>, vector<72x256xbf16>, vector<8x256xf32> -> vector<8x256xf32>
    %c0_3 = arith.constant 0 : index
    %c0_4 = arith.constant 0 : index
    %3 = vector.load %arg3[%c0_3, %c0_4] : memref<8x256xbf16, #tpu.memory_space<vmem>>, vector<8x256xbf16>
    %4 = arith.extf %3 : vector<8x256xbf16> to vector<8x256xf32>
    %5 = arith.addf %2, %4 : vector<8x256xf32>
    %6 = arith.truncf %5 : vector<8x256xf32> to vector<8x256xbf16>
    %c0_5 = arith.constant 0 : index
    %c0_6 = arith.constant 0 : index
    %7 = vector.load %arg4[%c0_5, %c0_6] : memref<8x256xbf16, #tpu.memory_space<vmem>>, vector<8x256xbf16>
    tpu.vector_store %arg4[%c0_5, %c0_6], %6 {strides = array<i32>} : memref<8x256xbf16, #tpu.memory_space<vmem>>, vector<8x256xbf16>,
    return
  }
  func.func @transform_0(%arg0: i32) -> (i32, i32) {
    %c0_i32 = arith.constant 0 : i32
    %c0_i32_0 = arith.constant 0 : i32
    return %c0_i32, %arg0 : i32, i32
  }
  func.func @transform_1(%arg0: i32) -> (i32, i32) {
    %c0_i32 = arith.constant 0 : i32
    %c0_i32_0 = arith.constant 0 : i32
    %c0_i32_1 = arith.constant 0 : i32
    return %c0_i32, %c0_i32_0 : i32, i32
  }
  func.func @transform_2(%arg0: i32) -> (i32, i32) {
    %c0_i32 = arith.constant 0 : i32
    %c0_i32_0 = arith.constant 0 : i32
    return %c0_i32, %arg0 : i32, i32
  }
  func.func @transform_3(%arg0: i32) -> (i32, i32) {
    %c0_i32 = arith.constant 0 : i32
    %c0_i32_0 = arith.constant 0 : i32
    return %c0_i32, %arg0 : i32, i32
  }
}

module attributes {stable_mosaic.version = 11 : i64} {
  func.func @_conv_kernel(%arg0: i32, %arg1: memref<72x256xbf16, #tpu.memory_space<vmem>>, %arg2: memref<8x72xbf16, #tpu.memory_space<vmem>>, %arg3: memref<8x256xbf16, #tpu.memory_space<vmem>>) attributes {dimension_semantics = [#tpu.dimension_semantics<parallel>], iteration_bounds = array<i64: 1>, scalar_prefetch = 0 : i64, scratch_operands = 0 : i64, tpu.core_type = #tpu.core_type<tc>, window_params = [{transform_indices = @transform_0, window_bounds = array<i64: 72, 256>}, {pipeline_mode = #tpu.pipeline_mode<synchronous>, transform_indices = @transform_1, window_bounds = array<i64: 8, 72>}, {transform_indices = @transform_2, window_bounds = array<i64: 8, 256>}]} {
    %c0 = arith.constant 0 : index
    %c0_0 = arith.constant 0 : index
    %0 = vector.load %arg2[%c0, %c0_0] : memref<8x72xbf16, #tpu.memory_space<vmem>>, vector<8x72xbf16>
    %c0_1 = arith.constant 0 : index
    %c0_2 = arith.constant 0 : index
    %1 = vector.load %arg1[%c0_1, %c0_2] : memref<72x256xbf16, #tpu.memory_space<vmem>>, vector<72x256xbf16>
    %cst = arith.constant dense<0.000000e+00> : vector<8x256xf32>
    %2 = tpu.matmul %0, %1, %cst {dimension_numbers = #tpu.dot_dimension_numbers<[1], [0], [0], [1], [0, 0, 1, 1], [], []>} : vector<8x72xbf16>, vector<72x256xbf16>, vector<8x256xf32> -> vector<8x256xf32>
    %3 = arith.truncf %2 : vector<8x256xf32> to vector<8x256xbf16>
    %c0_3 = arith.constant 0 : index
    %c0_4 = arith.constant 0 : index
    %4 = vector.load %arg3[%c0_3, %c0_4] : memref<8x256xbf16, #tpu.memory_space<vmem>>, vector<8x256xbf16>
    tpu.vector_store %arg3[%c0_3, %c0_4], %3 {strides = array<i32>} : memref<8x256xbf16, #tpu.memory_space<vmem>>, vector<8x256xbf16>,
    return
  }
  func.func @transform_0(%arg0: i32) -> (i32, i32) {
    %c0_i32 = arith.constant 0 : i32
    %c0_i32_0 = arith.constant 0 : i32
    return %c0_i32, %arg0 : i32, i32
  }
  func.func @transform_1(%arg0: i32) -> (i32, i32) {
    %c0_i32 = arith.constant 0 : i32
    %c0_i32_0 = arith.constant 0 : i32
    %c0_i32_1 = arith.constant 0 : i32
    return %c0_i32, %c0_i32_0 : i32, i32
  }
  func.func @transform_2(%arg0: i32) -> (i32, i32) {
    %c0_i32 = arith.constant 0 : i32
    %c0_i32_0 = arith.constant 0 : i32
    return %c0_i32, %arg0 : i32, i32
  }
}

module attributes {stable_mosaic.version = 11 : i64} {
  func.func @_dual_conv_kernel(%arg0: i32, %arg1: memref<72x64xbf16, #tpu.memory_space<vmem>>, %arg2: memref<16x72xbf16, #tpu.memory_space<vmem>>, %arg3: memref<16x1xf32, #tpu.memory_space<vmem>>, %arg4: memref<8x64xbf16, #tpu.memory_space<vmem>>, %arg5: memref<16x8xbf16, #tpu.memory_space<vmem>>, %arg6: memref<16x1xf32, #tpu.memory_space<vmem>>, %arg7: memref<16x64xbf16, #tpu.memory_space<vmem>>, %arg8: memref<16x64xbf16, #tpu.memory_space<vmem>>) attributes {dimension_semantics = [#tpu.dimension_semantics<parallel>], iteration_bounds = array<i64: 1>, scalar_prefetch = 0 : i64, scratch_operands = 0 : i64, tpu.core_type = #tpu.core_type<tc>, window_params = [{transform_indices = @transform_0, window_bounds = array<i64: 72, 64>}, {pipeline_mode = #tpu.pipeline_mode<synchronous>, transform_indices = @transform_1, window_bounds = array<i64: 16, 72>}, {pipeline_mode = #tpu.pipeline_mode<synchronous>, transform_indices = @transform_2, window_bounds = array<i64: 16, 1>}, {transform_indices = @transform_3, window_bounds = array<i64: 8, 64>}, {pipeline_mode = #tpu.pipeline_mode<synchronous>, transform_indices = @transform_4, window_bounds = array<i64: 16, 8>}, {pipeline_mode = #tpu.pipeline_mode<synchronous>, transform_indices = @transform_5, window_bounds = array<i64: 16, 1>}, {transform_indices = @transform_6, window_bounds = array<i64: 16, 64>}, {transform_indices = @transform_7, window_bounds = array<i64: 16, 64>}]} {
    %c0 = arith.constant 0 : index
    %c0_0 = arith.constant 0 : index
    %0 = vector.load %arg2[%c0, %c0_0] : memref<16x72xbf16, #tpu.memory_space<vmem>>, vector<16x72xbf16>
    %c0_1 = arith.constant 0 : index
    %c0_2 = arith.constant 0 : index
    %1 = vector.load %arg1[%c0_1, %c0_2] : memref<72x64xbf16, #tpu.memory_space<vmem>>, vector<72x64xbf16>
    %cst = arith.constant dense<0.000000e+00> : vector<16x64xf32>
    %2 = tpu.matmul %0, %1, %cst {dimension_numbers = #tpu.dot_dimension_numbers<[1], [0], [0], [1], [0, 0, 1, 1], [], []>} : vector<16x72xbf16>, vector<72x64xbf16>, vector<16x64xf32> -> vector<16x64xf32>
    %c0_3 = arith.constant 0 : index
    %c0_4 = arith.constant 0 : index
    %3 = vector.load %arg3[%c0_3, %c0_4] : memref<16x1xf32, #tpu.memory_space<vmem>>, vector<16x1xf32>
    %4 = vector.broadcast %3 : vector<16x1xf32> to vector<16x64xf32>
    %5 = arith.addf %2, %4 : vector<16x64xf32>
    %cst_5 = arith.constant 0.000000e+00 : f32
    %6 = vector.broadcast %cst_5 : f32 to vector<16x64xf32>
    %7 = arith.maximumf %5, %6 : vector<16x64xf32>
    %8 = arith.truncf %7 : vector<16x64xf32> to vector<16x64xbf16>
    %c0_6 = arith.constant 0 : index
    %c0_7 = arith.constant 0 : index
    %9 = vector.load %arg7[%c0_6, %c0_7] : memref<16x64xbf16, #tpu.memory_space<vmem>>, vector<16x64xbf16>
    tpu.vector_store %arg7[%c0_6, %c0_7], %8 {strides = array<i32>} : memref<16x64xbf16, #tpu.memory_space<vmem>>, vector<16x64xbf16>,
    %c0_8 = arith.constant 0 : index
    %c0_9 = arith.constant 0 : index
    %10 = vector.load %arg5[%c0_8, %c0_9] : memref<16x8xbf16, #tpu.memory_space<vmem>>, vector<16x8xbf16>
    %c0_10 = arith.constant 0 : index
    %c0_11 = arith.constant 0 : index
    %11 = vector.load %arg4[%c0_10, %c0_11] : memref<8x64xbf16, #tpu.memory_space<vmem>>, vector<8x64xbf16>
    %cst_12 = arith.constant dense<0.000000e+00> : vector<16x64xf32>
    %12 = tpu.matmul %10, %11, %cst_12 {dimension_numbers = #tpu.dot_dimension_numbers<[1], [0], [0], [1], [0, 0, 1, 1], [], []>} : vector<16x8xbf16>, vector<8x64xbf16>, vector<16x64xf32> -> vector<16x64xf32>
    %c0_13 = arith.constant 0 : index
    %c0_14 = arith.constant 0 : index
    %13 = vector.load %arg6[%c0_13, %c0_14] : memref<16x1xf32, #tpu.memory_space<vmem>>, vector<16x1xf32>
    %14 = vector.broadcast %13 : vector<16x1xf32> to vector<16x64xf32>
    %15 = arith.addf %12, %14 : vector<16x64xf32>
    %16 = arith.truncf %15 : vector<16x64xf32> to vector<16x64xbf16>
    %c0_15 = arith.constant 0 : index
    %c0_16 = arith.constant 0 : index
    %17 = vector.load %arg8[%c0_15, %c0_16] : memref<16x64xbf16, #tpu.memory_space<vmem>>, vector<16x64xbf16>
    tpu.vector_store %arg8[%c0_15, %c0_16], %16 {strides = array<i32>} : memref<16x64xbf16, #tpu.memory_space<vmem>>, vector<16x64xbf16>,
    return
  }
  func.func @transform_0(%arg0: i32) -> (i32, i32) {
    %c0_i32 = arith.constant 0 : i32
    %c0_i32_0 = arith.constant 0 : i32
    return %c0_i32, %arg0 : i32, i32
  }
  func.func @transform_1(%arg0: i32) -> (i32, i32) {
    %c0_i32 = arith.constant 0 : i32
    %c0_i32_0 = arith.constant 0 : i32
    %c0_i32_1 = arith.constant 0 : i32
    return %c0_i32, %c0_i32_0 : i32, i32
  }
  func.func @transform_2(%arg0: i32) -> (i32, i32) {
    %c0_i32 = arith.constant 0 : i32
    %c0_i32_0 = arith.constant 0 : i32
    %c0_i32_1 = arith.constant 0 : i32
    return %c0_i32, %c0_i32_0 : i32, i32
  }
  func.func @transform_3(%arg0: i32) -> (i32, i32) {
    %c0_i32 = arith.constant 0 : i32
    %c0_i32_0 = arith.constant 0 : i32
    return %c0_i32, %arg0 : i32, i32
  }
  func.func @transform_4(%arg0: i32) -> (i32, i32) {
    %c0_i32 = arith.constant 0 : i32
    %c0_i32_0 = arith.constant 0 : i32
    %c0_i32_1 = arith.constant 0 : i32
    return %c0_i32, %c0_i32_0 : i32, i32
  }
  func.func @transform_5(%arg0: i32) -> (i32, i32) {
    %c0_i32 = arith.constant 0 : i32
    %c0_i32_0 = arith.constant 0 : i32
    %c0_i32_1 = arith.constant 0 : i32
    return %c0_i32, %c0_i32_0 : i32, i32
  }
  func.func @transform_6(%arg0: i32) -> (i32, i32) {
    %c0_i32 = arith.constant 0 : i32
    %c0_i32_0 = arith.constant 0 : i32
    return %c0_i32, %arg0 : i32, i32
  }
  func.func @transform_7(%arg0: i32) -> (i32, i32) {
    %c0_i32 = arith.constant 0 : i32
    %c0_i32_0 = arith.constant 0 : i32
    return %c0_i32, %arg0 : i32, i32
  }
}

module attributes {stable_mosaic.version = 11 : i64} {
  func.func @_conv_kernel(%arg0: i32, %arg1: memref<144x64xbf16, #tpu.memory_space<vmem>>, %arg2: memref<16x144xbf16, #tpu.memory_space<vmem>>, %arg3: memref<16x64xbf16, #tpu.memory_space<vmem>>, %arg4: memref<16x64xbf16, #tpu.memory_space<vmem>>) attributes {dimension_semantics = [#tpu.dimension_semantics<parallel>], iteration_bounds = array<i64: 1>, scalar_prefetch = 0 : i64, scratch_operands = 0 : i64, tpu.core_type = #tpu.core_type<tc>, window_params = [{transform_indices = @transform_0, window_bounds = array<i64: 144, 64>}, {pipeline_mode = #tpu.pipeline_mode<synchronous>, transform_indices = @transform_1, window_bounds = array<i64: 16, 144>}, {transform_indices = @transform_2, window_bounds = array<i64: 16, 64>}, {transform_indices = @transform_3, window_bounds = array<i64: 16, 64>}]} {
    %c0 = arith.constant 0 : index
    %c0_0 = arith.constant 0 : index
    %0 = vector.load %arg2[%c0, %c0_0] : memref<16x144xbf16, #tpu.memory_space<vmem>>, vector<16x144xbf16>
    %c0_1 = arith.constant 0 : index
    %c0_2 = arith.constant 0 : index
    %1 = vector.load %arg1[%c0_1, %c0_2] : memref<144x64xbf16, #tpu.memory_space<vmem>>, vector<144x64xbf16>
    %cst = arith.constant dense<0.000000e+00> : vector<16x64xf32>
    %2 = tpu.matmul %0, %1, %cst {dimension_numbers = #tpu.dot_dimension_numbers<[1], [0], [0], [1], [0, 0, 1, 1], [], []>} : vector<16x144xbf16>, vector<144x64xbf16>, vector<16x64xf32> -> vector<16x64xf32>
    %c0_3 = arith.constant 0 : index
    %c0_4 = arith.constant 0 : index
    %3 = vector.load %arg3[%c0_3, %c0_4] : memref<16x64xbf16, #tpu.memory_space<vmem>>, vector<16x64xbf16>
    %4 = arith.extf %3 : vector<16x64xbf16> to vector<16x64xf32>
    %5 = arith.addf %2, %4 : vector<16x64xf32>
    %6 = arith.truncf %5 : vector<16x64xf32> to vector<16x64xbf16>
    %c0_5 = arith.constant 0 : index
    %c0_6 = arith.constant 0 : index
    %7 = vector.load %arg4[%c0_5, %c0_6] : memref<16x64xbf16, #tpu.memory_space<vmem>>, vector<16x64xbf16>
    tpu.vector_store %arg4[%c0_5, %c0_6], %6 {strides = array<i32>} : memref<16x64xbf16, #tpu.memory_space<vmem>>, vector<16x64xbf16>,
    return
  }
  func.func @transform_0(%arg0: i32) -> (i32, i32) {
    %c0_i32 = arith.constant 0 : i32
    %c0_i32_0 = arith.constant 0 : i32
    return %c0_i32, %arg0 : i32, i32
  }
  func.func @transform_1(%arg0: i32) -> (i32, i32) {
    %c0_i32 = arith.constant 0 : i32
    %c0_i32_0 = arith.constant 0 : i32
    %c0_i32_1 = arith.constant 0 : i32
    return %c0_i32, %c0_i32_0 : i32, i32
  }
  func.func @transform_2(%arg0: i32) -> (i32, i32) {
    %c0_i32 = arith.constant 0 : i32
    %c0_i32_0 = arith.constant 0 : i32
    return %c0_i32, %arg0 : i32, i32
  }
  func.func @transform_3(%arg0: i32) -> (i32, i32) {
    %c0_i32 = arith.constant 0 : i32
    %c0_i32_0 = arith.constant 0 : i32
    return %c0_i32, %arg0 : i32, i32
  }
}

module attributes {stable_mosaic.version = 11 : i64} {
  func.func @_conv_kernel(%arg0: i32, %arg1: memref<144x64xbf16, #tpu.memory_space<vmem>>, %arg2: memref<16x144xbf16, #tpu.memory_space<vmem>>, %arg3: memref<16x64xbf16, #tpu.memory_space<vmem>>) attributes {dimension_semantics = [#tpu.dimension_semantics<parallel>], iteration_bounds = array<i64: 1>, scalar_prefetch = 0 : i64, scratch_operands = 0 : i64, tpu.core_type = #tpu.core_type<tc>, window_params = [{transform_indices = @transform_0, window_bounds = array<i64: 144, 64>}, {pipeline_mode = #tpu.pipeline_mode<synchronous>, transform_indices = @transform_1, window_bounds = array<i64: 16, 144>}, {transform_indices = @transform_2, window_bounds = array<i64: 16, 64>}]} {
    %c0 = arith.constant 0 : index
    %c0_0 = arith.constant 0 : index
    %0 = vector.load %arg2[%c0, %c0_0] : memref<16x144xbf16, #tpu.memory_space<vmem>>, vector<16x144xbf16>
    %c0_1 = arith.constant 0 : index
    %c0_2 = arith.constant 0 : index
    %1 = vector.load %arg1[%c0_1, %c0_2] : memref<144x64xbf16, #tpu.memory_space<vmem>>, vector<144x64xbf16>
    %cst = arith.constant dense<0.000000e+00> : vector<16x64xf32>
    %2 = tpu.matmul %0, %1, %cst {dimension_numbers = #tpu.dot_dimension_numbers<[1], [0], [0], [1], [0, 0, 1, 1], [], []>} : vector<16x144xbf16>, vector<144x64xbf16>, vector<16x64xf32> -> vector<16x64xf32>
    %3 = arith.truncf %2 : vector<16x64xf32> to vector<16x64xbf16>
    %c0_3 = arith.constant 0 : index
    %c0_4 = arith.constant 0 : index
    %4 = vector.load %arg3[%c0_3, %c0_4] : memref<16x64xbf16, #tpu.memory_space<vmem>>, vector<16x64xbf16>
    tpu.vector_store %arg3[%c0_3, %c0_4], %3 {strides = array<i32>} : memref<16x64xbf16, #tpu.memory_space<vmem>>, vector<16x64xbf16>,
    return
  }
  func.func @transform_0(%arg0: i32) -> (i32, i32) {
    %c0_i32 = arith.constant 0 : i32
    %c0_i32_0 = arith.constant 0 : i32
    return %c0_i32, %arg0 : i32, i32
  }
  func.func @transform_1(%arg0: i32) -> (i32, i32) {
    %c0_i32 = arith.constant 0 : i32
    %c0_i32_0 = arith.constant 0 : i32
    %c0_i32_1 = arith.constant 0 : i32
    return %c0_i32, %c0_i32_0 : i32, i32
  }
  func.func @transform_2(%arg0: i32) -> (i32, i32) {
    %c0_i32 = arith.constant 0 : i32
    %c0_i32_0 = arith.constant 0 : i32
    return %c0_i32, %arg0 : i32, i32
  }
}

module attributes {stable_mosaic.version = 11 : i64} {
  func.func @_dual_conv_kernel(%arg0: i32, %arg1: memref<144x40xbf16, #tpu.memory_space<vmem>>, %arg2: memref<32x144xbf16, #tpu.memory_space<vmem>>, %arg3: memref<32x1xf32, #tpu.memory_space<vmem>>, %arg4: memref<16x40xbf16, #tpu.memory_space<vmem>>, %arg5: memref<32x16xbf16, #tpu.memory_space<vmem>>, %arg6: memref<32x1xf32, #tpu.memory_space<vmem>>, %arg7: memref<32x40xbf16, #tpu.memory_space<vmem>>, %arg8: memref<32x40xbf16, #tpu.memory_space<vmem>>) attributes {dimension_semantics = [#tpu.dimension_semantics<parallel>], iteration_bounds = array<i64: 1>, scalar_prefetch = 0 : i64, scratch_operands = 0 : i64, tpu.core_type = #tpu.core_type<tc>, window_params = [{transform_indices = @transform_0, window_bounds = array<i64: 144, 40>}, {pipeline_mode = #tpu.pipeline_mode<synchronous>, transform_indices = @transform_1, window_bounds = array<i64: 32, 144>}, {pipeline_mode = #tpu.pipeline_mode<synchronous>, transform_indices = @transform_2, window_bounds = array<i64: 32, 1>}, {transform_indices = @transform_3, window_bounds = array<i64: 16, 40>}, {pipeline_mode = #tpu.pipeline_mode<synchronous>, transform_indices = @transform_4, window_bounds = array<i64: 32, 16>}, {pipeline_mode = #tpu.pipeline_mode<synchronous>, transform_indices = @transform_5, window_bounds = array<i64: 32, 1>}, {transform_indices = @transform_6, window_bounds = array<i64: 32, 40>}, {transform_indices = @transform_7, window_bounds = array<i64: 32, 40>}]} {
    %c0 = arith.constant 0 : index
    %c0_0 = arith.constant 0 : index
    %0 = vector.load %arg2[%c0, %c0_0] : memref<32x144xbf16, #tpu.memory_space<vmem>>, vector<32x144xbf16>
    %c0_1 = arith.constant 0 : index
    %c0_2 = arith.constant 0 : index
    %1 = vector.load %arg1[%c0_1, %c0_2] : memref<144x40xbf16, #tpu.memory_space<vmem>>, vector<144x40xbf16>
    %cst = arith.constant dense<0.000000e+00> : vector<32x40xf32>
    %2 = tpu.matmul %0, %1, %cst {dimension_numbers = #tpu.dot_dimension_numbers<[1], [0], [0], [1], [0, 0, 1, 1], [], []>} : vector<32x144xbf16>, vector<144x40xbf16>, vector<32x40xf32> -> vector<32x40xf32>
    %c0_3 = arith.constant 0 : index
    %c0_4 = arith.constant 0 : index
    %3 = vector.load %arg3[%c0_3, %c0_4] : memref<32x1xf32, #tpu.memory_space<vmem>>, vector<32x1xf32>
    %4 = vector.broadcast %3 : vector<32x1xf32> to vector<32x40xf32>
    %5 = arith.addf %2, %4 : vector<32x40xf32>
    %cst_5 = arith.constant 0.000000e+00 : f32
    %6 = vector.broadcast %cst_5 : f32 to vector<32x40xf32>
    %7 = arith.maximumf %5, %6 : vector<32x40xf32>
    %8 = arith.truncf %7 : vector<32x40xf32> to vector<32x40xbf16>
    %c0_6 = arith.constant 0 : index
    %c0_7 = arith.constant 0 : index
    %9 = vector.load %arg7[%c0_6, %c0_7] : memref<32x40xbf16, #tpu.memory_space<vmem>>, vector<32x40xbf16>
    tpu.vector_store %arg7[%c0_6, %c0_7], %8 {strides = array<i32>} : memref<32x40xbf16, #tpu.memory_space<vmem>>, vector<32x40xbf16>,
    %c0_8 = arith.constant 0 : index
    %c0_9 = arith.constant 0 : index
    %10 = vector.load %arg5[%c0_8, %c0_9] : memref<32x16xbf16, #tpu.memory_space<vmem>>, vector<32x16xbf16>
    %c0_10 = arith.constant 0 : index
    %c0_11 = arith.constant 0 : index
    %11 = vector.load %arg4[%c0_10, %c0_11] : memref<16x40xbf16, #tpu.memory_space<vmem>>, vector<16x40xbf16>
    %cst_12 = arith.constant dense<0.000000e+00> : vector<32x40xf32>
    %12 = tpu.matmul %10, %11, %cst_12 {dimension_numbers = #tpu.dot_dimension_numbers<[1], [0], [0], [1], [0, 0, 1, 1], [], []>} : vector<32x16xbf16>, vector<16x40xbf16>, vector<32x40xf32> -> vector<32x40xf32>
    %c0_13 = arith.constant 0 : index
    %c0_14 = arith.constant 0 : index
    %13 = vector.load %arg6[%c0_13, %c0_14] : memref<32x1xf32, #tpu.memory_space<vmem>>, vector<32x1xf32>
    %14 = vector.broadcast %13 : vector<32x1xf32> to vector<32x40xf32>
    %15 = arith.addf %12, %14 : vector<32x40xf32>
    %16 = arith.truncf %15 : vector<32x40xf32> to vector<32x40xbf16>
    %c0_15 = arith.constant 0 : index
    %c0_16 = arith.constant 0 : index
    %17 = vector.load %arg8[%c0_15, %c0_16] : memref<32x40xbf16, #tpu.memory_space<vmem>>, vector<32x40xbf16>
    tpu.vector_store %arg8[%c0_15, %c0_16], %16 {strides = array<i32>} : memref<32x40xbf16, #tpu.memory_space<vmem>>, vector<32x40xbf16>,
    return
  }
  func.func @transform_0(%arg0: i32) -> (i32, i32) {
    %c0_i32 = arith.constant 0 : i32
    %c0_i32_0 = arith.constant 0 : i32
    return %c0_i32, %arg0 : i32, i32
  }
  func.func @transform_1(%arg0: i32) -> (i32, i32) {
    %c0_i32 = arith.constant 0 : i32
    %c0_i32_0 = arith.constant 0 : i32
    %c0_i32_1 = arith.constant 0 : i32
    return %c0_i32, %c0_i32_0 : i32, i32
  }
  func.func @transform_2(%arg0: i32) -> (i32, i32) {
    %c0_i32 = arith.constant 0 : i32
    %c0_i32_0 = arith.constant 0 : i32
    %c0_i32_1 = arith.constant 0 : i32
    return %c0_i32, %c0_i32_0 : i32, i32
  }
  func.func @transform_3(%arg0: i32) -> (i32, i32) {
    %c0_i32 = arith.constant 0 : i32
    %c0_i32_0 = arith.constant 0 : i32
    return %c0_i32, %arg0 : i32, i32
  }
  func.func @transform_4(%arg0: i32) -> (i32, i32) {
    %c0_i32 = arith.constant 0 : i32
    %c0_i32_0 = arith.constant 0 : i32
    %c0_i32_1 = arith.constant 0 : i32
    return %c0_i32, %c0_i32_0 : i32, i32
  }
  func.func @transform_5(%arg0: i32) -> (i32, i32) {
    %c0_i32 = arith.constant 0 : i32
    %c0_i32_0 = arith.constant 0 : i32
    %c0_i32_1 = arith.constant 0 : i32
    return %c0_i32, %c0_i32_0 : i32, i32
  }
  func.func @transform_6(%arg0: i32) -> (i32, i32) {
    %c0_i32 = arith.constant 0 : i32
    %c0_i32_0 = arith.constant 0 : i32
    return %c0_i32, %arg0 : i32, i32
  }
  func.func @transform_7(%arg0: i32) -> (i32, i32) {
    %c0_i32 = arith.constant 0 : i32
    %c0_i32_0 = arith.constant 0 : i32
    return %c0_i32, %arg0 : i32, i32
  }
}

module attributes {stable_mosaic.version = 11 : i64} {
  func.func @_conv_kernel(%arg0: i32, %arg1: memref<288x40xbf16, #tpu.memory_space<vmem>>, %arg2: memref<32x288xbf16, #tpu.memory_space<vmem>>, %arg3: memref<32x40xbf16, #tpu.memory_space<vmem>>, %arg4: memref<32x40xbf16, #tpu.memory_space<vmem>>) attributes {dimension_semantics = [#tpu.dimension_semantics<parallel>], iteration_bounds = array<i64: 1>, scalar_prefetch = 0 : i64, scratch_operands = 0 : i64, tpu.core_type = #tpu.core_type<tc>, window_params = [{transform_indices = @transform_0, window_bounds = array<i64: 288, 40>}, {pipeline_mode = #tpu.pipeline_mode<synchronous>, transform_indices = @transform_1, window_bounds = array<i64: 32, 288>}, {transform_indices = @transform_2, window_bounds = array<i64: 32, 40>}, {transform_indices = @transform_3, window_bounds = array<i64: 32, 40>}]} {
    %c0 = arith.constant 0 : index
    %c0_0 = arith.constant 0 : index
    %0 = vector.load %arg2[%c0, %c0_0] : memref<32x288xbf16, #tpu.memory_space<vmem>>, vector<32x288xbf16>
    %c0_1 = arith.constant 0 : index
    %c0_2 = arith.constant 0 : index
    %1 = vector.load %arg1[%c0_1, %c0_2] : memref<288x40xbf16, #tpu.memory_space<vmem>>, vector<288x40xbf16>
    %cst = arith.constant dense<0.000000e+00> : vector<32x40xf32>
    %2 = tpu.matmul %0, %1, %cst {dimension_numbers = #tpu.dot_dimension_numbers<[1], [0], [0], [1], [0, 0, 1, 1], [], []>} : vector<32x288xbf16>, vector<288x40xbf16>, vector<32x40xf32> -> vector<32x40xf32>
    %c0_3 = arith.constant 0 : index
    %c0_4 = arith.constant 0 : index
    %3 = vector.load %arg3[%c0_3, %c0_4] : memref<32x40xbf16, #tpu.memory_space<vmem>>, vector<32x40xbf16>
    %4 = arith.extf %3 : vector<32x40xbf16> to vector<32x40xf32>
    %5 = arith.addf %2, %4 : vector<32x40xf32>
    %6 = arith.truncf %5 : vector<32x40xf32> to vector<32x40xbf16>
    %c0_5 = arith.constant 0 : index
    %c0_6 = arith.constant 0 : index
    %7 = vector.load %arg4[%c0_5, %c0_6] : memref<32x40xbf16, #tpu.memory_space<vmem>>, vector<32x40xbf16>
    tpu.vector_store %arg4[%c0_5, %c0_6], %6 {strides = array<i32>} : memref<32x40xbf16, #tpu.memory_space<vmem>>, vector<32x40xbf16>,
    return
  }
  func.func @transform_0(%arg0: i32) -> (i32, i32) {
    %c0_i32 = arith.constant 0 : i32
    %c0_i32_0 = arith.constant 0 : i32
    return %c0_i32, %arg0 : i32, i32
  }
  func.func @transform_1(%arg0: i32) -> (i32, i32) {
    %c0_i32 = arith.constant 0 : i32
    %c0_i32_0 = arith.constant 0 : i32
    %c0_i32_1 = arith.constant 0 : i32
    return %c0_i32, %c0_i32_0 : i32, i32
  }
  func.func @transform_2(%arg0: i32) -> (i32, i32) {
    %c0_i32 = arith.constant 0 : i32
    %c0_i32_0 = arith.constant 0 : i32
    return %c0_i32, %arg0 : i32, i32
  }
  func.func @transform_3(%arg0: i32) -> (i32, i32) {
    %c0_i32 = arith.constant 0 : i32
    %c0_i32_0 = arith.constant 0 : i32
    return %c0_i32, %arg0 : i32, i32
  }
}

module attributes {stable_mosaic.version = 11 : i64} {
  func.func @_conv_kernel(%arg0: i32, %arg1: memref<288x40xbf16, #tpu.memory_space<vmem>>, %arg2: memref<32x288xbf16, #tpu.memory_space<vmem>>, %arg3: memref<32x40xbf16, #tpu.memory_space<vmem>>) attributes {dimension_semantics = [#tpu.dimension_semantics<parallel>], iteration_bounds = array<i64: 1>, scalar_prefetch = 0 : i64, scratch_operands = 0 : i64, tpu.core_type = #tpu.core_type<tc>, window_params = [{transform_indices = @transform_0, window_bounds = array<i64: 288, 40>}, {pipeline_mode = #tpu.pipeline_mode<synchronous>, transform_indices = @transform_1, window_bounds = array<i64: 32, 288>}, {transform_indices = @transform_2, window_bounds = array<i64: 32, 40>}]} {
    %c0 = arith.constant 0 : index
    %c0_0 = arith.constant 0 : index
    %0 = vector.load %arg2[%c0, %c0_0] : memref<32x288xbf16, #tpu.memory_space<vmem>>, vector<32x288xbf16>
    %c0_1 = arith.constant 0 : index
    %c0_2 = arith.constant 0 : index
    %1 = vector.load %arg1[%c0_1, %c0_2] : memref<288x40xbf16, #tpu.memory_space<vmem>>, vector<288x40xbf16>
    %cst = arith.constant dense<0.000000e+00> : vector<32x40xf32>
    %2 = tpu.matmul %0, %1, %cst {dimension_numbers = #tpu.dot_dimension_numbers<[1], [0], [0], [1], [0, 0, 1, 1], [], []>} : vector<32x288xbf16>, vector<288x40xbf16>, vector<32x40xf32> -> vector<32x40xf32>
    %3 = arith.truncf %2 : vector<32x40xf32> to vector<32x40xbf16>
    %c0_3 = arith.constant 0 : index
    %c0_4 = arith.constant 0 : index
    %4 = vector.load %arg3[%c0_3, %c0_4] : memref<32x40xbf16, #tpu.memory_space<vmem>>, vector<32x40xbf16>
    tpu.vector_store %arg3[%c0_3, %c0_4], %3 {strides = array<i32>} : memref<32x40xbf16, #tpu.memory_space<vmem>>, vector<32x40xbf16>,
    return
  }
  func.func @transform_0(%arg0: i32) -> (i32, i32) {
    %c0_i32 = arith.constant 0 : i32
    %c0_i32_0 = arith.constant 0 : i32
    return %c0_i32, %arg0 : i32, i32
  }
  func.func @transform_1(%arg0: i32) -> (i32, i32) {
    %c0_i32 = arith.constant 0 : i32
    %c0_i32_0 = arith.constant 0 : i32
    %c0_i32_1 = arith.constant 0 : i32
    return %c0_i32, %c0_i32_0 : i32, i32
  }
  func.func @transform_2(%arg0: i32) -> (i32, i32) {
    %c0_i32 = arith.constant 0 : i32
    %c0_i32_0 = arith.constant 0 : i32
    return %c0_i32, %arg0 : i32, i32
  }
}

module attributes {stable_mosaic.version = 11 : i64} {
  func.func @_conv_kernel(%arg0: i32, %arg1: memref<288x40xbf16, #tpu.memory_space<vmem>>, %arg2: memref<32x288xbf16, #tpu.memory_space<vmem>>, %arg3: memref<32x1xf32, #tpu.memory_space<vmem>>, %arg4: memref<32x40xbf16, #tpu.memory_space<vmem>>) attributes {dimension_semantics = [#tpu.dimension_semantics<parallel>], iteration_bounds = array<i64: 1>, scalar_prefetch = 0 : i64, scratch_operands = 0 : i64, tpu.core_type = #tpu.core_type<tc>, window_params = [{transform_indices = @transform_0, window_bounds = array<i64: 288, 40>}, {pipeline_mode = #tpu.pipeline_mode<synchronous>, transform_indices = @transform_1, window_bounds = array<i64: 32, 288>}, {pipeline_mode = #tpu.pipeline_mode<synchronous>, transform_indices = @transform_2, window_bounds = array<i64: 32, 1>}, {transform_indices = @transform_3, window_bounds = array<i64: 32, 40>}]} {
    %c0 = arith.constant 0 : index
    %c0_0 = arith.constant 0 : index
    %0 = vector.load %arg2[%c0, %c0_0] : memref<32x288xbf16, #tpu.memory_space<vmem>>, vector<32x288xbf16>
    %c0_1 = arith.constant 0 : index
    %c0_2 = arith.constant 0 : index
    %1 = vector.load %arg1[%c0_1, %c0_2] : memref<288x40xbf16, #tpu.memory_space<vmem>>, vector<288x40xbf16>
    %cst = arith.constant dense<0.000000e+00> : vector<32x40xf32>
    %2 = tpu.matmul %0, %1, %cst {dimension_numbers = #tpu.dot_dimension_numbers<[1], [0], [0], [1], [0, 0, 1, 1], [], []>} : vector<32x288xbf16>, vector<288x40xbf16>, vector<32x40xf32> -> vector<32x40xf32>
    %c0_3 = arith.constant 0 : index
    %c0_4 = arith.constant 0 : index
    %3 = vector.load %arg3[%c0_3, %c0_4] : memref<32x1xf32, #tpu.memory_space<vmem>>, vector<32x1xf32>
    %4 = vector.broadcast %3 : vector<32x1xf32> to vector<32x40xf32>
    %5 = arith.addf %2, %4 : vector<32x40xf32>
    %cst_5 = arith.constant 0.000000e+00 : f32
    %6 = vector.broadcast %cst_5 : f32 to vector<32x40xf32>
    %7 = arith.maximumf %5, %6 : vector<32x40xf32>
    %8 = arith.truncf %7 : vector<32x40xf32> to vector<32x40xbf16>
    %c0_6 = arith.constant 0 : index
    %c0_7 = arith.constant 0 : index
    %9 = vector.load %arg4[%c0_6, %c0_7] : memref<32x40xbf16, #tpu.memory_space<vmem>>, vector<32x40xbf16>
    tpu.vector_store %arg4[%c0_6, %c0_7], %8 {strides = array<i32>} : memref<32x40xbf16, #tpu.memory_space<vmem>>, vector<32x40xbf16>,
    return
  }
  func.func @transform_0(%arg0: i32) -> (i32, i32) {
    %c0_i32 = arith.constant 0 : i32
    %c0_i32_0 = arith.constant 0 : i32
    return %c0_i32, %arg0 : i32, i32
  }
  func.func @transform_1(%arg0: i32) -> (i32, i32) {
    %c0_i32 = arith.constant 0 : i32
    %c0_i32_0 = arith.constant 0 : i32
    %c0_i32_1 = arith.constant 0 : i32
    return %c0_i32, %c0_i32_0 : i32, i32
  }
  func.func @transform_2(%arg0: i32) -> (i32, i32) {
    %c0_i32 = arith.constant 0 : i32
    %c0_i32_0 = arith.constant 0 : i32
    %c0_i32_1 = arith.constant 0 : i32
    return %c0_i32, %c0_i32_0 : i32, i32
  }
  func.func @transform_3(%arg0: i32) -> (i32, i32) {
    %c0_i32 = arith.constant 0 : i32
    %c0_i32_0 = arith.constant 0 : i32
    return %c0_i32, %arg0 : i32, i32
  }
}

module attributes {stable_mosaic.version = 11 : i64} {
  func.func @_conv_kernel(%arg0: i32, %arg1: memref<128x24xbf16, #tpu.memory_space<vmem>>, %arg2: memref<32x128xbf16, #tpu.memory_space<vmem>>, %arg3: memref<32x1xf32, #tpu.memory_space<vmem>>, %arg4: memref<32x24xbf16, #tpu.memory_space<vmem>>) attributes {dimension_semantics = [#tpu.dimension_semantics<parallel>], iteration_bounds = array<i64: 1>, scalar_prefetch = 0 : i64, scratch_operands = 0 : i64, tpu.core_type = #tpu.core_type<tc>, window_params = [{transform_indices = @transform_0, window_bounds = array<i64: 128, 24>}, {pipeline_mode = #tpu.pipeline_mode<synchronous>, transform_indices = @transform_1, window_bounds = array<i64: 32, 128>}, {pipeline_mode = #tpu.pipeline_mode<synchronous>, transform_indices = @transform_2, window_bounds = array<i64: 32, 1>}, {transform_indices = @transform_3, window_bounds = array<i64: 32, 24>}]} {
    %c0 = arith.constant 0 : index
    %c0_0 = arith.constant 0 : index
    %0 = vector.load %arg2[%c0, %c0_0] : memref<32x128xbf16, #tpu.memory_space<vmem>>, vector<32x128xbf16>
    %c0_1 = arith.constant 0 : index
    %c0_2 = arith.constant 0 : index
    %1 = vector.load %arg1[%c0_1, %c0_2] : memref<128x24xbf16, #tpu.memory_space<vmem>>, vector<128x24xbf16>
    %cst = arith.constant dense<0.000000e+00> : vector<32x24xf32>
    %2 = tpu.matmul %0, %1, %cst {dimension_numbers = #tpu.dot_dimension_numbers<[1], [0], [0], [1], [0, 0, 1, 1], [], []>} : vector<32x128xbf16>, vector<128x24xbf16>, vector<32x24xf32> -> vector<32x24xf32>
    %c0_3 = arith.constant 0 : index
    %c0_4 = arith.constant 0 : index
    %3 = vector.load %arg3[%c0_3, %c0_4] : memref<32x1xf32, #tpu.memory_space<vmem>>, vector<32x1xf32>
    %4 = vector.broadcast %3 : vector<32x1xf32> to vector<32x24xf32>
    %5 = arith.addf %2, %4 : vector<32x24xf32>
    %cst_5 = arith.constant 0.000000e+00 : f32
    %6 = vector.broadcast %cst_5 : f32 to vector<32x24xf32>
    %7 = arith.maximumf %5, %6 : vector<32x24xf32>
    %8 = arith.truncf %7 : vector<32x24xf32> to vector<32x24xbf16>
    %c0_6 = arith.constant 0 : index
    %c0_7 = arith.constant 0 : index
    %9 = vector.load %arg4[%c0_6, %c0_7] : memref<32x24xbf16, #tpu.memory_space<vmem>>, vector<32x24xbf16>
    tpu.vector_store %arg4[%c0_6, %c0_7], %8 {strides = array<i32>} : memref<32x24xbf16, #tpu.memory_space<vmem>>, vector<32x24xbf16>,
    return
  }
  func.func @transform_0(%arg0: i32) -> (i32, i32) {
    %c0_i32 = arith.constant 0 : i32
    %c0_i32_0 = arith.constant 0 : i32
    return %c0_i32, %arg0 : i32, i32
  }
  func.func @transform_1(%arg0: i32) -> (i32, i32) {
    %c0_i32 = arith.constant 0 : i32
    %c0_i32_0 = arith.constant 0 : i32
    %c0_i32_1 = arith.constant 0 : i32
    return %c0_i32, %c0_i32_0 : i32, i32
  }
  func.func @transform_2(%arg0: i32) -> (i32, i32) {
    %c0_i32 = arith.constant 0 : i32
    %c0_i32_0 = arith.constant 0 : i32
    %c0_i32_1 = arith.constant 0 : i32
    return %c0_i32, %c0_i32_0 : i32, i32
  }
  func.func @transform_3(%arg0: i32) -> (i32, i32) {
    %c0_i32 = arith.constant 0 : i32
    %c0_i32_0 = arith.constant 0 : i32
    return %c0_i32, %arg0 : i32, i32
  }
}

module attributes {stable_mosaic.version = 11 : i64} {
  func.func @_conv_kernel(%arg0: i32, %arg1: memref<128x10xbf16, #tpu.memory_space<vmem>>, %arg2: memref<32x128xbf16, #tpu.memory_space<vmem>>, %arg3: memref<32x1xf32, #tpu.memory_space<vmem>>, %arg4: memref<32x10xf32, #tpu.memory_space<vmem>>) attributes {dimension_semantics = [#tpu.dimension_semantics<parallel>], iteration_bounds = array<i64: 1>, scalar_prefetch = 0 : i64, scratch_operands = 0 : i64, tpu.core_type = #tpu.core_type<tc>, window_params = [{transform_indices = @transform_0, window_bounds = array<i64: 128, 10>}, {pipeline_mode = #tpu.pipeline_mode<synchronous>, transform_indices = @transform_1, window_bounds = array<i64: 32, 128>}, {pipeline_mode = #tpu.pipeline_mode<synchronous>, transform_indices = @transform_2, window_bounds = array<i64: 32, 1>}, {transform_indices = @transform_3, window_bounds = array<i64: 32, 10>}]} {
    %c0 = arith.constant 0 : index
    %c0_0 = arith.constant 0 : index
    %0 = vector.load %arg2[%c0, %c0_0] : memref<32x128xbf16, #tpu.memory_space<vmem>>, vector<32x128xbf16>
    %c0_1 = arith.constant 0 : index
    %c0_2 = arith.constant 0 : index
    %1 = vector.load %arg1[%c0_1, %c0_2] : memref<128x10xbf16, #tpu.memory_space<vmem>>, vector<128x10xbf16>
    %cst = arith.constant dense<0.000000e+00> : vector<32x10xf32>
    %2 = tpu.matmul %0, %1, %cst {dimension_numbers = #tpu.dot_dimension_numbers<[1], [0], [0], [1], [0, 0, 1, 1], [], []>} : vector<32x128xbf16>, vector<128x10xbf16>, vector<32x10xf32> -> vector<32x10xf32>
    %c0_3 = arith.constant 0 : index
    %c0_4 = arith.constant 0 : index
    %3 = vector.load %arg3[%c0_3, %c0_4] : memref<32x1xf32, #tpu.memory_space<vmem>>, vector<32x1xf32>
    %4 = vector.broadcast %3 : vector<32x1xf32> to vector<32x10xf32>
    %5 = arith.addf %2, %4 : vector<32x10xf32>
    %c0_5 = arith.constant 0 : index
    %c0_6 = arith.constant 0 : index
    %6 = vector.load %arg4[%c0_5, %c0_6] : memref<32x10xf32, #tpu.memory_space<vmem>>, vector<32x10xf32>
    tpu.vector_store %arg4[%c0_5, %c0_6], %5 {strides = array<i32>} : memref<32x10xf32, #tpu.memory_space<vmem>>, vector<32x10xf32>,
    return
  }
  func.func @transform_0(%arg0: i32) -> (i32, i32) {
    %c0_i32 = arith.constant 0 : i32
    %c0_i32_0 = arith.constant 0 : i32
    return %c0_i32, %arg0 : i32, i32
  }
  func.func @transform_1(%arg0: i32) -> (i32, i32) {
    %c0_i32 = arith.constant 0 : i32
    %c0_i32_0 = arith.constant 0 : i32
    %c0_i32_1 = arith.constant 0 : i32
    return %c0_i32, %c0_i32_0 : i32, i32
  }
  func.func @transform_2(%arg0: i32) -> (i32, i32) {
    %c0_i32 = arith.constant 0 : i32
    %c0_i32_0 = arith.constant 0 : i32
    %c0_i32_1 = arith.constant 0 : i32
    return %c0_i32, %c0_i32_0 : i32, i32
  }
  func.func @transform_3(%arg0: i32) -> (i32, i32) {
    %c0_i32 = arith.constant 0 : i32
    %c0_i32_0 = arith.constant 0 : i32
    return %c0_i32, %arg0 : i32, i32
  }
}

</mosaic_0001>

<llo_original>
// kernel: resnet_forward.15
$region0: #{resnet_forward.15}
  #allocation0 [shape = 'u32[]', space=smem, size = 0x4, offset = 0x4, fixed_abs, tag = 'smem constant byte address 0x4 - core index']
  #allocation1 [shape = 'u32[144,128]{1,0:T(1,128)}', space=vmem, size = 0x12000, scoped, tag = 'internal scratch']
  %s0 = inlined_call_operand.vmem [shape: bf16[27,1024], index: 0, kind: input, shape index: {}]
  %s1 = inlined_call_operand.vmem [shape: bf16[4,27], index: 1, kind: input, shape index: {}]
  %s2 = inlined_call_operand.vmem [shape: f32[4,1], index: 2, kind: input, shape index: {}]
  %s3 = inlined_call_operand.vmem [shape: bf16[4,1024], index: 3, kind: output, shape index: {}]
  %s4 = sld [smem:[#allocation0]]
  $region68: #{resnet_forward.15} parent=0
    _
  %s6 = ssub.s32 1, %s4
  %s7 = scalar_select 0, %s6, %s4
  $region1: #{resnet_forward.15} parent=0
    #allocation2 [shape = 'u8[65536]{0}', space=vmem, size = 0x10000, scoped, tag = 'input window, operand 0']
    loop: start=0, step=1, limit=4
    $region2: #{resnet_forward.15} parent=1 // loop_pre_header
      _
    $region3: #{resnet_forward.15} parent=1 // loop_header
      %s9 = sphi 0, %s13
      %p10 = scmp.ge.s32.totalorder %s9, 4
      %s19 = sphi 0, %s21
      %s22 = sphi 0, %s19
      %s23 = sphi 0, %s22
      %s39 = sphi 0, %s23
      %s43 = sphi 0, %s43
      %s45 = sphi 0, %s43
      %s46 = sphi 0, %s45
      %s60 = sphi 0, %s46
      %s64 = sphi 0, %s64
      %s66 = sphi 0, %s64
      %s67 = sphi 0, %s66
      %s81 = sphi 0, %s67
      %s87 = sphi 0, %s89
      %s90 = sphi 0, %s87
      %s91 = sphi 0, %s90
      %s107 = sphi 0, %s91
    $region4: #{resnet_forward.15} parent=1 // loop_header_branch
      %12 = sbr.rel (%p10) target = $region8
    $region5: #{resnet_forward.15} parent=1 // loop_body
      %s14 = ssub.s32 %s9, 1
      %s15 = ssub.s32 %s9, 2
      %s16 = sadd.s32 %s9, 1
      %s17 = ssub.s32 %s9, %s16
      %p18 = scmp.eq.s32.totalorder %s17, 0
      %s20 = sadd.s32 %s19, 1
      %s21 = scalar_select %p18, %s19, %s20
      %p24 = pneg %p18
      %p25 = scmp.eq.s32.totalorder %s9, 1
      %p26 = por %p24, %p25
      %p27 = scmp.ne.s32.totalorder %s19, %s22
      %p28 = scmp.eq.s32.totalorder %s9, 0
      %p29 = por %p27, %p28
      %p30 = scmp.ne.s32.totalorder %s19, %s22
      %p31 = scmp.eq.s32.totalorder %s14, 1
      %p32 = por %p30, %p31
      %p33 = scmp.ne.s32.totalorder %s22, %s23
      %p34 = scmp.eq.s32.totalorder %s14, 0
      %p35 = por %p33, %p34
      %p36 = scmp.ne.s32.totalorder %s22, %s23
      %p37 = scmp.eq.s32.totalorder %s15, 1
      %p38 = por %p36, %p37
      %p40 = scmp.ne.s32.totalorder %s23, %s39
      %p41 = scmp.eq.s32.totalorder %s15, 0
      %p42 = por %p40, %p41
      %s44 = sadd.s32 %s43, 1
      %p47 = scmp.eq.s32.totalorder %s9, 1
      %p48 = scmp.ne.s32.totalorder %s43, %s45
      %p49 = scmp.eq.s32.totalorder %s9, 0
      %p50 = por %p48, %p49
      %p51 = scmp.ne.s32.totalorder %s43, %s45
      %p52 = scmp.eq.s32.totalorder %s14, 1
      %p53 = por %p51, %p52
      %p54 = scmp.ne.s32.totalorder %s45, %s46
      %p55 = scmp.eq.s32.totalorder %s14, 0
      %p56 = por %p54, %p55
      %p57 = scmp.ne.s32.totalorder %s45, %s46
      %p58 = scmp.eq.s32.totalorder %s15, 1
      %p59 = por %p57, %p58
      %p61 = scmp.ne.s32.totalorder %s46, %s60
      %p62 = scmp.eq.s32.totalorder %s15, 0
      %p63 = por %p61, %p62
      %s65 = sadd.s32 %s64, 1
      %p68 = scmp.eq.s32.totalorder %s9, 1
      %p69 = scmp.ne.s32.totalorder %s64, %s66
      %p70 = scmp.eq.s32.totalorder %s9, 0
      %p71 = por %p69, %p70
      %p72 = scmp.ne.s32.totalorder %s64, %s66
      %p73 = scmp.eq.s32.totalorder %s14, 1
      %p74 = por %p72, %p73
      %p75 = scmp.ne.s32.totalorder %s66, %s67
      %p76 = scmp.eq.s32.totalorder %s14, 0
      %p77 = por %p75, %p76
      %p78 = scmp.ne.s32.totalorder %s66, %s67
      %p79 = scmp.eq.s32.totalorder %s15, 1
      %p80 = por %p78, %p79
      %p82 = scmp.ne.s32.totalorder %s67, %s81
      %p83 = scmp.eq.s32.totalorder %s15, 0
      %p84 = por %p82, %p83
      %s85 = ssub.s32 %s9, %s16
      %p86 = scmp.eq.s32.totalorder %s85, 0
      %s88 = sadd.s32 %s87, 1
      %s89 = scalar_select %p86, %s87, %s88
      %p92 = pneg %p86
      %p93 = scmp.eq.s32.totalorder %s9, 1
      %p94 = por %p92, %p93
      %p95 = scmp.ne.s32.totalorder %s87, %s90
      %p96 = scmp.eq.s32.totalorder %s9, 0
      %p97 = por %p95, %p96
      %p98 = scmp.ne.s32.totalorder %s87, %s90
      %p99 = scmp.eq.s32.totalorder %s14, 1
      %p100 = por %p98, %p99
      %p101 = scmp.ne.s32.totalorder %s90, %s91
      %p102 = scmp.eq.s32.totalorder %s14, 0
      %p103 = por %p101, %p102
      %p104 = scmp.ne.s32.totalorder %s90, %s91
      %p105 = scmp.eq.s32.totalorder %s15, 1
      %p106 = por %p104, %p105
      %p108 = scmp.ne.s32.totalorder %s91, %s107
      %p109 = scmp.eq.s32.totalorder %s15, 0
      %p110 = por %p108, %p109
      %p111 = scmp.le.s32.totalorder 1, %s9
      %p112 = scmp.lt.s32.totalorder %s9, 3
      %p113 = pnand %p111, %p112
      %p114 = pneg %p113
      // Predicated region
      $region9: #{resnet_forward.15} parent=5 // pred_check
        _
      $region10: #{resnet_forward.15} parent=5 // pred_check_branch
        %116 = sbr.rel (%p113) target = $region12
      $region11: #{resnet_forward.15} parent=5 // pred_region
        %s117 = ssub.s32 %s9, 1
        // Predicated region
        $region13: #{resnet_forward.15} parent=11 // pred_check
          %p118 = pneg %p56
        $region14: #{resnet_forward.15} parent=11 // pred_check_branch
          %120 = sbr.rel (%p118) target = $region16
        $region15: #{resnet_forward.15} parent=11 // pred_region
          _
        $region16: #{resnet_forward.15} parent=11 // pred_fallthru
          _
        // Predicated region
        $region17: #{resnet_forward.15} parent=11 // pred_check
          %p121 = pneg %p77
        $region18: #{resnet_forward.15} parent=11 // pred_check_branch
          %123 = sbr.rel (%p121) target = $region20
        $region19: #{resnet_forward.15} parent=11 // pred_region
          _
        $region20: #{resnet_forward.15} parent=11 // pred_fallthru
          _
      $region12: #{resnet_forward.15} parent=5 // pred_fallthru
        _
      %p124 = scmp.lt.s32.totalorder %s9, 2
      // Predicated region
      $region21: #{resnet_forward.15} parent=5 // pred_check
        %p125 = pneg %p124
      $region22: #{resnet_forward.15} parent=5 // pred_check_branch
        %127 = sbr.rel (%p125) target = $region24
      $region23: #{resnet_forward.15} parent=5 // pred_region
        // Predicated region
        $region25: #{resnet_forward.15} parent=23 // pred_check
          %p128 = pneg %p29
        $region26: #{resnet_forward.15} parent=23 // pred_check_branch
          %130 = sbr.rel (%p128) target = $region28
        $region27: #{resnet_forward.15} parent=23 // pred_region
          %s131 = sand.u32 %s19, 1
          %s132 = sand.u32 %s19, 1
          %s133 = smul.addr %s132, 64
          %s134 = scalar_lea.vmem [#allocation2], %s133
          %s135 = smul.u32 4, %s9
          %s136 = smul.addr %s135, 4
          %s137 = scalar_lea.vmem %s0, %s136
          // Predicated region
          $region29: #{resnet_forward.15} parent=27 // pred_check
            _
          $region30: #{resnet_forward.15} parent=27 // pred_check_branch
            %139 = sbr.rel (0) target = $region32
          $region31: #{resnet_forward.15} parent=27 // pred_region
            // Predicated region
            $region33: #{resnet_forward.15} parent=31 // pred_check
              _
            $region34: #{resnet_forward.15} parent=31 // pred_check_branch
              %141 = sbr.rel (0) target = $region36
            $region35: #{resnet_forward.15} parent=31 // pred_region
              loop: start=0, step=1, limit=1
              $region37: #{resnet_forward.15} parent=35 // loop_pre_header
                _
              $region38: #{resnet_forward.15} parent=35 // loop_header
                %s143 = sphi 0, %s147
                %p144 = scmp.ge.s32.totalorder %s143, 1
                %s148 = sphi %s137, %s137
                %s149 = sphi %s134, %s134
              $region39: #{resnet_forward.15} parent=35 // loop_header_branch
                %146 = sbr.rel (%p144) target = $region43
              $region40: #{resnet_forward.15} parent=35 // loop_body
                %v150 = vld [vmem:[%s148] sm:$0xff]
                %151 = vst [vmem:[%s149] sm:$0xff] %v150
                %v152 = vld [vmem:[%s148 + $0x8] sm:$0xff]
                %153 = vst [vmem:[%s149 + $0x8] sm:$0xff] %v152
                %v154 = vld [vmem:[%s148 + $0x20] sm:$0xff]
                %155 = vst [vmem:[%s149 + $0x10] sm:$0xff] %v154
                %v156 = vld [vmem:[%s148 + $0x28] sm:$0xff]
                %157 = vst [vmem:[%s149 + $0x18] sm:$0xff] %v156
                %v158 = vld [vmem:[%s148 + $0x40] sm:$0xff]
                %159 = vst [vmem:[%s149 + $0x20] sm:$0xff] %v158
                %v160 = vld [vmem:[%s148 + $0x48] sm:$0xff]
                %161 = vst [vmem:[%s149 + $0x28] sm:$0xff] %v160
                %v162 = vld [vmem:[%s148 + $0x60] sm:$0xff]
                %163 = vst [vmem:[%s149 + $0x30] sm:$0xff] %v162
                %v164 = vld [vmem:[%s148 + $0x68] sm:$0xff]
                %165 = vst [vmem:[%s149 + $0x38] sm:$0xff] %v164
              $region41: #{resnet_forward.15} parent=35 // loop_footer
                %s147 = sadd.s32 1, %s143
              $region42: #{resnet_forward.15} parent=35 // loop_footer_branch
                %142 = sbr.rel target = $region38
              $region43: #{resnet_forward.15} parent=35 // loop_exit
                _
            $region36: #{resnet_forward.15} parent=31 // pred_fallthru
              _
            // Predicated region
            $region44: #{resnet_forward.15} parent=31 // pred_check
              _
            $region45: #{resnet_forward.15} parent=31 // pred_check_branch
              %167 = sbr.rel target = $region47
            $region46: #{resnet_forward.15} parent=31 // pred_region
              _
            $region47: #{resnet_forward.15} parent=31 // pred_fallthru
              _
          $region32: #{resnet_forward.15} parent=27 // pred_fallthru
            _
          %168 = vnop
        $region28: #{resnet_forward.15} parent=23 // pred_fallthru
          _
      $region24: #{resnet_forward.15} parent=5 // pred_fallthru
        _
      %p169 = scmp.le.s32.totalorder 1, %s9
      %p170 = scmp.lt.s32.totalorder %s9, 3
      %p171 = pnand %p169, %p170
      %p172 = pneg %p171
      // Predicated region
      $region48: #{resnet_forward.15} parent=5 // pred_check
        _
      $region49: #{resnet_forward.15} parent=5 // pred_check_branch
        %174 = sbr.rel (%p171) target = $region51
      $region50: #{resnet_forward.15} parent=5 // pred_region
        %s175 = ssub.s32 %s9, 1
        %s176 = sand.u32 %s22, 1
        %s177 = sand.u32 %s22, 1
        %s178 = smul.addr %s177, 64
        %s179 = scalar_lea.vmem [#allocation2], %s178
        // Predicated region
        $region52: #{resnet_forward.15} parent=50 // pred_check
          %p180 = pneg %p35
        $region53: #{resnet_forward.15} parent=50 // pred_check_branch
          %182 = sbr.rel (%p180) target = $region55
        $region54: #{resnet_forward.15} parent=50 // pred_region
          _
        $region55: #{resnet_forward.15} parent=50 // pred_fallthru
          _
        %s183 = sand.u32 %s22, 1
        %s184 = sand.u32 %s22, 1
        %s185 = smul.addr %s184, 64
        %s186 = scalar_lea.vmem [#allocation2], %s185
        %p187 = pneg %p35
        %p188 = pneg %p32
        %p189 = pneg %p56
        %p190 = pneg %p53
        %p191 = pneg %p77
        %p192 = pneg %p74
        %p193 = pneg %p103
        %p194 = pneg %p100
        %s195 = smul.u32 4, %s14
        %p196 = scmp.lt.s32.totalorder %s195, 7
        %s197 = scalar_select %p196, %s195, 7
        %s198 = smul.addr %s197, 2
        %s199 = scalar_lea.vmem %s3, %s198
        %s200 = smul.u32 4, %s14
        %s201 = smul.u32 4, %s14
        %p202 = scmp.lt.s32.totalorder %s201, 7
        %s203 = scalar_select %p202, %s201, 7
        %s204 = smul.addr %s203, 2
        %s205 = scalar_lea.vmem %s3, %s204
        %s206 = smul.u32 4, %s14
        %v208 = vld [vmem:[%s1] sm:$0x3]
        %v209 = vld [vmem:[%s179] sm:$0xff]
        %v210 = vld [vmem:[%s179 + $0x8] sm:$0xff]
        %v211 = vld [vmem:[%s179 + $0x10] sm:$0xff]
        %v212 = vld [vmem:[%s179 + $0x18] sm:$0xff]
        %v213 = vld [vmem:[%s179 + $0x20] sm:$0xff]
        %v214 = vld [vmem:[%s179 + $0x28] sm:$0xff]
        %v215 = vld [vmem:[%s179 + $0x30] sm:$0x33]
        %v216 = vld [vmem:[%s179 + $0x38] sm:$0x33]
        %v217 = vld [vmem:[%s2] sm:$0xf]
        %219 = vset.pattern.permute.xlu0 0
        %220 = vperm.xlu0 %219, %v217
        %v221 = vpop.permute.xlu0 %220
        %v231 = vunpack.c.l.b16 %v209
        %v232 = vunpack.c.h.b16 %v209
        %v233 = vunpack.c.l.b16 %v210
        %v234 = vunpack.c.h.b16 %v210
        %v235 = vunpack.c.l.b16 %v211
        %v236 = vunpack.c.h.b16 %v211
        %v237 = vunpack.c.l.b16 %v212
        %v238 = vunpack.c.h.b16 %v212
        %v239 = vunpack.c.l.b16 %v213
        %v240 = vunpack.c.h.b16 %v213
        %v241 = vunpack.c.l.b16 %v214
        %v242 = vunpack.c.h.b16 %v214
        %v243 = vunpack.c.l.b16 %v215
        %v244 = vunpack.c.h.b16 %v215
        %v245 = vunpack.c.l.b16 %v216
        %v246 = vunpack.c.h.b16 %v216
        %v247 = vpack.c.b16 %v235, %v231
        %v248 = vpack.c.b16 %v236, %v232
        %v249 = vpack.c.b16 %v237, %v233
        %v250 = vpack.c.b16 %v238, %v234
        %v251 = vpack.c.b16 %v243, %v239
        %v252 = vpack.c.b16 %v244, %v240
        %v253 = vpack.c.b16 %v245, %v241
        %v254 = vpack.c.b16 %v246, %v242
        %vm259 = vcmask 220160
        %v261 = vsel %vm259, %v208, 0
        %vm263 = vcmask 1044480
        %vm264 = vcmask 1045504
        %v265 = vsel %vm263, 4294967295, 65535
        %v266 = vsel %vm264, %v265, 0
        %v268 = vand.u32 %v251, %v266
        %v271 = vand.u32 %v252, %v266
        %v274 = vand.u32 %v253, %v266
        %v277 = vand.u32 %v254, %v266
        %279 = vmatprep.subr.bf16.mxu0 %v248
        %280 = vmatpush1.bf16.msra.mxu0 %v247
        %281 = vmatprep.subr.bf16.mxu0 %v271
        %282 = vmatpush1.bf16.msra.mxu0 %v268
        %283 = vmatprep.subr.bf16.mxu0 0
        %284 = vmatpush1.bf16.msra.mxu0 0
        %285 = vmatprep.subr.bf16.mxu0 0
        %286 = vmatpush1.bf16.msra.mxu0 0
        %287 = vmatprep.subr.bf16.mxu0 0
        %288 = vmatpush1.bf16.msra.mxu0 0
        %289 = vmatprep.subr.bf16.mxu0 0
        %290 = vmatpush1.bf16.msra.mxu0 0
        %291 = vmatprep.subr.bf16.mxu0 0
        %292 = vmatpush1.bf16.msra.mxu0 0
        %293 = vmatprep.subr.bf16.mxu0 0
        %294 = vmatpush1.bf16.msra.mxu0 0
        %295 = vmatprep.subr.bf16.mxu0 0
        %296 = vmatpush1.bf16.msra.mxu0 0
        %297 = vmatprep.subr.bf16.mxu0 0
        %298 = vmatpush1.bf16.msra.mxu0 0
        %299 = vmatprep.subr.bf16.mxu0 0
        %300 = vmatpush1.bf16.msra.mxu0 0
        %301 = vmatprep.subr.bf16.mxu0 0
        %302 = vmatpush1.bf16.msra.mxu0 0
        %303 = vmatprep.subr.bf16.mxu0 0
        %304 = vmatpush1.bf16.msra.mxu0 0
        %305 = vmatprep.subr.bf16.mxu0 0
        %306 = vmatpush1.bf16.msra.mxu0 0
        %307 = vmatprep.subr.bf16.mxu0 0
        %308 = vmatpush1.bf16.msra.mxu0 0
        %309 = vmatprep.subr.bf16.mxu0 0
        %310 = vmatpush1.bf16.msra.mxu0 0
        %311 = vmatprep.mubr.bf16.mxu0 0
        %312 = vmatmul.mubr.bf16.gmra.mrb[0].mxu0 %v261
        %v313 = vpop.f32.mrb[0].mxu0
        %v314 = vadd.f32 %v221, %v313
        %v315 = vpop.f32.mrb[0].mxu0
        %v316 = vadd.f32 %v221, %v315
        %v317 = vpop.f32.mrb[0].mxu0
        %v318 = vpop.f32.mrb[0].mxu0
        %319 = vdwg.mxu0
        %320 = vmatprep.subr.bf16.mxu0 %v250
        %321 = vmatpush1.bf16.msra.mxu0 %v249
        %322 = vmatprep.subr.bf16.mxu0 %v277
        %323 = vmatpush1.bf16.msra.mxu0 %v274
        %324 = vmatprep.subr.bf16.mxu0 0
        %325 = vmatpush1.bf16.msra.mxu0 0
        %326 = vmatprep.subr.bf16.mxu0 0
        %327 = vmatpush1.bf16.msra.mxu0 0
        %328 = vmatprep.subr.bf16.mxu0 0
        %329 = vmatpush1.bf16.msra.mxu0 0
        %330 = vmatprep.subr.bf16.mxu0 0
        %331 = vmatpush1.bf16.msra.mxu0 0
        %332 = vmatprep.subr.bf16.mxu0 0
        %333 = vmatpush1.bf16.msra.mxu0 0
        %334 = vmatprep.subr.bf16.mxu0 0
        %335 = vmatpush1.bf16.msra.mxu0 0
        %336 = vmatprep.subr.bf16.mxu0 0
        %337 = vmatpush1.bf16.msra.mxu0 0
        %338 = vmatprep.subr.bf16.mxu0 0
        %339 = vmatpush1.bf16.msra.mxu0 0
        %340 = vmatprep.subr.bf16.mxu0 0
        %341 = vmatpush1.bf16.msra.mxu0 0
        %342 = vmatprep.subr.bf16.mxu0 0
        %343 = vmatpush1.bf16.msra.mxu0 0
        %344 = vmatprep.subr.bf16.mxu0 0
        %345 = vmatpush1.bf16.msra.mxu0 0
        %346 = vmatprep.subr.bf16.mxu0 0
        %347 = vmatpush1.bf16.msra.mxu0 0
        %348 = vmatprep.subr.bf16.mxu0 0
        %349 = vmatpush1.bf16.msra.mxu0 0
        %350 = vmatprep.subr.bf16.mxu0 0
        %351 = vmatpush1.bf16.msra.mxu0 0
        %352 = vmatprep.mubr.bf16.mxu0 0
        %353 = vmatmul.mubr.bf16.gmra.mrb[0].mxu0 %v261
        %v354 = vpop.f32.mrb[0].mxu0
        %v355 = vadd.f32 %v221, %v354
        %v356 = vpop.f32.mrb[0].mxu0
        %v357 = vadd.f32 %v221, %v356
        %v358 = vpop.f32.mrb[0].mxu0
        %v359 = vpop.f32.mrb[0].mxu0
        %360 = vdwg.mxu0
        %v361 = vmax.f32 %v314, 0.0
        %v362 = vmax.f32 %v316, 0.0
        %v363 = vmax.f32 %v355, 0.0
        %v364 = vmax.f32 %v357, 0.0
        %v365 = vpack.c.bf16 %v361, %v361
        %v366 = vpack.c.bf16 %v362, %v362
        %v367 = vpack.c.bf16 %v363, %v363
        %v368 = vpack.c.bf16 %v364, %v364
        %v373 = vcombine.low %v365, %v366
        %v374 = vcombine.low %v367, %v368
        %v376 = vunpack.c.l.s4 1983009808
        %v377 = vunpack.c.0.s8 %v376
        %v378 = vlaneseq
        %v379 = vshrl.u32 %v378, 7
        %v380 = vsub.s32 %v377, %v379
        %v381 = vrot.slane %v373, %v380
        %v383 = vunpack.c.l.s4 1983009808
        %v384 = vunpack.c.0.s8 %v383
        %v385 = vlaneseq
        %v386 = vshrl.u32 %v385, 7
        %v387 = vsub.s32 %v384, %v386
        %v388 = vrot.slane %v374, %v387
        %v389 = vcombine.low %v381, %v388
        %391 = vst [vmem:[%s205] sm:$0xff] %v389
        %s392 = smul.u32 4, %s14
        %p393 = scmp.lt.s32.totalorder %s392, 7
        %s394 = scalar_select %p393, %s392, 7
        %s395 = smul.addr %s394, 2
        %s396 = scalar_lea.vmem %s3, %s395
        // Predicated region
        $region56: #{resnet_forward.15} parent=50 // pred_check
          %p397 = pneg %p100
        $region57: #{resnet_forward.15} parent=50 // pred_check_branch
          %399 = sbr.rel (%p397) target = $region59
        $region58: #{resnet_forward.15} parent=50 // pred_region
          %s400 = smul.u32 4, %s14
        $region59: #{resnet_forward.15} parent=50 // pred_fallthru
          _
      $region51: #{resnet_forward.15} parent=5 // pred_fallthru
        _
      %p401 = scmp.le.s32.totalorder 2, %s9
      // Predicated region
      $region60: #{resnet_forward.15} parent=5 // pred_check
        %p402 = pneg %p401
      $region61: #{resnet_forward.15} parent=5 // pred_check_branch
        %404 = sbr.rel (%p402) target = $region63
      $region62: #{resnet_forward.15} parent=5 // pred_region
        %s405 = ssub.s32 %s9, 2
        // Predicated region
        $region64: #{resnet_forward.15} parent=62 // pred_check
          %p406 = pneg %p106
        $region65: #{resnet_forward.15} parent=62 // pred_check_branch
          %408 = sbr.rel (%p406) target = $region67
        $region66: #{resnet_forward.15} parent=62 // pred_region
          %s409 = smul.u32 4, %s15
          %p410 = scmp.lt.s32.totalorder %s409, 7
          %s411 = scalar_select %p410, %s409, 7
          %s412 = smul.addr %s411, 2
          %s413 = scalar_lea.vmem %s3, %s412
        $region67: #{resnet_forward.15} parent=62 // pred_fallthru
          _
      $region63: #{resnet_forward.15} parent=5 // pred_fallthru
        _
    $region6: #{resnet_forward.15} parent=1 // loop_footer
      %s13 = sadd.s32 1, %s9
    $region7: #{resnet_forward.15} parent=1 // loop_footer_branch
      %8 = sbr.rel target = $region3
    $region8: #{resnet_forward.15} parent=1 // loop_exit
      _

// kernel: resnet_forward.16
$region0: #{resnet_forward.16}
  #allocation0 [shape = 'u32[]', space=smem, size = 0x4, offset = 0x4, fixed_abs, tag = 'smem constant byte address 0x4 - core index']
  #allocation1 [shape = 'u32[144,128]{1,0:T(1,128)}', space=vmem, size = 0x12000, scoped, tag = 'internal scratch']
  %s0 = inlined_call_operand.vmem [shape: bf16[36,1024], index: 0, kind: input, shape index: {}]
  %s1 = inlined_call_operand.vmem [shape: bf16[4,36], index: 1, kind: input, shape index: {}]
  %s2 = inlined_call_operand.vmem [shape: bf16[4,1024], index: 2, kind: output, shape index: {}]
  %s3 = sld [smem:[#allocation0]]
  $region64: #{resnet_forward.16} parent=0
    _
  %s5 = ssub.s32 1, %s3
  %s6 = scalar_select 0, %s5, %s3
  $region1: #{resnet_forward.16} parent=0
    #allocation2 [shape = 'u8[81920]{0}', space=vmem, size = 0x14000, scoped, tag = 'input window, operand 0']
    loop: start=0, step=1, limit=4
    $region2: #{resnet_forward.16} parent=1 // loop_pre_header
      _
    $region3: #{resnet_forward.16} parent=1 // loop_header
      %s8 = sphi 0, %s12
      %p9 = scmp.ge.s32.totalorder %s8, 4
      %s18 = sphi 0, %s20
      %s21 = sphi 0, %s18
      %s22 = sphi 0, %s21
      %s38 = sphi 0, %s22
      %s42 = sphi 0, %s42
      %s44 = sphi 0, %s42
      %s45 = sphi 0, %s44
      %s59 = sphi 0, %s45
      %s65 = sphi 0, %s67
      %s68 = sphi 0, %s65
      %s69 = sphi 0, %s68
      %s85 = sphi 0, %s69
    $region4: #{resnet_forward.16} parent=1 // loop_header_branch
      %11 = sbr.rel (%p9) target = $region8
    $region5: #{resnet_forward.16} parent=1 // loop_body
      %s13 = ssub.s32 %s8, 1
      %s14 = ssub.s32 %s8, 2
      %s15 = sadd.s32 %s8, 1
      %s16 = ssub.s32 %s8, %s15
      %p17 = scmp.eq.s32.totalorder %s16, 0
      %s19 = sadd.s32 %s18, 1
      %s20 = scalar_select %p17, %s18, %s19
      %p23 = pneg %p17
      %p24 = scmp.eq.s32.totalorder %s8, 1
      %p25 = por %p23, %p24
      %p26 = scmp.ne.s32.totalorder %s18, %s21
      %p27 = scmp.eq.s32.totalorder %s8, 0
      %p28 = por %p26, %p27
      %p29 = scmp.ne.s32.totalorder %s18, %s21
      %p30 = scmp.eq.s32.totalorder %s13, 1
      %p31 = por %p29, %p30
      %p32 = scmp.ne.s32.totalorder %s21, %s22
      %p33 = scmp.eq.s32.totalorder %s13, 0
      %p34 = por %p32, %p33
      %p35 = scmp.ne.s32.totalorder %s21, %s22
      %p36 = scmp.eq.s32.totalorder %s14, 1
      %p37 = por %p35, %p36
      %p39 = scmp.ne.s32.totalorder %s22, %s38
      %p40 = scmp.eq.s32.totalorder %s14, 0
      %p41 = por %p39, %p40
      %s43 = sadd.s32 %s42, 1
      %p46 = scmp.eq.s32.totalorder %s8, 1
      %p47 = scmp.ne.s32.totalorder %s42, %s44
      %p48 = scmp.eq.s32.totalorder %s8, 0
      %p49 = por %p47, %p48
      %p50 = scmp.ne.s32.totalorder %s42, %s44
      %p51 = scmp.eq.s32.totalorder %s13, 1
      %p52 = por %p50, %p51
      %p53 = scmp.ne.s32.totalorder %s44, %s45
      %p54 = scmp.eq.s32.totalorder %s13, 0
      %p55 = por %p53, %p54
      %p56 = scmp.ne.s32.totalorder %s44, %s45
      %p57 = scmp.eq.s32.totalorder %s14, 1
      %p58 = por %p56, %p57
      %p60 = scmp.ne.s32.totalorder %s45, %s59
      %p61 = scmp.eq.s32.totalorder %s14, 0
      %p62 = por %p60, %p61
      %s63 = ssub.s32 %s8, %s15
      %p64 = scmp.eq.s32.totalorder %s63, 0
      %s66 = sadd.s32 %s65, 1
      %s67 = scalar_select %p64, %s65, %s66
      %p70 = pneg %p64
      %p71 = scmp.eq.s32.totalorder %s8, 1
      %p72 = por %p70, %p71
      %p73 = scmp.ne.s32.totalorder %s65, %s68
      %p74 = scmp.eq.s32.totalorder %s8, 0
      %p75 = por %p73, %p74
      %p76 = scmp.ne.s32.totalorder %s65, %s68
      %p77 = scmp.eq.s32.totalorder %s13, 1
      %p78 = por %p76, %p77
      %p79 = scmp.ne.s32.totalorder %s68, %s69
      %p80 = scmp.eq.s32.totalorder %s13, 0
      %p81 = por %p79, %p80
      %p82 = scmp.ne.s32.totalorder %s68, %s69
      %p83 = scmp.eq.s32.totalorder %s14, 1
      %p84 = por %p82, %p83
      %p86 = scmp.ne.s32.totalorder %s69, %s85
      %p87 = scmp.eq.s32.totalorder %s14, 0
      %p88 = por %p86, %p87
      %p89 = scmp.le.s32.totalorder 1, %s8
      %p90 = scmp.lt.s32.totalorder %s8, 3
      %p91 = pnand %p89, %p90
      %p92 = pneg %p91
      // Predicated region
      $region9: #{resnet_forward.16} parent=5 // pred_check
        _
      $region10: #{resnet_forward.16} parent=5 // pred_check_branch
        %94 = sbr.rel (%p91) target = $region12
      $region11: #{resnet_forward.16} parent=5 // pred_region
        %s95 = ssub.s32 %s8, 1
        // Predicated region
        $region13: #{resnet_forward.16} parent=11 // pred_check
          %p96 = pneg %p55
        $region14: #{resnet_forward.16} parent=11 // pred_check_branch
          %98 = sbr.rel (%p96) target = $region16
        $region15: #{resnet_forward.16} parent=11 // pred_region
          _
        $region16: #{resnet_forward.16} parent=11 // pred_fallthru
          _
      $region12: #{resnet_forward.16} parent=5 // pred_fallthru
        _
      %p99 = scmp.lt.s32.totalorder %s8, 2
      // Predicated region
      $region17: #{resnet_forward.16} parent=5 // pred_check
        %p100 = pneg %p99
      $region18: #{resnet_forward.16} parent=5 // pred_check_branch
        %102 = sbr.rel (%p100) target = $region20
      $region19: #{resnet_forward.16} parent=5 // pred_region
        // Predicated region
        $region21: #{resnet_forward.16} parent=19 // pred_check
          %p103 = pneg %p28
        $region22: #{resnet_forward.16} parent=19 // pred_check_branch
          %105 = sbr.rel (%p103) target = $region24
        $region23: #{resnet_forward.16} parent=19 // pred_region
          %s106 = sand.u32 %s18, 1
          %s107 = sand.u32 %s18, 1
          %s108 = smul.addr %s107, 80
          %s109 = scalar_lea.vmem [#allocation2], %s108
          %s110 = smul.u32 4, %s8
          %s111 = smul.addr %s110, 4
          %s112 = scalar_lea.vmem %s0, %s111
          // Predicated region
          $region25: #{resnet_forward.16} parent=23 // pred_check
            _
          $region26: #{resnet_forward.16} parent=23 // pred_check_branch
            %114 = sbr.rel (0) target = $region28
          $region27: #{resnet_forward.16} parent=23 // pred_region
            // Predicated region
            $region29: #{resnet_forward.16} parent=27 // pred_check
              _
            $region30: #{resnet_forward.16} parent=27 // pred_check_branch
              %116 = sbr.rel (0) target = $region32
            $region31: #{resnet_forward.16} parent=27 // pred_region
              loop: start=0, step=1, limit=1
              $region33: #{resnet_forward.16} parent=31 // loop_pre_header
                _
              $region34: #{resnet_forward.16} parent=31 // loop_header
                %s118 = sphi 0, %s122
                %p119 = scmp.ge.s32.totalorder %s118, 1
                %s123 = sphi %s112, %s112
                %s124 = sphi %s109, %s109
              $region35: #{resnet_forward.16} parent=31 // loop_header_branch
                %121 = sbr.rel (%p119) target = $region39
              $region36: #{resnet_forward.16} parent=31 // loop_body
                %v125 = vld [vmem:[%s123] sm:$0xff]
                %126 = vst [vmem:[%s124] sm:$0xff] %v125
                %v127 = vld [vmem:[%s123 + $0x8] sm:$0xff]
                %128 = vst [vmem:[%s124 + $0x8] sm:$0xff] %v127
                %v129 = vld [vmem:[%s123 + $0x20] sm:$0xff]
                %130 = vst [vmem:[%s124 + $0x10] sm:$0xff] %v129
                %v131 = vld [vmem:[%s123 + $0x28] sm:$0xff]
                %132 = vst [vmem:[%s124 + $0x18] sm:$0xff] %v131
                %v133 = vld [vmem:[%s123 + $0x40] sm:$0xff]
                %134 = vst [vmem:[%s124 + $0x20] sm:$0xff] %v133
                %v135 = vld [vmem:[%s123 + $0x48] sm:$0xff]
                %136 = vst [vmem:[%s124 + $0x28] sm:$0xff] %v135
                %v137 = vld [vmem:[%s123 + $0x60] sm:$0xff]
                %138 = vst [vmem:[%s124 + $0x30] sm:$0xff] %v137
                %v139 = vld [vmem:[%s123 + $0x68] sm:$0xff]
                %140 = vst [vmem:[%s124 + $0x38] sm:$0xff] %v139
                %v141 = vld [vmem:[%s123 + $0x80] sm:$0xff]
                %142 = vst [vmem:[%s124 + $0x40] sm:$0xff] %v141
                %v143 = vld [vmem:[%s123 + $0x88] sm:$0xff]
                %144 = vst [vmem:[%s124 + $0x48] sm:$0xff] %v143
              $region37: #{resnet_forward.16} parent=31 // loop_footer
                %s122 = sadd.s32 1, %s118
              $region38: #{resnet_forward.16} parent=31 // loop_footer_branch
                %117 = sbr.rel target = $region34
              $region39: #{resnet_forward.16} parent=31 // loop_exit
                _
            $region32: #{resnet_forward.16} parent=27 // pred_fallthru
              _
            // Predicated region
            $region40: #{resnet_forward.16} parent=27 // pred_check
              _
            $region41: #{resnet_forward.16} parent=27 // pred_check_branch
              %146 = sbr.rel target = $region43
            $region42: #{resnet_forward.16} parent=27 // pred_region
              _
            $region43: #{resnet_forward.16} parent=27 // pred_fallthru
              _
          $region28: #{resnet_forward.16} parent=23 // pred_fallthru
            _
          %147 = vnop
        $region24: #{resnet_forward.16} parent=19 // pred_fallthru
          _
      $region20: #{resnet_forward.16} parent=5 // pred_fallthru
        _
      %p148 = scmp.le.s32.totalorder 1, %s8
      %p149 = scmp.lt.s32.totalorder %s8, 3
      %p150 = pnand %p148, %p149
      %p151 = pneg %p150
      // Predicated region
      $region44: #{resnet_forward.16} parent=5 // pred_check
        _
      $region45: #{resnet_forward.16} parent=5 // pred_check_branch
        %153 = sbr.rel (%p150) target = $region47
      $region46: #{resnet_forward.16} parent=5 // pred_region
        %s154 = ssub.s32 %s8, 1
        %s155 = sand.u32 %s21, 1
        %s156 = sand.u32 %s21, 1
        %s157 = smul.addr %s156, 80
        %s158 = scalar_lea.vmem [#allocation2], %s157
        // Predicated region
        $region48: #{resnet_forward.16} parent=46 // pred_check
          %p159 = pneg %p34
        $region49: #{resnet_forward.16} parent=46 // pred_check_branch
          %161 = sbr.rel (%p159) target = $region51
        $region50: #{resnet_forward.16} parent=46 // pred_region
          _
        $region51: #{resnet_forward.16} parent=46 // pred_fallthru
          _
        %s162 = sand.u32 %s21, 1
        %s163 = sand.u32 %s21, 1
        %s164 = smul.addr %s163, 80
        %s165 = scalar_lea.vmem [#allocation2], %s164
        %p166 = pneg %p34
        %p167 = pneg %p31
        %p168 = pneg %p55
        %p169 = pneg %p52
        %p170 = pneg %p81
        %p171 = pneg %p78
        %s172 = smul.u32 4, %s13
        %p173 = scmp.lt.s32.totalorder %s172, 7
        %s174 = scalar_select %p173, %s172, 7
        %s175 = smul.addr %s174, 2
        %s176 = scalar_lea.vmem %s2, %s175
        %s177 = smul.u32 4, %s13
        %s178 = smul.u32 4, %s13
        %p179 = scmp.lt.s32.totalorder %s178, 7
        %s180 = scalar_select %p179, %s178, 7
        %s181 = smul.addr %s180, 2
        %s182 = scalar_lea.vmem %s2, %s181
        %s183 = smul.u32 4, %s13
        %v185 = vld [vmem:[%s1] sm:$0x3]
        %v186 = vld [vmem:[%s158] sm:$0xff]
        %v187 = vld [vmem:[%s158 + $0x8] sm:$0xff]
        %v188 = vld [vmem:[%s158 + $0x10] sm:$0xff]
        %v189 = vld [vmem:[%s158 + $0x18] sm:$0xff]
        %v190 = vld [vmem:[%s158 + $0x20] sm:$0xff]
        %v191 = vld [vmem:[%s158 + $0x28] sm:$0xff]
        %v192 = vld [vmem:[%s158 + $0x30] sm:$0xff]
        %v193 = vld [vmem:[%s158 + $0x38] sm:$0xff]
        %v194 = vld [vmem:[%s158 + $0x40] sm:$0x33]
        %v195 = vld [vmem:[%s158 + $0x48] sm:$0x33]
        %v206 = vunpack.c.l.b16 %v186
        %v207 = vunpack.c.h.b16 %v186
        %v208 = vunpack.c.l.b16 %v187
        %v209 = vunpack.c.h.b16 %v187
        %v210 = vunpack.c.l.b16 %v188
        %v211 = vunpack.c.h.b16 %v188
        %v212 = vunpack.c.l.b16 %v189
        %v213 = vunpack.c.h.b16 %v189
        %v214 = vunpack.c.l.b16 %v190
        %v215 = vunpack.c.h.b16 %v190
        %v216 = vunpack.c.l.b16 %v191
        %v217 = vunpack.c.h.b16 %v191
        %v218 = vunpack.c.l.b16 %v192
        %v219 = vunpack.c.h.b16 %v192
        %v220 = vunpack.c.l.b16 %v193
        %v221 = vunpack.c.h.b16 %v193
        %v222 = vunpack.c.l.b16 %v194
        %v223 = vunpack.c.h.b16 %v194
        %v224 = vunpack.c.l.b16 %v195
        %v225 = vunpack.c.h.b16 %v195
        %v226 = vpack.c.b16 %v210, %v206
        %v227 = vpack.c.b16 %v211, %v207
        %v228 = vpack.c.b16 %v212, %v208
        %v229 = vpack.c.b16 %v213, %v209
        %v230 = vpack.c.b16 %v218, %v214
        %v231 = vpack.c.b16 %v219, %v215
        %v232 = vpack.c.b16 %v220, %v216
        %v233 = vpack.c.b16 %v221, %v217
        %v234 = vpack.c.b16 %v222, %v222
        %v235 = vpack.c.b16 %v223, %v223
        %v236 = vpack.c.b16 %v224, %v224
        %v237 = vpack.c.b16 %v225, %v225
        %vm246 = vcmask 293888
        %v248 = vsel %vm246, %v185, 0
        %vm250 = vcmask 1041408
        %v252 = vsel %vm250, %v234, 0
        %v255 = vsel %vm250, %v235, 0
        %v258 = vsel %vm250, %v236, 0
        %v261 = vsel %vm250, %v237, 0
        %263 = vmatprep.subr.bf16.mxu0 %v227
        %264 = vmatpush1.bf16.msra.mxu0 %v226
        %265 = vmatprep.subr.bf16.mxu0 %v231
        %266 = vmatpush1.bf16.msra.mxu0 %v230
        %267 = vmatprep.subr.bf16.mxu0 %v255
        %268 = vmatpush1.bf16.msra.mxu0 %v252
        %269 = vmatprep.subr.bf16.mxu0 0
        %270 = vmatpush1.bf16.msra.mxu0 0
        %271 = vmatprep.subr.bf16.mxu0 0
        %272 = vmatpush1.bf16.msra.mxu0 0
        %273 = vmatprep.subr.bf16.mxu0 0
        %274 = vmatpush1.bf16.msra.mxu0 0
        %275 = vmatprep.subr.bf16.mxu0 0
        %276 = vmatpush1.bf16.msra.mxu0 0
        %277 = vmatprep.subr.bf16.mxu0 0
        %278 = vmatpush1.bf16.msra.mxu0 0
        %279 = vmatprep.subr.bf16.mxu0 0
        %280 = vmatpush1.bf16.msra.mxu0 0
        %281 = vmatprep.subr.bf16.mxu0 0
        %282 = vmatpush1.bf16.msra.mxu0 0
        %283 = vmatprep.subr.bf16.mxu0 0
        %284 = vmatpush1.bf16.msra.mxu0 0
        %285 = vmatprep.subr.bf16.mxu0 0
        %286 = vmatpush1.bf16.msra.mxu0 0
        %287 = vmatprep.subr.bf16.mxu0 0
        %288 = vmatpush1.bf16.msra.mxu0 0
        %289 = vmatprep.subr.bf16.mxu0 0
        %290 = vmatpush1.bf16.msra.mxu0 0
        %291 = vmatprep.subr.bf16.mxu0 0
        %292 = vmatpush1.bf16.msra.mxu0 0
        %293 = vmatprep.subr.bf16.mxu0 0
        %294 = vmatpush1.bf16.msra.mxu0 0
        %295 = vmatprep.mubr.bf16.mxu0 0
        %296 = vmatmul.mubr.bf16.gmra.mrb[0].mxu0 %v248
        %v297 = vpop.f32.mrb[0].mxu0
        %v298 = vadd.f32 0.0, %v297
        %v299 = vpop.f32.mrb[0].mxu0
        %v300 = vadd.f32 0.0, %v299
        %v301 = vpop.f32.mrb[0].mxu0
        %v302 = vpop.f32.mrb[0].mxu0
        %303 = vdwg.mxu0
        %304 = vmatprep.subr.bf16.mxu0 %v229
        %305 = vmatpush1.bf16.msra.mxu0 %v228
        %306 = vmatprep.subr.bf16.mxu0 %v233
        %307 = vmatpush1.bf16.msra.mxu0 %v232
        %308 = vmatprep.subr.bf16.mxu0 %v261
        %309 = vmatpush1.bf16.msra.mxu0 %v258
        %310 = vmatprep.subr.bf16.mxu0 0
        %311 = vmatpush1.bf16.msra.mxu0 0
        %312 = vmatprep.subr.bf16.mxu0 0
        %313 = vmatpush1.bf16.msra.mxu0 0
        %314 = vmatprep.subr.bf16.mxu0 0
        %315 = vmatpush1.bf16.msra.mxu0 0
        %316 = vmatprep.subr.bf16.mxu0 0
        %317 = vmatpush1.bf16.msra.mxu0 0
        %318 = vmatprep.subr.bf16.mxu0 0
        %319 = vmatpush1.bf16.msra.mxu0 0
        %320 = vmatprep.subr.bf16.mxu0 0
        %321 = vmatpush1.bf16.msra.mxu0 0
        %322 = vmatprep.subr.bf16.mxu0 0
        %323 = vmatpush1.bf16.msra.mxu0 0
        %324 = vmatprep.subr.bf16.mxu0 0
        %325 = vmatpush1.bf16.msra.mxu0 0
        %326 = vmatprep.subr.bf16.mxu0 0
        %327 = vmatpush1.bf16.msra.mxu0 0
        %328 = vmatprep.subr.bf16.mxu0 0
        %329 = vmatpush1.bf16.msra.mxu0 0
        %330 = vmatprep.subr.bf16.mxu0 0
        %331 = vmatpush1.bf16.msra.mxu0 0
        %332 = vmatprep.subr.bf16.mxu0 0
        %333 = vmatpush1.bf16.msra.mxu0 0
        %334 = vmatprep.subr.bf16.mxu0 0
        %335 = vmatpush1.bf16.msra.mxu0 0
        %336 = vmatprep.mubr.bf16.mxu0 0
        %337 = vmatmul.mubr.bf16.gmra.mrb[0].mxu0 %v248
        %v338 = vpop.f32.mrb[0].mxu0
        %v339 = vadd.f32 0.0, %v338
        %v340 = vpop.f32.mrb[0].mxu0
        %v341 = vadd.f32 0.0, %v340
        %v342 = vpop.f32.mrb[0].mxu0
        %v343 = vpop.f32.mrb[0].mxu0
        %344 = vdwg.mxu0
        %v345 = vpack.c.bf16 %v298, %v298
        %v346 = vpack.c.bf16 %v300, %v300
        %v347 = vpack.c.bf16 %v339, %v339
        %v348 = vpack.c.bf16 %v341, %v341
        %v353 = vcombine.low %v345, %v346
        %v354 = vcombine.low %v347, %v348
        %v356 = vunpack.c.l.s4 1983009808
        %v357 = vunpack.c.0.s8 %v356
        %v358 = vlaneseq
        %v359 = vshrl.u32 %v358, 7
        %v360 = vsub.s32 %v357, %v359
        %v361 = vrot.slane %v353, %v360
        %v363 = vunpack.c.l.s4 1983009808
        %v364 = vunpack.c.0.s8 %v363
        %v365 = vlaneseq
        %v366 = vshrl.u32 %v365, 7
        %v367 = vsub.s32 %v364, %v366
        %v368 = vrot.slane %v354, %v367
        %v369 = vcombine.low %v361, %v368
        %371 = vst [vmem:[%s182] sm:$0xff] %v369
        %s372 = smul.u32 4, %s13
        %p373 = scmp.lt.s32.totalorder %s372, 7
        %s374 = scalar_select %p373, %s372, 7
        %s375 = smul.addr %s374, 2
        %s376 = scalar_lea.vmem %s2, %s375
        // Predicated region
        $region52: #{resnet_forward.16} parent=46 // pred_check
          %p377 = pneg %p78
        $region53: #{resnet_forward.16} parent=46 // pred_check_branch
          %379 = sbr.rel (%p377) target = $region55
        $region54: #{resnet_forward.16} parent=46 // pred_region
          %s380 = smul.u32 4, %s13
        $region55: #{resnet_forward.16} parent=46 // pred_fallthru
          _
      $region47: #{resnet_forward.16} parent=5 // pred_fallthru
        _
      %p381 = scmp.le.s32.totalorder 2, %s8
      // Predicated region
      $region56: #{resnet_forward.16} parent=5 // pred_check
        %p382 = pneg %p381
      $region57: #{resnet_forward.16} parent=5 // pred_check_branch
        %384 = sbr.rel (%p382) target = $region59
      $region58: #{resnet_forward.16} parent=5 // pred_region
        %s385 = ssub.s32 %s8, 2
        // Predicated region
        $region60: #{resnet_forward.16} parent=58 // pred_check
          %p386 = pneg %p84
        $region61: #{resnet_forward.16} parent=58 // pred_check_branch
          %388 = sbr.rel (%p386) target = $region63
        $region62: #{resnet_forward.16} parent=58 // pred_region
          %s389 = smul.u32 4, %s14
          %p390 = scmp.lt.s32.totalorder %s389, 7
          %s391 = scalar_select %p390, %s389, 7
          %s392 = smul.addr %s391, 2
          %s393 = scalar_lea.vmem %s2, %s392
        $region63: #{resnet_forward.16} parent=58 // pred_fallthru
          _
      $region59: #{resnet_forward.16} parent=5 // pred_fallthru
        _
    $region6: #{resnet_forward.16} parent=1 // loop_footer
      %s12 = sadd.s32 1, %s8
    $region7: #{resnet_forward.16} parent=1 // loop_footer_branch
      %7 = sbr.rel target = $region3
    $region8: #{resnet_forward.16} parent=1 // loop_exit
      _

// kernel: resnet_forward.17
$region0: #{resnet_forward.17}
  #allocation0 [shape = 'u32[]', space=smem, size = 0x4, offset = 0x4, fixed_abs, tag = 'smem constant byte address 0x4 - core index']
  #allocation1 [shape = 'u32[144,128]{1,0:T(1,128)}', space=vmem, size = 0x12000, scoped, tag = 'internal scratch']
  %s0 = inlined_call_operand.vmem [shape: bf16[36,256], index: 0, kind: input, shape index: {}]
  %s1 = inlined_call_operand.vmem [shape: bf16[8,36], index: 1, kind: input, shape index: {}]
  %s2 = inlined_call_operand.vmem [shape: f32[8,1], index: 2, kind: input, shape index: {}]
  %s3 = inlined_call_operand.vmem [shape: bf16[4,256], index: 3, kind: input, shape index: {}]
  %s4 = inlined_call_operand.vmem [shape: bf16[8,4], index: 4, kind: input, shape index: {}]
  %s5 = inlined_call_operand.vmem [shape: f32[8,1], index: 5, kind: input, shape index: {}]
  %s6 = inlined_call_operand.vmem [shape: bf16[8,256], index: 6, kind: output, shape index: {0}]
  %s7 = inlined_call_operand.vmem [shape: bf16[8,256], index: 7, kind: output, shape index: {1}]
  %8 = xla_tuple %s6, %s7
  %s9 = sld [smem:[#allocation0]]
  $region42: #{resnet_forward.17} parent=0
    _
  %s11 = ssub.s32 1, %s9
  %s12 = scalar_select 0, %s11, %s9
  // Predicated region
  $region2: #{resnet_forward.17} parent=0 // pred_check
    _
  $region3: #{resnet_forward.17} parent=0 // pred_check_branch
    %14 = sbr.rel (0) target = $region5
  $region4: #{resnet_forward.17} parent=0 // pred_region
    _
  $region5: #{resnet_forward.17} parent=0 // pred_fallthru
    _
  // Predicated region
  $region6: #{resnet_forward.17} parent=0 // pred_check
    _
  $region7: #{resnet_forward.17} parent=0 // pred_check_branch
    %16 = sbr.rel (0) target = $region9
  $region8: #{resnet_forward.17} parent=0 // pred_region
    _
  $region9: #{resnet_forward.17} parent=0 // pred_fallthru
    _
  // Predicated region
  $region10: #{resnet_forward.17} parent=0 // pred_check
    _
  $region11: #{resnet_forward.17} parent=0 // pred_check_branch
    %18 = sbr.rel (0) target = $region13
  $region12: #{resnet_forward.17} parent=0 // pred_region
    _
  $region13: #{resnet_forward.17} parent=0 // pred_fallthru
    _
  // Predicated region
  $region14: #{resnet_forward.17} parent=0 // pred_check
    _
  $region15: #{resnet_forward.17} parent=0 // pred_check_branch
    %20 = sbr.rel (0) target = $region17
  $region16: #{resnet_forward.17} parent=0 // pred_region
    _
  $region17: #{resnet_forward.17} parent=0 // pred_fallthru
    _
  // Predicated region
  $region18: #{resnet_forward.17} parent=0 // pred_check
    _
  $region19: #{resnet_forward.17} parent=0 // pred_check_branch
    %22 = sbr.rel (0) target = $region21
  $region20: #{resnet_forward.17} parent=0 // pred_region
    _
  $region21: #{resnet_forward.17} parent=0 // pred_fallthru
    _
  // Predicated region
  $region22: #{resnet_forward.17} parent=0 // pred_check
    _
  $region23: #{resnet_forward.17} parent=0 // pred_check_branch
    %24 = sbr.rel (0) target = $region25
  $region24: #{resnet_forward.17} parent=0 // pred_region
    _
  $region25: #{resnet_forward.17} parent=0 // pred_fallthru
    _
  %v26 = vld [vmem:[%s1] sm:$0xf]
  %v27 = vld [vmem:[%s0] sm:$0xff]
  %v28 = vld [vmem:[%s0 + $0x8] sm:$0xff]
  %v29 = vld [vmem:[%s0 + $0x10] sm:$0xff]
  %v30 = vld [vmem:[%s0 + $0x18] sm:$0xff]
  %v31 = vld [vmem:[%s0 + $0x20] sm:$0x33]
  %v32 = vld [vmem:[%s2] sm:$0xff]
  %34 = vset.pattern.permute.xlu0 0
  %35 = vperm.xlu0 %34, %v32
  %v36 = vpop.permute.xlu0 %35
  %v43 = vunpack.c.l.b16 %v27
  %v44 = vunpack.c.h.b16 %v27
  %v45 = vunpack.c.l.b16 %v28
  %v46 = vunpack.c.h.b16 %v28
  %v47 = vunpack.c.l.b16 %v29
  %v48 = vunpack.c.h.b16 %v29
  %v49 = vunpack.c.l.b16 %v30
  %v50 = vunpack.c.h.b16 %v30
  %v51 = vunpack.c.l.b16 %v31
  %v52 = vunpack.c.h.b16 %v31
  %v53 = vpack.c.b16 %v45, %v43
  %v54 = vpack.c.b16 %v46, %v44
  %v55 = vpack.c.b16 %v49, %v47
  %v56 = vpack.c.b16 %v50, %v48
  %v57 = vpack.c.b16 %v51, %v51
  %v58 = vpack.c.b16 %v52, %v52
  %vm63 = vcmask 293888
  %v65 = vsel %vm63, %v26, 0
  %vm67 = vcmask 1041408
  %v69 = vsel %vm67, %v57, 0
  %v72 = vsel %vm67, %v58, 0
  %74 = vmatprep.subr.bf16.mxu0 %v54
  %75 = vmatpush1.bf16.msra.mxu0 %v53
  %76 = vmatprep.subr.bf16.mxu0 %v56
  %77 = vmatpush1.bf16.msra.mxu0 %v55
  %78 = vmatprep.subr.bf16.mxu0 %v72
  %79 = vmatpush1.bf16.msra.mxu0 %v69
  %80 = vmatprep.subr.bf16.mxu0 0
  %81 = vmatpush1.bf16.msra.mxu0 0
  %82 = vmatprep.subr.bf16.mxu0 0
  %83 = vmatpush1.bf16.msra.mxu0 0
  %84 = vmatprep.subr.bf16.mxu0 0
  %85 = vmatpush1.bf16.msra.mxu0 0
  %86 = vmatprep.subr.bf16.mxu0 0
  %87 = vmatpush1.bf16.msra.mxu0 0
  %88 = vmatprep.subr.bf16.mxu0 0
  %89 = vmatpush1.bf16.msra.mxu0 0
  %90 = vmatprep.subr.bf16.mxu0 0
  %91 = vmatpush1.bf16.msra.mxu0 0
  %92 = vmatprep.subr.bf16.mxu0 0
  %93 = vmatpush1.bf16.msra.mxu0 0
  %94 = vmatprep.subr.bf16.mxu0 0
  %95 = vmatpush1.bf16.msra.mxu0 0
  %96 = vmatprep.subr.bf16.mxu0 0
  %97 = vmatpush1.bf16.msra.mxu0 0
  %98 = vmatprep.subr.bf16.mxu0 0
  %99 = vmatpush1.bf16.msra.mxu0 0
  %100 = vmatprep.subr.bf16.mxu0 0
  %101 = vmatpush1.bf16.msra.mxu0 0
  %102 = vmatprep.subr.bf16.mxu0 0
  %103 = vmatpush1.bf16.msra.mxu0 0
  %104 = vmatprep.subr.bf16.mxu0 0
  %105 = vmatpush1.bf16.msra.mxu0 0
  %106 = vmatprep.mubr.bf16.mxu0 0
  %107 = vmatmul.mubr.bf16.gmra.mrb[0].mxu0 %v65
  %v108 = vpop.f32.mrb[0].mxu0
  %v109 = vadd.f32 %v36, %v108
  %v110 = vpop.f32.mrb[0].mxu0
  %v111 = vadd.f32 %v36, %v110
  %v112 = vpop.f32.mrb[0].mxu0
  %v113 = vpop.f32.mrb[0].mxu0
  %114 = vdwg.mxu0
  %v115 = vmax.f32 %v109, 0.0
  %v116 = vmax.f32 %v111, 0.0
  %v117 = vpack.c.bf16 %v115, %v115
  %v118 = vpack.c.bf16 %v116, %v116
  %v121 = vunpack.c.l.b16 %v117
  %v122 = vunpack.c.l.b16 %v118
  %v123 = vpack.c.b16 %v122, %v121
  %125 = vst [vmem:[%s6] sm:$0xff] %v123
  %v126 = vld [vmem:[%s4] sm:$0xf]
  %v127 = vld [vmem:[%s3] sm:$0xf]
  %v128 = vld [vmem:[%s5] sm:$0xff]
  %130 = vset.pattern.permute.xlu0 0
  %131 = vperm.xlu0 %130, %v128
  %v132 = vpop.permute.xlu0 %131
  %v136 = vunpack.c.l.s4 1983009808
  %v137 = vunpack.c.0.s8 %v136
  %v138 = vlaneseq
  %v139 = vshrl.u32 %v138, 7
  %v140 = vsub.s32 %v137, %v139
  %v141 = vrot.slane %v127, %v140
  %v142 = vcombine.high %v141, %v141
  %vm143 = vcmask 31744
  %v145 = vsel %vm143, %v126, 0
  %v148 = vsel %vm67, %v141, 0
  %v151 = vsel %vm67, %v142, 0
  %153 = vmatprep.subr.bf16.mxu0 %v151
  %154 = vmatpush1.bf16.msra.mxu0 %v148
  %155 = vmatprep.subr.bf16.mxu0 0
  %156 = vmatpush1.bf16.msra.mxu0 0
  %157 = vmatprep.subr.bf16.mxu0 0
  %158 = vmatpush1.bf16.msra.mxu0 0
  %159 = vmatprep.subr.bf16.mxu0 0
  %160 = vmatpush1.bf16.msra.mxu0 0
  %161 = vmatprep.subr.bf16.mxu0 0
  %162 = vmatpush1.bf16.msra.mxu0 0
  %163 = vmatprep.subr.bf16.mxu0 0
  %164 = vmatpush1.bf16.msra.mxu0 0
  %165 = vmatprep.subr.bf16.mxu0 0
  %166 = vmatpush1.bf16.msra.mxu0 0
  %167 = vmatprep.subr.bf16.mxu0 0
  %168 = vmatpush1.bf16.msra.mxu0 0
  %169 = vmatprep.subr.bf16.mxu0 0
  %170 = vmatpush1.bf16.msra.mxu0 0
  %171 = vmatprep.subr.bf16.mxu0 0
  %172 = vmatpush1.bf16.msra.mxu0 0
  %173 = vmatprep.subr.bf16.mxu0 0
  %174 = vmatpush1.bf16.msra.mxu0 0
  %175 = vmatprep.subr.bf16.mxu0 0
  %176 = vmatpush1.bf16.msra.mxu0 0
  %177 = vmatprep.subr.bf16.mxu0 0
  %178 = vmatpush1.bf16.msra.mxu0 0
  %179 = vmatprep.subr.bf16.mxu0 0
  %180 = vmatpush1.bf16.msra.mxu0 0
  %181 = vmatprep.subr.bf16.mxu0 0
  %182 = vmatpush1.bf16.msra.mxu0 0
  %183 = vmatprep.subr.bf16.mxu0 0
  %184 = vmatpush1.bf16.msra.mxu0 0
  %185 = vmatprep.mubr.bf16.mxu0 0
  %186 = vmatmul.mubr.bf16.gmra.mrb[0].mxu0 %v145
  %v187 = vpop.f32.mrb[0].mxu0
  %v188 = vadd.f32 %v132, %v187
  %v189 = vpop.f32.mrb[0].mxu0
  %v190 = vadd.f32 %v132, %v189
  %v191 = vpop.f32.mrb[0].mxu0
  %v192 = vpop.f32.mrb[0].mxu0
  %193 = vdwg.mxu0
  %v194 = vpack.c.bf16 %v188, %v188
  %v195 = vpack.c.bf16 %v190, %v190
  %v198 = vunpack.c.l.b16 %v194
  %v199 = vunpack.c.l.b16 %v195
  %v200 = vpack.c.b16 %v199, %v198
  %202 = vst [vmem:[%s7] sm:$0xff] %v200
  // Predicated region
  $region26: #{resnet_forward.17} parent=0 // pred_check
    _
  $region27: #{resnet_forward.17} parent=0 // pred_check_branch
    %204 = sbr.rel (0) target = $region29
  $region28: #{resnet_forward.17} parent=0 // pred_region
    _
  $region29: #{resnet_forward.17} parent=0 // pred_fallthru
    _
  // Predicated region
  $region30: #{resnet_forward.17} parent=0 // pred_check
    _
  $region31: #{resnet_forward.17} parent=0 // pred_check_branch
    %206 = sbr.rel (0) target = $region33
  $region32: #{resnet_forward.17} parent=0 // pred_region
    _
  $region33: #{resnet_forward.17} parent=0 // pred_fallthru
    _
  // Predicated region
  $region34: #{resnet_forward.17} parent=0 // pred_check
    _
  $region35: #{resnet_forward.17} parent=0 // pred_check_branch
    %208 = sbr.rel (0) target = $region37
  $region36: #{resnet_forward.17} parent=0 // pred_region
    _
  $region37: #{resnet_forward.17} parent=0 // pred_fallthru
    _
  // Predicated region
  $region38: #{resnet_forward.17} parent=0 // pred_check
    _
  $region39: #{resnet_forward.17} parent=0 // pred_check_branch
    %210 = sbr.rel (0) target = $region41
  $region40: #{resnet_forward.17} parent=0 // pred_region
    _
  $region41: #{resnet_forward.17} parent=0 // pred_fallthru
    _

// kernel: resnet_forward.18
$region0: #{resnet_forward.18}
  #allocation0 [shape = 'u32[]', space=smem, size = 0x4, offset = 0x4, fixed_abs, tag = 'smem constant byte address 0x4 - core index']
  #allocation1 [shape = 'u32[144,128]{1,0:T(1,128)}', space=vmem, size = 0x12000, scoped, tag = 'internal scratch']
  %s0 = inlined_call_operand.vmem [shape: bf16[72,256], index: 0, kind: input, shape index: {}]
  %s1 = inlined_call_operand.vmem [shape: bf16[8,72], index: 1, kind: input, shape index: {}]
  %s2 = inlined_call_operand.vmem [shape: bf16[8,256], index: 2, kind: input, shape index: {}, may-alias: {2,3}]
  %s3 = inlined_call_operand.vmem [shape: bf16[8,256], index: 3, kind: output, shape index: {}, may-alias: {2,3}]
  %s4 = sld [smem:[#allocation0]]
  $region22: #{resnet_forward.18} parent=0
    _
  %s6 = ssub.s32 1, %s4
  %s7 = scalar_select 0, %s6, %s4
  // Predicated region
  $region2: #{resnet_forward.18} parent=0 // pred_check
    _
  $region3: #{resnet_forward.18} parent=0 // pred_check_branch
    %9 = sbr.rel (0) target = $region5
  $region4: #{resnet_forward.18} parent=0 // pred_region
    _
  $region5: #{resnet_forward.18} parent=0 // pred_fallthru
    _
  // Predicated region
  $region6: #{resnet_forward.18} parent=0 // pred_check
    _
  $region7: #{resnet_forward.18} parent=0 // pred_check_branch
    %11 = sbr.rel (0) target = $region9
  $region8: #{resnet_forward.18} parent=0 // pred_region
    _
  $region9: #{resnet_forward.18} parent=0 // pred_fallthru
    _
  // Predicated region
  $region10: #{resnet_forward.18} parent=0 // pred_check
    _
  $region11: #{resnet_forward.18} parent=0 // pred_check_branch
    %13 = sbr.rel (0) target = $region13
  $region12: #{resnet_forward.18} parent=0 // pred_region
    _
  $region13: #{resnet_forward.18} parent=0 // pred_fallthru
    _
  %v15 = vld [vmem:[%s1] sm:$0xf]
  %v16 = vld [vmem:[%s0] sm:$0xff]
  %v17 = vld [vmem:[%s0 + $0x8] sm:$0xff]
  %v18 = vld [vmem:[%s0 + $0x10] sm:$0xff]
  %v19 = vld [vmem:[%s0 + $0x18] sm:$0xff]
  %v20 = vld [vmem:[%s0 + $0x20] sm:$0xff]
  %v21 = vld [vmem:[%s0 + $0x28] sm:$0xff]
  %v22 = vld [vmem:[%s0 + $0x30] sm:$0xff]
  %v23 = vld [vmem:[%s0 + $0x38] sm:$0xff]
  %v24 = vld [vmem:[%s0 + $0x40] sm:$0xff]
  %v25 = vld [vmem:[%s2] sm:$0xff]
  %v26 = vunpack.c.l.bf16 %v25
  %v27 = vunpack.c.h.bf16 %v25
  %v37 = vunpack.c.l.b16 %v16
  %v38 = vunpack.c.h.b16 %v16
  %v39 = vunpack.c.l.b16 %v17
  %v40 = vunpack.c.h.b16 %v17
  %v41 = vunpack.c.l.b16 %v18
  %v42 = vunpack.c.h.b16 %v18
  %v43 = vunpack.c.l.b16 %v19
  %v44 = vunpack.c.h.b16 %v19
  %v45 = vunpack.c.l.b16 %v20
  %v46 = vunpack.c.h.b16 %v20
  %v47 = vunpack.c.l.b16 %v21
  %v48 = vunpack.c.h.b16 %v21
  %v49 = vunpack.c.l.b16 %v22
  %v50 = vunpack.c.h.b16 %v22
  %v51 = vunpack.c.l.b16 %v23
  %v52 = vunpack.c.h.b16 %v23
  %v53 = vunpack.c.l.b16 %v24
  %v54 = vunpack.c.h.b16 %v24
  %v55 = vpack.c.b16 %v39, %v37
  %v56 = vpack.c.b16 %v40, %v38
  %v57 = vpack.c.b16 %v43, %v41
  %v58 = vpack.c.b16 %v44, %v42
  %v59 = vpack.c.b16 %v47, %v45
  %v60 = vpack.c.b16 %v48, %v46
  %v61 = vpack.c.b16 %v51, %v49
  %v62 = vpack.c.b16 %v52, %v50
  %v63 = vpack.c.b16 %v53, %v53
  %v64 = vpack.c.b16 %v54, %v54
  %vm73 = vcmask 588800
  %v75 = vsel %vm73, %v15, 0
  %vm77 = vcmask 1043456
  %v79 = vsel %vm77, %v63, 0
  %v82 = vsel %vm77, %v64, 0
  %84 = vmatprep.subr.bf16.mxu0 %v56
  %85 = vmatpush1.bf16.msra.mxu0 %v55
  %86 = vmatprep.subr.bf16.mxu0 %v58
  %87 = vmatpush1.bf16.msra.mxu0 %v57
  %88 = vmatprep.subr.bf16.mxu0 %v60
  %89 = vmatpush1.bf16.msra.mxu0 %v59
  %90 = vmatprep.subr.bf16.mxu0 %v62
  %91 = vmatpush1.bf16.msra.mxu0 %v61
  %92 = vmatprep.subr.bf16.mxu0 %v82
  %93 = vmatpush1.bf16.msra.mxu0 %v79
  %94 = vmatprep.subr.bf16.mxu0 0
  %95 = vmatpush1.bf16.msra.mxu0 0
  %96 = vmatprep.subr.bf16.mxu0 0
  %97 = vmatpush1.bf16.msra.mxu0 0
  %98 = vmatprep.subr.bf16.mxu0 0
  %99 = vmatpush1.bf16.msra.mxu0 0
  %100 = vmatprep.subr.bf16.mxu0 0
  %101 = vmatpush1.bf16.msra.mxu0 0
  %102 = vmatprep.subr.bf16.mxu0 0
  %103 = vmatpush1.bf16.msra.mxu0 0
  %104 = vmatprep.subr.bf16.mxu0 0
  %105 = vmatpush1.bf16.msra.mxu0 0
  %106 = vmatprep.subr.bf16.mxu0 0
  %107 = vmatpush1.bf16.msra.mxu0 0
  %108 = vmatprep.subr.bf16.mxu0 0
  %109 = vmatpush1.bf16.msra.mxu0 0
  %110 = vmatprep.subr.bf16.mxu0 0
  %111 = vmatpush1.bf16.msra.mxu0 0
  %112 = vmatprep.subr.bf16.mxu0 0
  %113 = vmatpush1.bf16.msra.mxu0 0
  %114 = vmatprep.subr.bf16.mxu0 0
  %115 = vmatpush1.bf16.msra.mxu0 0
  %116 = vmatprep.mubr.bf16.mxu0 0
  %117 = vmatmul.mubr.bf16.gmra.mrb[0].mxu0 %v75
  %v118 = vpop.f32.mrb[0].mxu0
  %v119 = vadd.f32 %v26, %v118
  %v120 = vpop.f32.mrb[0].mxu0
  %v121 = vadd.f32 %v27, %v120
  %v122 = vpop.f32.mrb[0].mxu0
  %v123 = vpop.f32.mrb[0].mxu0
  %124 = vdwg.mxu0
  %v125 = vpack.c.bf16 %v119, %v119
  %v126 = vpack.c.bf16 %v121, %v121
  %v129 = vunpack.c.l.b16 %v125
  %v130 = vunpack.c.l.b16 %v126
  %v131 = vpack.c.b16 %v130, %v129
  %133 = vst [vmem:[%s3] sm:$0xff] %v131
  // Predicated region
  $region14: #{resnet_forward.18} parent=0 // pred_check
    _
  $region15: #{resnet_forward.18} parent=0 // pred_check_branch
    %135 = sbr.rel (0) target = $region17
  $region16: #{resnet_forward.18} parent=0 // pred_region
    _
  $region17: #{resnet_forward.18} parent=0 // pred_fallthru
    _
  // Predicated region
  $region18: #{resnet_forward.18} parent=0 // pred_check
    _
  $region19: #{resnet_forward.18} parent=0 // pred_check_branch
    %137 = sbr.rel (0) target = $region21
  $region20: #{resnet_forward.18} parent=0 // pred_region
    _
  $region21: #{resnet_forward.18} parent=0 // pred_fallthru
    _

// kernel: resnet_forward.19
$region0: #{resnet_forward.19}
  #allocation0 [shape = 'u32[]', space=smem, size = 0x4, offset = 0x4, fixed_abs, tag = 'smem constant byte address 0x4 - core index']
  #allocation1 [shape = 'u32[144,128]{1,0:T(1,128)}', space=vmem, size = 0x12000, scoped, tag = 'internal scratch']
  %s0 = inlined_call_operand.vmem [shape: bf16[72,256], index: 0, kind: input, shape index: {}]
  %s1 = inlined_call_operand.vmem [shape: bf16[8,72], index: 1, kind: input, shape index: {}]
  %s2 = inlined_call_operand.vmem [shape: bf16[8,256], index: 2, kind: output, shape index: {}]
  %s3 = sld [smem:[#allocation0]]
  $region18: #{resnet_forward.19} parent=0
    _
  %s5 = ssub.s32 1, %s3
  %s6 = scalar_select 0, %s5, %s3
  // Predicated region
  $region2: #{resnet_forward.19} parent=0 // pred_check
    _
  $region3: #{resnet_forward.19} parent=0 // pred_check_branch
    %8 = sbr.rel (0) target = $region5
  $region4: #{resnet_forward.19} parent=0 // pred_region
    _
  $region5: #{resnet_forward.19} parent=0 // pred_fallthru
    _
  // Predicated region
  $region6: #{resnet_forward.19} parent=0 // pred_check
    _
  $region7: #{resnet_forward.19} parent=0 // pred_check_branch
    %10 = sbr.rel (0) target = $region9
  $region8: #{resnet_forward.19} parent=0 // pred_region
    _
  $region9: #{resnet_forward.19} parent=0 // pred_fallthru
    _
  %v12 = vld [vmem:[%s1] sm:$0xf]
  %v13 = vld [vmem:[%s0] sm:$0xff]
  %v14 = vld [vmem:[%s0 + $0x8] sm:$0xff]
  %v15 = vld [vmem:[%s0 + $0x10] sm:$0xff]
  %v16 = vld [vmem:[%s0 + $0x18] sm:$0xff]
  %v17 = vld [vmem:[%s0 + $0x20] sm:$0xff]
  %v18 = vld [vmem:[%s0 + $0x28] sm:$0xff]
  %v19 = vld [vmem:[%s0 + $0x30] sm:$0xff]
  %v20 = vld [vmem:[%s0 + $0x38] sm:$0xff]
  %v21 = vld [vmem:[%s0 + $0x40] sm:$0xff]
  %v31 = vunpack.c.l.b16 %v13
  %v32 = vunpack.c.h.b16 %v13
  %v33 = vunpack.c.l.b16 %v14
  %v34 = vunpack.c.h.b16 %v14
  %v35 = vunpack.c.l.b16 %v15
  %v36 = vunpack.c.h.b16 %v15
  %v37 = vunpack.c.l.b16 %v16
  %v38 = vunpack.c.h.b16 %v16
  %v39 = vunpack.c.l.b16 %v17
  %v40 = vunpack.c.h.b16 %v17
  %v41 = vunpack.c.l.b16 %v18
  %v42 = vunpack.c.h.b16 %v18
  %v43 = vunpack.c.l.b16 %v19
  %v44 = vunpack.c.h.b16 %v19
  %v45 = vunpack.c.l.b16 %v20
  %v46 = vunpack.c.h.b16 %v20
  %v47 = vunpack.c.l.b16 %v21
  %v48 = vunpack.c.h.b16 %v21
  %v49 = vpack.c.b16 %v33, %v31
  %v50 = vpack.c.b16 %v34, %v32
  %v51 = vpack.c.b16 %v37, %v35
  %v52 = vpack.c.b16 %v38, %v36
  %v53 = vpack.c.b16 %v41, %v39
  %v54 = vpack.c.b16 %v42, %v40
  %v55 = vpack.c.b16 %v45, %v43
  %v56 = vpack.c.b16 %v46, %v44
  %v57 = vpack.c.b16 %v47, %v47
  %v58 = vpack.c.b16 %v48, %v48
  %vm67 = vcmask 588800
  %v69 = vsel %vm67, %v12, 0
  %vm71 = vcmask 1043456
  %v73 = vsel %vm71, %v57, 0
  %v76 = vsel %vm71, %v58, 0
  %78 = vmatprep.subr.bf16.mxu0 %v50
  %79 = vmatpush1.bf16.msra.mxu0 %v49
  %80 = vmatprep.subr.bf16.mxu0 %v52
  %81 = vmatpush1.bf16.msra.mxu0 %v51
  %82 = vmatprep.subr.bf16.mxu0 %v54
  %83 = vmatpush1.bf16.msra.mxu0 %v53
  %84 = vmatprep.subr.bf16.mxu0 %v56
  %85 = vmatpush1.bf16.msra.mxu0 %v55
  %86 = vmatprep.subr.bf16.mxu0 %v76
  %87 = vmatpush1.bf16.msra.mxu0 %v73
  %88 = vmatprep.subr.bf16.mxu0 0
  %89 = vmatpush1.bf16.msra.mxu0 0
  %90 = vmatprep.subr.bf16.mxu0 0
  %91 = vmatpush1.bf16.msra.mxu0 0
  %92 = vmatprep.subr.bf16.mxu0 0
  %93 = vmatpush1.bf16.msra.mxu0 0
  %94 = vmatprep.subr.bf16.mxu0 0
  %95 = vmatpush1.bf16.msra.mxu0 0
  %96 = vmatprep.subr.bf16.mxu0 0
  %97 = vmatpush1.bf16.msra.mxu0 0
  %98 = vmatprep.subr.bf16.mxu0 0
  %99 = vmatpush1.bf16.msra.mxu0 0
  %100 = vmatprep.subr.bf16.mxu0 0
  %101 = vmatpush1.bf16.msra.mxu0 0
  %102 = vmatprep.subr.bf16.mxu0 0
  %103 = vmatpush1.bf16.msra.mxu0 0
  %104 = vmatprep.subr.bf16.mxu0 0
  %105 = vmatpush1.bf16.msra.mxu0 0
  %106 = vmatprep.subr.bf16.mxu0 0
  %107 = vmatpush1.bf16.msra.mxu0 0
  %108 = vmatprep.subr.bf16.mxu0 0
  %109 = vmatpush1.bf16.msra.mxu0 0
  %110 = vmatprep.mubr.bf16.mxu0 0
  %111 = vmatmul.mubr.bf16.gmra.mrb[0].mxu0 %v69
  %v112 = vpop.f32.mrb[0].mxu0
  %v113 = vadd.f32 0.0, %v112
  %v114 = vpop.f32.mrb[0].mxu0
  %v115 = vadd.f32 0.0, %v114
  %v116 = vpop.f32.mrb[0].mxu0
  %v117 = vpop.f32.mrb[0].mxu0
  %118 = vdwg.mxu0
  %v119 = vpack.c.bf16 %v113, %v113
  %v120 = vpack.c.bf16 %v115, %v115
  %v123 = vunpack.c.l.b16 %v119
  %v124 = vunpack.c.l.b16 %v120
  %v125 = vpack.c.b16 %v124, %v123
  %127 = vst [vmem:[%s2] sm:$0xff] %v125
  // Predicated region
  $region10: #{resnet_forward.19} parent=0 // pred_check
    _
  $region11: #{resnet_forward.19} parent=0 // pred_check_branch
    %129 = sbr.rel (0) target = $region13
  $region12: #{resnet_forward.19} parent=0 // pred_region
    _
  $region13: #{resnet_forward.19} parent=0 // pred_fallthru
    _
  // Predicated region
  $region14: #{resnet_forward.19} parent=0 // pred_check
    _
  $region15: #{resnet_forward.19} parent=0 // pred_check_branch
    %131 = sbr.rel (0) target = $region17
  $region16: #{resnet_forward.19} parent=0 // pred_region
    _
  $region17: #{resnet_forward.19} parent=0 // pred_fallthru
    _

// kernel: resnet_forward.20
$region0: #{resnet_forward.20}
  #allocation0 [shape = 'u32[]', space=smem, size = 0x4, offset = 0x4, fixed_abs, tag = 'smem constant byte address 0x4 - core index']
  #allocation1 [shape = 'u32[144,128]{1,0:T(1,128)}', space=vmem, size = 0x12000, scoped, tag = 'internal scratch']
  %s0 = inlined_call_operand.vmem [shape: bf16[72,64], index: 0, kind: input, shape index: {}]
  %s1 = inlined_call_operand.vmem [shape: bf16[16,72], index: 1, kind: input, shape index: {}]
  %s2 = inlined_call_operand.vmem [shape: f32[16,1], index: 2, kind: input, shape index: {}]
  %s3 = inlined_call_operand.vmem [shape: bf16[8,64], index: 3, kind: input, shape index: {}]
  %s4 = inlined_call_operand.vmem [shape: bf16[16,8], index: 4, kind: input, shape index: {}]
  %s5 = inlined_call_operand.vmem [shape: f32[16,1], index: 5, kind: input, shape index: {}]
  %s6 = inlined_call_operand.vmem [shape: bf16[16,64], index: 6, kind: output, shape index: {0}]
  %s7 = inlined_call_operand.vmem [shape: bf16[16,64], index: 7, kind: output, shape index: {1}]
  %8 = xla_tuple %s6, %s7
  %s9 = sld [smem:[#allocation0]]
  $region42: #{resnet_forward.20} parent=0
    _
  %s11 = ssub.s32 1, %s9
  %s12 = scalar_select 0, %s11, %s9
  // Predicated region
  $region2: #{resnet_forward.20} parent=0 // pred_check
    _
  $region3: #{resnet_forward.20} parent=0 // pred_check_branch
    %14 = sbr.rel (0) target = $region5
  $region4: #{resnet_forward.20} parent=0 // pred_region
    _
  $region5: #{resnet_forward.20} parent=0 // pred_fallthru
    _
  // Predicated region
  $region6: #{resnet_forward.20} parent=0 // pred_check
    _
  $region7: #{resnet_forward.20} parent=0 // pred_check_branch
    %16 = sbr.rel (0) target = $region9
  $region8: #{resnet_forward.20} parent=0 // pred_region
    _
  $region9: #{resnet_forward.20} parent=0 // pred_fallthru
    _
  // Predicated region
  $region10: #{resnet_forward.20} parent=0 // pred_check
    _
  $region11: #{resnet_forward.20} parent=0 // pred_check_branch
    %18 = sbr.rel (0) target = $region13
  $region12: #{resnet_forward.20} parent=0 // pred_region
    _
  $region13: #{resnet_forward.20} parent=0 // pred_fallthru
    _
  // Predicated region
  $region14: #{resnet_forward.20} parent=0 // pred_check
    _
  $region15: #{resnet_forward.20} parent=0 // pred_check_branch
    %20 = sbr.rel (0) target = $region17
  $region16: #{resnet_forward.20} parent=0 // pred_region
    _
  $region17: #{resnet_forward.20} parent=0 // pred_fallthru
    _
  // Predicated region
  $region18: #{resnet_forward.20} parent=0 // pred_check
    _
  $region19: #{resnet_forward.20} parent=0 // pred_check_branch
    %22 = sbr.rel (0) target = $region21
  $region20: #{resnet_forward.20} parent=0 // pred_region
    _
  $region21: #{resnet_forward.20} parent=0 // pred_fallthru
    _
  // Predicated region
  $region22: #{resnet_forward.20} parent=0 // pred_check
    _
  $region23: #{resnet_forward.20} parent=0 // pred_check_branch
    %24 = sbr.rel (0) target = $region25
  $region24: #{resnet_forward.20} parent=0 // pred_region
    _
  $region25: #{resnet_forward.20} parent=0 // pred_fallthru
    _
  %v26 = vld [vmem:[%s1] sm:$0xf]
  %v27 = vld [vmem:[%s1 + $0x4] sm:$0xf]
  %v28 = vld [vmem:[%s0] sm:$0xf]
  %v29 = vld [vmem:[%s0 + $0x4] sm:$0xf]
  %v30 = vld [vmem:[%s0 + $0x8] sm:$0xf]
  %v31 = vld [vmem:[%s0 + $0xc] sm:$0xf]
  %v32 = vld [vmem:[%s0 + $0x10] sm:$0xf]
  %v33 = vld [vmem:[%s0 + $0x14] sm:$0xf]
  %v34 = vld [vmem:[%s0 + $0x18] sm:$0xf]
  %v35 = vld [vmem:[%s0 + $0x1c] sm:$0xf]
  %v36 = vld [vmem:[%s0 + $0x20] sm:$0xf]
  %v37 = vld [vmem:[%s2] sm:$0xff]
  %v38 = vld [vmem:[%s2 + $0x8] sm:$0xff]
  %40 = vset.pattern.permute.xlu0 0
  %41 = vperm.xlu0 %40, %v37
  %v42 = vpop.permute.xlu0 %41
  %45 = vset.pattern.permute.xlu0 0
  %46 = vperm.xlu0 %45, %v38
  %v47 = vpop.permute.xlu0 %46
  %v51 = vunpack.c.l.b16 %v26
  %v52 = vunpack.c.l.b16 %v27
  %v53 = vpack.c.b16 %v52, %v51
  %v63 = vunpack.c.l.b16 %v28
  %v64 = vunpack.c.l.b16 %v29
  %v65 = vunpack.c.l.b16 %v30
  %v66 = vunpack.c.l.b16 %v31
  %v67 = vunpack.c.l.b16 %v32
  %v68 = vunpack.c.l.b16 %v33
  %v69 = vunpack.c.l.b16 %v34
  %v70 = vunpack.c.l.b16 %v35
  %v71 = vunpack.c.l.b16 %v36
  %v72 = vpack.c.b16 %v64, %v63
  %v73 = vpack.c.b16 %v66, %v65
  %v74 = vpack.c.b16 %v68, %v67
  %v75 = vpack.c.b16 %v70, %v69
  %v76 = vpack.c.b16 %v71, %v71
  %vm81 = vcmask 588800
  %v83 = vsel %vm81, %v53, 0
  %vm85 = vcmask 1043456
  %v87 = vsel %vm85, %v76, 0
  %89 = vmatprep.subr.bf16.mxu0 0
  %90 = vmatpush1.bf16.msra.mxu0 %v72
  %91 = vmatprep.subr.bf16.mxu0 0
  %92 = vmatpush1.bf16.msra.mxu0 %v73
  %93 = vmatprep.subr.bf16.mxu0 0
  %94 = vmatpush1.bf16.msra.mxu0 %v74
  %95 = vmatprep.subr.bf16.mxu0 0
  %96 = vmatpush1.bf16.msra.mxu0 %v75
  %97 = vmatprep.subr.bf16.mxu0 0
  %98 = vmatpush1.bf16.msra.mxu0 %v87
  %99 = vmatprep.subr.bf16.mxu0 0
  %100 = vmatpush1.bf16.msra.mxu0 0
  %101 = vmatprep.subr.bf16.mxu0 0
  %102 = vmatpush1.bf16.msra.mxu0 0
  %103 = vmatprep.subr.bf16.mxu0 0
  %104 = vmatpush1.bf16.msra.mxu0 0
  %105 = vmatprep.subr.bf16.mxu0 0
  %106 = vmatpush1.bf16.msra.mxu0 0
  %107 = vmatprep.subr.bf16.mxu0 0
  %108 = vmatpush1.bf16.msra.mxu0 0
  %109 = vmatprep.subr.bf16.mxu0 0
  %110 = vmatpush1.bf16.msra.mxu0 0
  %111 = vmatprep.subr.bf16.mxu0 0
  %112 = vmatpush1.bf16.msra.mxu0 0
  %113 = vmatprep.subr.bf16.mxu0 0
  %114 = vmatpush1.bf16.msra.mxu0 0
  %115 = vmatprep.subr.bf16.mxu0 0
  %116 = vmatpush1.bf16.msra.mxu0 0
  %117 = vmatprep.subr.bf16.mxu0 0
  %118 = vmatpush1.bf16.msra.mxu0 0
  %119 = vmatprep.subr.bf16.mxu0 0
  %120 = vmatpush1.bf16.msra.mxu0 0
  %121 = vmatprep.mubr.bf16.mxu0 0
  %122 = vmatmul.mubr.bf16.gmra.mrb[0].mxu0 %v83
  %v123 = vpop.f32.mrb[0].mxu0
  %v124 = vadd.f32 %v42, %v123
  %v125 = vpop.f32.mrb[0].mxu0
  %v126 = vpop.f32.mrb[0].mxu0
  %v127 = vadd.f32 %v47, %v126
  %v128 = vpop.f32.mrb[0].mxu0
  %129 = vdwg.mxu0
  %v130 = vmax.f32 %v124, 0.0
  %v131 = vmax.f32 %v127, 0.0
  %v132 = vpack.c.bf16 %v131, %v130
  %v134 = vunpack.c.l.b16 %v132
  %v135 = vunpack.c.h.b16 %v132
  %v136 = vpack.c.b16 %v134, %v134
  %v137 = vpack.c.b16 %v135, %v135
  %vm140 = vcmask 519168
  %141 = vst.msk [vmem:[%s6] sm:$0xf] %vm140, %v136
  %142 = vst.msk [vmem:[%s6 + $0x4] sm:$0xf] %vm140, %v137
  %v143 = vld [vmem:[%s4] sm:$0xf]
  %v144 = vld [vmem:[%s4 + $0x4] sm:$0xf]
  %v145 = vld [vmem:[%s3] sm:$0xf]
  %v146 = vld [vmem:[%s5] sm:$0xff]
  %v147 = vld [vmem:[%s5 + $0x8] sm:$0xff]
  %149 = vset.pattern.permute.xlu0 0
  %150 = vperm.xlu0 %149, %v146
  %v151 = vpop.permute.xlu0 %150
  %154 = vset.pattern.permute.xlu0 0
  %155 = vperm.xlu0 %154, %v147
  %v156 = vpop.permute.xlu0 %155
  %v160 = vunpack.c.l.b16 %v143
  %v161 = vunpack.c.l.b16 %v144
  %v162 = vpack.c.b16 %v161, %v160
  %vm163 = vcmask 64512
  %v165 = vsel %vm163, %v162, 0
  %v168 = vsel %vm85, %v145, 0
  %170 = vmatprep.subr.bf16.mxu0 0
  %171 = vmatpush1.bf16.msra.mxu0 %v168
  %172 = vmatprep.subr.bf16.mxu0 0
  %173 = vmatpush1.bf16.msra.mxu0 0
  %174 = vmatprep.subr.bf16.mxu0 0
  %175 = vmatpush1.bf16.msra.mxu0 0
  %176 = vmatprep.subr.bf16.mxu0 0
  %177 = vmatpush1.bf16.msra.mxu0 0
  %178 = vmatprep.subr.bf16.mxu0 0
  %179 = vmatpush1.bf16.msra.mxu0 0
  %180 = vmatprep.subr.bf16.mxu0 0
  %181 = vmatpush1.bf16.msra.mxu0 0
  %182 = vmatprep.subr.bf16.mxu0 0
  %183 = vmatpush1.bf16.msra.mxu0 0
  %184 = vmatprep.subr.bf16.mxu0 0
  %185 = vmatpush1.bf16.msra.mxu0 0
  %186 = vmatprep.subr.bf16.mxu0 0
  %187 = vmatpush1.bf16.msra.mxu0 0
  %188 = vmatprep.subr.bf16.mxu0 0
  %189 = vmatpush1.bf16.msra.mxu0 0
  %190 = vmatprep.subr.bf16.mxu0 0
  %191 = vmatpush1.bf16.msra.mxu0 0
  %192 = vmatprep.subr.bf16.mxu0 0
  %193 = vmatpush1.bf16.msra.mxu0 0
  %194 = vmatprep.subr.bf16.mxu0 0
  %195 = vmatpush1.bf16.msra.mxu0 0
  %196 = vmatprep.subr.bf16.mxu0 0
  %197 = vmatpush1.bf16.msra.mxu0 0
  %198 = vmatprep.subr.bf16.mxu0 0
  %199 = vmatpush1.bf16.msra.mxu0 0
  %200 = vmatprep.subr.bf16.mxu0 0
  %201 = vmatpush1.bf16.msra.mxu0 0
  %202 = vmatprep.mubr.bf16.mxu0 0
  %203 = vmatmul.mubr.bf16.gmra.mrb[0].mxu0 %v165
  %v204 = vpop.f32.mrb[0].mxu0
  %v205 = vadd.f32 %v151, %v204
  %v206 = vpop.f32.mrb[0].mxu0
  %v207 = vpop.f32.mrb[0].mxu0
  %v208 = vadd.f32 %v156, %v207
  %v209 = vpop.f32.mrb[0].mxu0
  %210 = vdwg.mxu0
  %v211 = vpack.c.bf16 %v208, %v205
  %v213 = vunpack.c.l.b16 %v211
  %v214 = vunpack.c.h.b16 %v211
  %v215 = vpack.c.b16 %v213, %v213
  %v216 = vpack.c.b16 %v214, %v214
  %219 = vst.msk [vmem:[%s7] sm:$0xf] %vm140, %v215
  %220 = vst.msk [vmem:[%s7 + $0x4] sm:$0xf] %vm140, %v216
  // Predicated region
  $region26: #{resnet_forward.20} parent=0 // pred_check
    _
  $region27: #{resnet_forward.20} parent=0 // pred_check_branch
    %222 = sbr.rel (0) target = $region29
  $region28: #{resnet_forward.20} parent=0 // pred_region
    _
  $region29: #{resnet_forward.20} parent=0 // pred_fallthru
    _
  // Predicated region
  $region30: #{resnet_forward.20} parent=0 // pred_check
    _
  $region31: #{resnet_forward.20} parent=0 // pred_check_branch
    %224 = sbr.rel (0) target = $region33
  $region32: #{resnet_forward.20} parent=0 // pred_region
    _
  $region33: #{resnet_forward.20} parent=0 // pred_fallthru
    _
  // Predicated region
  $region34: #{resnet_forward.20} parent=0 // pred_check
    _
  $region35: #{resnet_forward.20} parent=0 // pred_check_branch
    %226 = sbr.rel (0) target = $region37
  $region36: #{resnet_forward.20} parent=0 // pred_region
    _
  $region37: #{resnet_forward.20} parent=0 // pred_fallthru
    _
  // Predicated region
  $region38: #{resnet_forward.20} parent=0 // pred_check
    _
  $region39: #{resnet_forward.20} parent=0 // pred_check_branch
    %228 = sbr.rel (0) target = $region41
  $region40: #{resnet_forward.20} parent=0 // pred_region
    _
  $region41: #{resnet_forward.20} parent=0 // pred_fallthru
    _

// kernel: resnet_forward.21
$region0: #{resnet_forward.21}
  #allocation0 [shape = 'u32[]', space=smem, size = 0x4, offset = 0x4, fixed_abs, tag = 'smem constant byte address 0x4 - core index']
  #allocation1 [shape = 'u32[144,128]{1,0:T(1,128)}', space=vmem, size = 0x12000, scoped, tag = 'internal scratch']
  %s0 = inlined_call_operand.vmem [shape: bf16[144,64], index: 0, kind: input, shape index: {}]
  %s1 = inlined_call_operand.vmem [shape: bf16[16,144], index: 1, kind: input, shape index: {}]
  %s2 = inlined_call_operand.vmem [shape: bf16[16,64], index: 2, kind: input, shape index: {}, may-alias: {2,3}]
  %s3 = inlined_call_operand.vmem [shape: bf16[16,64], index: 3, kind: output, shape index: {}, may-alias: {2,3}]
  %s4 = sld [smem:[#allocation0]]
  $region22: #{resnet_forward.21} parent=0
    _
  %s6 = ssub.s32 1, %s4
  %s7 = scalar_select 0, %s6, %s4
  // Predicated region
  $region2: #{resnet_forward.21} parent=0 // pred_check
    _
  $region3: #{resnet_forward.21} parent=0 // pred_check_branch
    %9 = sbr.rel (0) target = $region5
  $region4: #{resnet_forward.21} parent=0 // pred_region
    _
  $region5: #{resnet_forward.21} parent=0 // pred_fallthru
    _
  // Predicated region
  $region6: #{resnet_forward.21} parent=0 // pred_check
    _
  $region7: #{resnet_forward.21} parent=0 // pred_check_branch
    %11 = sbr.rel (0) target = $region9
  $region8: #{resnet_forward.21} parent=0 // pred_region
    _
  $region9: #{resnet_forward.21} parent=0 // pred_fallthru
    _
  // Predicated region
  $region10: #{resnet_forward.21} parent=0 // pred_check
    _
  $region11: #{resnet_forward.21} parent=0 // pred_check_branch
    %13 = sbr.rel (0) target = $region13
  $region12: #{resnet_forward.21} parent=0 // pred_region
    _
  $region13: #{resnet_forward.21} parent=0 // pred_fallthru
    _
  %v15 = vld [vmem:[%s1] sm:$0xff]
  %v16 = vld [vmem:[%s1 + $0x8] sm:$0xff]
  %v17 = vld [vmem:[%s0] sm:$0xf]
  %v18 = vld [vmem:[%s0 + $0x4] sm:$0xf]
  %v19 = vld [vmem:[%s0 + $0x8] sm:$0xf]
  %v20 = vld [vmem:[%s0 + $0xc] sm:$0xf]
  %v21 = vld [vmem:[%s0 + $0x10] sm:$0xf]
  %v22 = vld [vmem:[%s0 + $0x14] sm:$0xf]
  %v23 = vld [vmem:[%s0 + $0x18] sm:$0xf]
  %v24 = vld [vmem:[%s0 + $0x1c] sm:$0xf]
  %v25 = vld [vmem:[%s0 + $0x20] sm:$0xf]
  %v26 = vld [vmem:[%s0 + $0x24] sm:$0xf]
  %v27 = vld [vmem:[%s0 + $0x28] sm:$0xf]
  %v28 = vld [vmem:[%s0 + $0x2c] sm:$0xf]
  %v29 = vld [vmem:[%s0 + $0x30] sm:$0xf]
  %v30 = vld [vmem:[%s0 + $0x34] sm:$0xf]
  %v31 = vld [vmem:[%s0 + $0x38] sm:$0xf]
  %v32 = vld [vmem:[%s0 + $0x3c] sm:$0xf]
  %v33 = vld [vmem:[%s0 + $0x40] sm:$0xf]
  %v34 = vld [vmem:[%s0 + $0x44] sm:$0xf]
  %v35 = vld [vmem:[%s2] sm:$0xf]
  %v36 = vld [vmem:[%s2 + $0x4] sm:$0xf]
  %v37 = vunpack.c.l.bf16 %v35
  %v38 = vunpack.c.l.bf16 %v36
  %v41 = vunpack.c.l.b16 %v15
  %v42 = vunpack.c.h.b16 %v15
  %v43 = vunpack.c.l.b16 %v16
  %v44 = vunpack.c.h.b16 %v16
  %v45 = vpack.c.b16 %v43, %v41
  %v46 = vpack.c.b16 %v44, %v42
  %v66 = vunpack.c.l.b16 %v17
  %v67 = vunpack.c.l.b16 %v18
  %v68 = vunpack.c.l.b16 %v19
  %v69 = vunpack.c.l.b16 %v20
  %v70 = vunpack.c.l.b16 %v21
  %v71 = vunpack.c.l.b16 %v22
  %v72 = vunpack.c.l.b16 %v23
  %v73 = vunpack.c.l.b16 %v24
  %v74 = vunpack.c.l.b16 %v25
  %v75 = vunpack.c.l.b16 %v26
  %v76 = vunpack.c.l.b16 %v27
  %v77 = vunpack.c.l.b16 %v28
  %v78 = vunpack.c.l.b16 %v29
  %v79 = vunpack.c.l.b16 %v30
  %v80 = vunpack.c.l.b16 %v31
  %v81 = vunpack.c.l.b16 %v32
  %v82 = vunpack.c.l.b16 %v33
  %v83 = vunpack.c.l.b16 %v34
  %v84 = vpack.c.b16 %v67, %v66
  %v85 = vpack.c.b16 %v69, %v68
  %v86 = vpack.c.b16 %v71, %v70
  %v87 = vpack.c.b16 %v73, %v72
  %v88 = vpack.c.b16 %v75, %v74
  %v89 = vpack.c.b16 %v77, %v76
  %v90 = vpack.c.b16 %v79, %v78
  %v91 = vpack.c.b16 %v81, %v80
  %v92 = vpack.c.b16 %v83, %v82
  %vm102 = vcmask 130048
  %v104 = vsel %vm102, %v46, 0
  %106 = vmatprep.subr.bf16.mxu0 0
  %107 = vmatpush1.bf16.msra.mxu0 %v84
  %108 = vmatprep.subr.bf16.mxu0 0
  %109 = vmatpush1.bf16.msra.mxu0 %v85
  %110 = vmatprep.subr.bf16.mxu0 0
  %111 = vmatpush1.bf16.msra.mxu0 %v86
  %112 = vmatprep.subr.bf16.mxu0 0
  %113 = vmatpush1.bf16.msra.mxu0 %v87
  %114 = vmatprep.subr.bf16.mxu0 0
  %115 = vmatpush1.bf16.msra.mxu0 %v88
  %116 = vmatprep.subr.bf16.mxu0 0
  %117 = vmatpush1.bf16.msra.mxu0 %v89
  %118 = vmatprep.subr.bf16.mxu0 0
  %119 = vmatpush1.bf16.msra.mxu0 %v90
  %120 = vmatprep.subr.bf16.mxu0 0
  %121 = vmatpush1.bf16.msra.mxu0 %v91
  %122 = vmatprep.subr.bf16.mxu0 0
  %123 = vmatpush1.bf16.msra.mxu0 %v92
  %124 = vmatprep.subr.bf16.mxu0 0
  %125 = vmatpush1.bf16.msra.mxu0 0
  %126 = vmatprep.subr.bf16.mxu0 0
  %127 = vmatpush1.bf16.msra.mxu0 0
  %128 = vmatprep.subr.bf16.mxu0 0
  %129 = vmatpush1.bf16.msra.mxu0 0
  %130 = vmatprep.subr.bf16.mxu0 0
  %131 = vmatpush1.bf16.msra.mxu0 0
  %132 = vmatprep.subr.bf16.mxu0 0
  %133 = vmatpush1.bf16.msra.mxu0 0
  %134 = vmatprep.subr.bf16.mxu0 0
  %135 = vmatpush1.bf16.msra.mxu0 0
  %136 = vmatprep.subr.bf16.mxu0 0
  %137 = vmatpush1.bf16.msra.mxu0 0
  %138 = vmatprep.mubr.bf16.mxu0 %v104
  %139 = vmatmul.mubr.bf16.gmra.mrb[0].mxu0 %v45
  %v140 = vpop.f32.mrb[0].mxu0
  %v141 = vadd.f32 %v37, %v140
  %v142 = vpop.f32.mrb[0].mxu0
  %v143 = vpop.f32.mrb[0].mxu0
  %v144 = vadd.f32 %v38, %v143
  %v145 = vpop.f32.mrb[0].mxu0
  %146 = vdwg.mxu0
  %v147 = vpack.c.bf16 %v144, %v141
  %v149 = vunpack.c.l.b16 %v147
  %v150 = vunpack.c.h.b16 %v147
  %v151 = vpack.c.b16 %v149, %v149
  %v152 = vpack.c.b16 %v150, %v150
  %vm155 = vcmask 519168
  %156 = vst.msk [vmem:[%s3] sm:$0xf] %vm155, %v151
  %157 = vst.msk [vmem:[%s3 + $0x4] sm:$0xf] %vm155, %v152
  // Predicated region
  $region14: #{resnet_forward.21} parent=0 // pred_check
    _
  $region15: #{resnet_forward.21} parent=0 // pred_check_branch
    %159 = sbr.rel (0) target = $region17
  $region16: #{resnet_forward.21} parent=0 // pred_region
    _
  $region17: #{resnet_forward.21} parent=0 // pred_fallthru
    _
  // Predicated region
  $region18: #{resnet_forward.21} parent=0 // pred_check
    _
  $region19: #{resnet_forward.21} parent=0 // pred_check_branch
    %161 = sbr.rel (0) target = $region21
  $region20: #{resnet_forward.21} parent=0 // pred_region
    _
  $region21: #{resnet_forward.21} parent=0 // pred_fallthru
    _

// kernel: resnet_forward.22
$region0: #{resnet_forward.22}
  #allocation0 [shape = 'u32[]', space=smem, size = 0x4, offset = 0x4, fixed_abs, tag = 'smem constant byte address 0x4 - core index']
  #allocation1 [shape = 'u32[144,128]{1,0:T(1,128)}', space=vmem, size = 0x12000, scoped, tag = 'internal scratch']
  %s0 = inlined_call_operand.vmem [shape: bf16[144,64], index: 0, kind: input, shape index: {}]
  %s1 = inlined_call_operand.vmem [shape: bf16[16,144], index: 1, kind: input, shape index: {}]
  %s2 = inlined_call_operand.vmem [shape: bf16[16,64], index: 2, kind: output, shape index: {}]
  %s3 = sld [smem:[#allocation0]]
  $region18: #{resnet_forward.22} parent=0
    _
  %s5 = ssub.s32 1, %s3
  %s6 = scalar_select 0, %s5, %s3
  // Predicated region
  $region2: #{resnet_forward.22} parent=0 // pred_check
    _
  $region3: #{resnet_forward.22} parent=0 // pred_check_branch
    %8 = sbr.rel (0) target = $region5
  $region4: #{resnet_forward.22} parent=0 // pred_region
    _
  $region5: #{resnet_forward.22} parent=0 // pred_fallthru
    _
  // Predicated region
  $region6: #{resnet_forward.22} parent=0 // pred_check
    _
  $region7: #{resnet_forward.22} parent=0 // pred_check_branch
    %10 = sbr.rel (0) target = $region9
  $region8: #{resnet_forward.22} parent=0 // pred_region
    _
  $region9: #{resnet_forward.22} parent=0 // pred_fallthru
    _
  %v12 = vld [vmem:[%s1] sm:$0xff]
  %v13 = vld [vmem:[%s1 + $0x8] sm:$0xff]
  %v14 = vld [vmem:[%s0] sm:$0xf]
  %v15 = vld [vmem:[%s0 + $0x4] sm:$0xf]
  %v16 = vld [vmem:[%s0 + $0x8] sm:$0xf]
  %v17 = vld [vmem:[%s0 + $0xc] sm:$0xf]
  %v18 = vld [vmem:[%s0 + $0x10] sm:$0xf]
  %v19 = vld [vmem:[%s0 + $0x14] sm:$0xf]
  %v20 = vld [vmem:[%s0 + $0x18] sm:$0xf]
  %v21 = vld [vmem:[%s0 + $0x1c] sm:$0xf]
  %v22 = vld [vmem:[%s0 + $0x20] sm:$0xf]
  %v23 = vld [vmem:[%s0 + $0x24] sm:$0xf]
  %v24 = vld [vmem:[%s0 + $0x28] sm:$0xf]
  %v25 = vld [vmem:[%s0 + $0x2c] sm:$0xf]
  %v26 = vld [vmem:[%s0 + $0x30] sm:$0xf]
  %v27 = vld [vmem:[%s0 + $0x34] sm:$0xf]
  %v28 = vld [vmem:[%s0 + $0x38] sm:$0xf]
  %v29 = vld [vmem:[%s0 + $0x3c] sm:$0xf]
  %v30 = vld [vmem:[%s0 + $0x40] sm:$0xf]
  %v31 = vld [vmem:[%s0 + $0x44] sm:$0xf]
  %v34 = vunpack.c.l.b16 %v12
  %v35 = vunpack.c.h.b16 %v12
  %v36 = vunpack.c.l.b16 %v13
  %v37 = vunpack.c.h.b16 %v13
  %v38 = vpack.c.b16 %v36, %v34
  %v39 = vpack.c.b16 %v37, %v35
  %v59 = vunpack.c.l.b16 %v14
  %v60 = vunpack.c.l.b16 %v15
  %v61 = vunpack.c.l.b16 %v16
  %v62 = vunpack.c.l.b16 %v17
  %v63 = vunpack.c.l.b16 %v18
  %v64 = vunpack.c.l.b16 %v19
  %v65 = vunpack.c.l.b16 %v20
  %v66 = vunpack.c.l.b16 %v21
  %v67 = vunpack.c.l.b16 %v22
  %v68 = vunpack.c.l.b16 %v23
  %v69 = vunpack.c.l.b16 %v24
  %v70 = vunpack.c.l.b16 %v25
  %v71 = vunpack.c.l.b16 %v26
  %v72 = vunpack.c.l.b16 %v27
  %v73 = vunpack.c.l.b16 %v28
  %v74 = vunpack.c.l.b16 %v29
  %v75 = vunpack.c.l.b16 %v30
  %v76 = vunpack.c.l.b16 %v31
  %v77 = vpack.c.b16 %v60, %v59
  %v78 = vpack.c.b16 %v62, %v61
  %v79 = vpack.c.b16 %v64, %v63
  %v80 = vpack.c.b16 %v66, %v65
  %v81 = vpack.c.b16 %v68, %v67
  %v82 = vpack.c.b16 %v70, %v69
  %v83 = vpack.c.b16 %v72, %v71
  %v84 = vpack.c.b16 %v74, %v73
  %v85 = vpack.c.b16 %v76, %v75
  %vm95 = vcmask 130048
  %v97 = vsel %vm95, %v39, 0
  %99 = vmatprep.subr.bf16.mxu0 0
  %100 = vmatpush1.bf16.msra.mxu0 %v77
  %101 = vmatprep.subr.bf16.mxu0 0
  %102 = vmatpush1.bf16.msra.mxu0 %v78
  %103 = vmatprep.subr.bf16.mxu0 0
  %104 = vmatpush1.bf16.msra.mxu0 %v79
  %105 = vmatprep.subr.bf16.mxu0 0
  %106 = vmatpush1.bf16.msra.mxu0 %v80
  %107 = vmatprep.subr.bf16.mxu0 0
  %108 = vmatpush1.bf16.msra.mxu0 %v81
  %109 = vmatprep.subr.bf16.mxu0 0
  %110 = vmatpush1.bf16.msra.mxu0 %v82
  %111 = vmatprep.subr.bf16.mxu0 0
  %112 = vmatpush1.bf16.msra.mxu0 %v83
  %113 = vmatprep.subr.bf16.mxu0 0
  %114 = vmatpush1.bf16.msra.mxu0 %v84
  %115 = vmatprep.subr.bf16.mxu0 0
  %116 = vmatpush1.bf16.msra.mxu0 %v85
  %117 = vmatprep.subr.bf16.mxu0 0
  %118 = vmatpush1.bf16.msra.mxu0 0
  %119 = vmatprep.subr.bf16.mxu0 0
  %120 = vmatpush1.bf16.msra.mxu0 0
  %121 = vmatprep.subr.bf16.mxu0 0
  %122 = vmatpush1.bf16.msra.mxu0 0
  %123 = vmatprep.subr.bf16.mxu0 0
  %124 = vmatpush1.bf16.msra.mxu0 0
  %125 = vmatprep.subr.bf16.mxu0 0
  %126 = vmatpush1.bf16.msra.mxu0 0
  %127 = vmatprep.subr.bf16.mxu0 0
  %128 = vmatpush1.bf16.msra.mxu0 0
  %129 = vmatprep.subr.bf16.mxu0 0
  %130 = vmatpush1.bf16.msra.mxu0 0
  %131 = vmatprep.mubr.bf16.mxu0 %v97
  %132 = vmatmul.mubr.bf16.gmra.mrb[0].mxu0 %v38
  %v133 = vpop.f32.mrb[0].mxu0
  %v134 = vadd.f32 0.0, %v133
  %v135 = vpop.f32.mrb[0].mxu0
  %v136 = vpop.f32.mrb[0].mxu0
  %v137 = vadd.f32 0.0, %v136
  %v138 = vpop.f32.mrb[0].mxu0
  %139 = vdwg.mxu0
  %v140 = vpack.c.bf16 %v137, %v134
  %v142 = vunpack.c.l.b16 %v140
  %v143 = vunpack.c.h.b16 %v140
  %v144 = vpack.c.b16 %v142, %v142
  %v145 = vpack.c.b16 %v143, %v143
  %vm148 = vcmask 519168
  %149 = vst.msk [vmem:[%s2] sm:$0xf] %vm148, %v144
  %150 = vst.msk [vmem:[%s2 + $0x4] sm:$0xf] %vm148, %v145
  // Predicated region
  $region10: #{resnet_forward.22} parent=0 // pred_check
    _
  $region11: #{resnet_forward.22} parent=0 // pred_check_branch
    %152 = sbr.rel (0) target = $region13
  $region12: #{resnet_forward.22} parent=0 // pred_region
    _
  $region13: #{resnet_forward.22} parent=0 // pred_fallthru
    _
  // Predicated region
  $region14: #{resnet_forward.22} parent=0 // pred_check
    _
  $region15: #{resnet_forward.22} parent=0 // pred_check_branch
    %154 = sbr.rel (0) target = $region17
  $region16: #{resnet_forward.22} parent=0 // pred_region
    _
  $region17: #{resnet_forward.22} parent=0 // pred_fallthru
    _

// kernel: resnet_forward.23
$region0: #{resnet_forward.23}
  #allocation0 [shape = 'u32[]', space=smem, size = 0x4, offset = 0x4, fixed_abs, tag = 'smem constant byte address 0x4 - core index']
  #allocation1 [shape = 'u32[144,128]{1,0:T(1,128)}', space=vmem, size = 0x12000, scoped, tag = 'internal scratch']
  %s0 = inlined_call_operand.vmem [shape: bf16[144,40], index: 0, kind: input, shape index: {}]
  %s1 = inlined_call_operand.vmem [shape: bf16[32,144], index: 1, kind: input, shape index: {}]
  %s2 = inlined_call_operand.vmem [shape: f32[32,1], index: 2, kind: input, shape index: {}]
  %s3 = inlined_call_operand.vmem [shape: bf16[16,40], index: 3, kind: input, shape index: {}]
  %s4 = inlined_call_operand.vmem [shape: bf16[32,16], index: 4, kind: input, shape index: {}]
  %s5 = inlined_call_operand.vmem [shape: f32[32,1], index: 5, kind: input, shape index: {}]
  %s6 = inlined_call_operand.vmem [shape: bf16[32,40], index: 6, kind: output, shape index: {0}]
  %s7 = inlined_call_operand.vmem [shape: bf16[32,40], index: 7, kind: output, shape index: {1}]
  %8 = xla_tuple %s6, %s7
  %s9 = sld [smem:[#allocation0]]
  $region42: #{resnet_forward.23} parent=0
    _
  %s11 = ssub.s32 1, %s9
  %s12 = scalar_select 0, %s11, %s9
  // Predicated region
  $region2: #{resnet_forward.23} parent=0 // pred_check
    _
  $region3: #{resnet_forward.23} parent=0 // pred_check_branch
    %14 = sbr.rel (0) target = $region5
  $region4: #{resnet_forward.23} parent=0 // pred_region
    _
  $region5: #{resnet_forward.23} parent=0 // pred_fallthru
    _
  // Predicated region
  $region6: #{resnet_forward.23} parent=0 // pred_check
    _
  $region7: #{resnet_forward.23} parent=0 // pred_check_branch
    %16 = sbr.rel (0) target = $region9
  $region8: #{resnet_forward.23} parent=0 // pred_region
    _
  $region9: #{resnet_forward.23} parent=0 // pred_fallthru
    _
  // Predicated region
  $region10: #{resnet_forward.23} parent=0 // pred_check
    _
  $region11: #{resnet_forward.23} parent=0 // pred_check_branch
    %18 = sbr.rel (0) target = $region13
  $region12: #{resnet_forward.23} parent=0 // pred_region
    _
  $region13: #{resnet_forward.23} parent=0 // pred_fallthru
    _
  // Predicated region
  $region14: #{resnet_forward.23} parent=0 // pred_check
    _
  $region15: #{resnet_forward.23} parent=0 // pred_check_branch
    %20 = sbr.rel (0) target = $region17
  $region16: #{resnet_forward.23} parent=0 // pred_region
    _
  $region17: #{resnet_forward.23} parent=0 // pred_fallthru
    _
  // Predicated region
  $region18: #{resnet_forward.23} parent=0 // pred_check
    _
  $region19: #{resnet_forward.23} parent=0 // pred_check_branch
    %22 = sbr.rel (0) target = $region21
  $region20: #{resnet_forward.23} parent=0 // pred_region
    _
  $region21: #{resnet_forward.23} parent=0 // pred_fallthru
    _
  // Predicated region
  $region22: #{resnet_forward.23} parent=0 // pred_check
    _
  $region23: #{resnet_forward.23} parent=0 // pred_check_branch
    %24 = sbr.rel (0) target = $region25
  $region24: #{resnet_forward.23} parent=0 // pred_region
    _
  $region25: #{resnet_forward.23} parent=0 // pred_fallthru
    _
  %v26 = vld [vmem:[%s1] sm:$0xff]
  %v27 = vld [vmem:[%s1 + $0x8] sm:$0xff]
  %v28 = vld [vmem:[%s1 + $0x10] sm:$0xff]
  %v29 = vld [vmem:[%s1 + $0x18] sm:$0xff]
  %v30 = vld [vmem:[%s0] sm:$0xf]
  %v31 = vld [vmem:[%s0 + $0x4] sm:$0xf]
  %v32 = vld [vmem:[%s0 + $0x8] sm:$0xf]
  %v33 = vld [vmem:[%s0 + $0xc] sm:$0xf]
  %v34 = vld [vmem:[%s0 + $0x10] sm:$0xf]
  %v35 = vld [vmem:[%s0 + $0x14] sm:$0xf]
  %v36 = vld [vmem:[%s0 + $0x18] sm:$0xf]
  %v37 = vld [vmem:[%s0 + $0x1c] sm:$0xf]
  %v38 = vld [vmem:[%s0 + $0x20] sm:$0xf]
  %v39 = vld [vmem:[%s0 + $0x24] sm:$0xf]
  %v40 = vld [vmem:[%s0 + $0x28] sm:$0xf]
  %v41 = vld [vmem:[%s0 + $0x2c] sm:$0xf]
  %v42 = vld [vmem:[%s0 + $0x30] sm:$0xf]
  %v43 = vld [vmem:[%s0 + $0x34] sm:$0xf]
  %v44 = vld [vmem:[%s0 + $0x38] sm:$0xf]
  %v45 = vld [vmem:[%s0 + $0x3c] sm:$0xf]
  %v46 = vld [vmem:[%s0 + $0x40] sm:$0xf]
  %v47 = vld [vmem:[%s0 + $0x44] sm:$0xf]
  %v48 = vld [vmem:[%s2] sm:$0xff]
  %v49 = vld [vmem:[%s2 + $0x8] sm:$0xff]
  %v50 = vld [vmem:[%s2 + $0x10] sm:$0xff]
  %v51 = vld [vmem:[%s2 + $0x18] sm:$0xff]
  %53 = vset.pattern.permute.xlu0 0
  %54 = vperm.xlu0 %53, %v48
  %v55 = vpop.permute.xlu0 %54
  %58 = vset.pattern.permute.xlu0 0
  %59 = vperm.xlu0 %58, %v49
  %v60 = vpop.permute.xlu0 %59
  %63 = vset.pattern.permute.xlu0 0
  %64 = vperm.xlu0 %63, %v50
  %v65 = vpop.permute.xlu0 %64
  %68 = vset.pattern.permute.xlu0 0
  %69 = vperm.xlu0 %68, %v51
  %v70 = vpop.permute.xlu0 %69
  %v76 = vunpack.c.l.b16 %v26
  %v77 = vunpack.c.h.b16 %v26
  %v78 = vunpack.c.l.b16 %v27
  %v79 = vunpack.c.h.b16 %v27
  %v80 = vunpack.c.l.b16 %v28
  %v81 = vunpack.c.h.b16 %v28
  %v82 = vunpack.c.l.b16 %v29
  %v83 = vunpack.c.h.b16 %v29
  %v84 = vpack.c.b16 %v78, %v76
  %v85 = vpack.c.b16 %v79, %v77
  %v86 = vpack.c.b16 %v82, %v80
  %v87 = vpack.c.b16 %v83, %v81
  %v108 = vunpack.c.l.b16 %v30
  %v109 = vunpack.c.l.b16 %v31
  %v110 = vunpack.c.l.b16 %v32
  %v111 = vunpack.c.l.b16 %v33
  %v112 = vunpack.c.l.b16 %v34
  %v113 = vunpack.c.l.b16 %v35
  %v114 = vunpack.c.l.b16 %v36
  %v115 = vunpack.c.l.b16 %v37
  %v116 = vunpack.c.l.b16 %v38
  %v117 = vunpack.c.l.b16 %v39
  %v118 = vunpack.c.l.b16 %v40
  %v119 = vunpack.c.l.b16 %v41
  %v120 = vunpack.c.l.b16 %v42
  %v121 = vunpack.c.l.b16 %v43
  %v122 = vunpack.c.l.b16 %v44
  %v123 = vunpack.c.l.b16 %v45
  %v124 = vunpack.c.l.b16 %v46
  %v125 = vunpack.c.l.b16 %v47
  %v126 = vpack.c.b16 %v109, %v108
  %v127 = vpack.c.b16 %v111, %v110
  %v128 = vpack.c.b16 %v113, %v112
  %v129 = vpack.c.b16 %v115, %v114
  %v130 = vpack.c.b16 %v117, %v116
  %v131 = vpack.c.b16 %v119, %v118
  %v132 = vpack.c.b16 %v121, %v120
  %v133 = vpack.c.b16 %v123, %v122
  %v134 = vpack.c.b16 %v125, %v124
  %vm144 = vcmask 130048
  %v146 = vsel %vm144, %v85, 0
  %v149 = vsel %vm144, %v87, 0
  %151 = vmatprep.subr.bf16.mxu0 0
  %152 = vmatpush1.bf16.msra.mxu0 %v126
  %153 = vmatprep.subr.bf16.mxu0 0
  %154 = vmatpush1.bf16.msra.mxu0 %v127
  %155 = vmatprep.subr.bf16.mxu0 0
  %156 = vmatpush1.bf16.msra.mxu0 %v128
  %157 = vmatprep.subr.bf16.mxu0 0
  %158 = vmatpush1.bf16.msra.mxu0 %v129
  %159 = vmatprep.subr.bf16.mxu0 0
  %160 = vmatpush1.bf16.msra.mxu0 %v130
  %161 = vmatprep.subr.bf16.mxu0 0
  %162 = vmatpush1.bf16.msra.mxu0 %v131
  %163 = vmatprep.subr.bf16.mxu0 0
  %164 = vmatpush1.bf16.msra.mxu0 %v132
  %165 = vmatprep.subr.bf16.mxu0 0
  %166 = vmatpush1.bf16.msra.mxu0 %v133
  %167 = vmatprep.subr.bf16.mxu0 0
  %168 = vmatpush1.bf16.msra.mxu0 %v134
  %169 = vmatprep.subr.bf16.mxu0 0
  %170 = vmatpush1.bf16.msra.mxu0 0
  %171 = vmatprep.subr.bf16.mxu0 0
  %172 = vmatpush1.bf16.msra.mxu0 0
  %173 = vmatprep.subr.bf16.mxu0 0
  %174 = vmatpush1.bf16.msra.mxu0 0
  %175 = vmatprep.subr.bf16.mxu0 0
  %176 = vmatpush1.bf16.msra.mxu0 0
  %177 = vmatprep.subr.bf16.mxu0 0
  %178 = vmatpush1.bf16.msra.mxu0 0
  %179 = vmatprep.subr.bf16.mxu0 0
  %180 = vmatpush1.bf16.msra.mxu0 0
  %181 = vmatprep.subr.bf16.mxu0 0
  %182 = vmatpush1.bf16.msra.mxu0 0
  %183 = vmatprep.mubr.bf16.mxu0 %v146
  %184 = vmatmul.mubr.bf16.gmra.mrb[0].mxu0 %v84
  %v185 = vpop.f32.mrb[0].mxu0
  %v186 = vadd.f32 %v55, %v185
  %v187 = vpop.f32.mrb[0].mxu0
  %v188 = vpop.f32.mrb[0].mxu0
  %v189 = vadd.f32 %v60, %v188
  %v190 = vpop.f32.mrb[0].mxu0
  %191 = vmatprep.mubr.bf16.mxu0 %v149
  %192 = vmatmul.mubr.bf16.gmra.mrb[0].mxu0 %v86
  %v193 = vpop.f32.mrb[0].mxu0
  %v194 = vadd.f32 %v65, %v193
  %v195 = vpop.f32.mrb[0].mxu0
  %v196 = vpop.f32.mrb[0].mxu0
  %v197 = vadd.f32 %v70, %v196
  %v198 = vpop.f32.mrb[0].mxu0
  %199 = vdwg.mxu0
  %v200 = vmax.f32 %v186, 0.0
  %v201 = vmax.f32 %v189, 0.0
  %v202 = vmax.f32 %v194, 0.0
  %v203 = vmax.f32 %v197, 0.0
  %v204 = vpack.c.bf16 %v201, %v200
  %v205 = vpack.c.bf16 %v203, %v202
  %v208 = vunpack.c.l.b16 %v204
  %v209 = vunpack.c.h.b16 %v204
  %v210 = vunpack.c.l.b16 %v205
  %v211 = vunpack.c.h.b16 %v205
  %v212 = vpack.c.b16 %v208, %v208
  %v213 = vpack.c.b16 %v209, %v209
  %v214 = vpack.c.b16 %v210, %v210
  %v215 = vpack.c.b16 %v211, %v211
  %vm220 = vcmask 322560
  %221 = vst.msk [vmem:[%s6] sm:$0xf] %vm220, %v212
  %222 = vst.msk [vmem:[%s6 + $0x4] sm:$0xf] %vm220, %v213
  %223 = vst.msk [vmem:[%s6 + $0x8] sm:$0xf] %vm220, %v214
  %224 = vst.msk [vmem:[%s6 + $0xc] sm:$0xf] %vm220, %v215
  %v225 = vld [vmem:[%s4] sm:$0xf]
  %v226 = vld [vmem:[%s4 + $0x4] sm:$0xf]
  %v227 = vld [vmem:[%s4 + $0x8] sm:$0xf]
  %v228 = vld [vmem:[%s4 + $0xc] sm:$0xf]
  %v229 = vld [vmem:[%s3] sm:$0xf]
  %v230 = vld [vmem:[%s3 + $0x4] sm:$0xf]
  %v231 = vld [vmem:[%s5] sm:$0xff]
  %v232 = vld [vmem:[%s5 + $0x8] sm:$0xff]
  %v233 = vld [vmem:[%s5 + $0x10] sm:$0xff]
  %v234 = vld [vmem:[%s5 + $0x18] sm:$0xff]
  %236 = vset.pattern.permute.xlu0 0
  %237 = vperm.xlu0 %236, %v231
  %v238 = vpop.permute.xlu0 %237
  %241 = vset.pattern.permute.xlu0 0
  %242 = vperm.xlu0 %241, %v232
  %v243 = vpop.permute.xlu0 %242
  %246 = vset.pattern.permute.xlu0 0
  %247 = vperm.xlu0 %246, %v233
  %v248 = vpop.permute.xlu0 %247
  %251 = vset.pattern.permute.xlu0 0
  %252 = vperm.xlu0 %251, %v234
  %v253 = vpop.permute.xlu0 %252
  %v259 = vunpack.c.l.b16 %v225
  %v260 = vunpack.c.l.b16 %v226
  %v261 = vunpack.c.l.b16 %v227
  %v262 = vunpack.c.l.b16 %v228
  %v263 = vpack.c.b16 %v260, %v259
  %v264 = vpack.c.b16 %v262, %v261
  %v267 = vunpack.c.l.b16 %v229
  %v268 = vunpack.c.l.b16 %v230
  %v269 = vpack.c.b16 %v268, %v267
  %v272 = vsel %vm144, %v263, 0
  %v275 = vsel %vm144, %v264, 0
  %277 = vmatprep.subr.bf16.mxu0 0
  %278 = vmatpush1.bf16.msra.mxu0 %v269
  %279 = vmatprep.subr.bf16.mxu0 0
  %280 = vmatpush1.bf16.msra.mxu0 0
  %281 = vmatprep.subr.bf16.mxu0 0
  %282 = vmatpush1.bf16.msra.mxu0 0
  %283 = vmatprep.subr.bf16.mxu0 0
  %284 = vmatpush1.bf16.msra.mxu0 0
  %285 = vmatprep.subr.bf16.mxu0 0
  %286 = vmatpush1.bf16.msra.mxu0 0
  %287 = vmatprep.subr.bf16.mxu0 0
  %288 = vmatpush1.bf16.msra.mxu0 0
  %289 = vmatprep.subr.bf16.mxu0 0
  %290 = vmatpush1.bf16.msra.mxu0 0
  %291 = vmatprep.subr.bf16.mxu0 0
  %292 = vmatpush1.bf16.msra.mxu0 0
  %293 = vmatprep.subr.bf16.mxu0 0
  %294 = vmatpush1.bf16.msra.mxu0 0
  %295 = vmatprep.subr.bf16.mxu0 0
  %296 = vmatpush1.bf16.msra.mxu0 0
  %297 = vmatprep.subr.bf16.mxu0 0
  %298 = vmatpush1.bf16.msra.mxu0 0
  %299 = vmatprep.subr.bf16.mxu0 0
  %300 = vmatpush1.bf16.msra.mxu0 0
  %301 = vmatprep.subr.bf16.mxu0 0
  %302 = vmatpush1.bf16.msra.mxu0 0
  %303 = vmatprep.subr.bf16.mxu0 0
  %304 = vmatpush1.bf16.msra.mxu0 0
  %305 = vmatprep.subr.bf16.mxu0 0
  %306 = vmatpush1.bf16.msra.mxu0 0
  %307 = vmatprep.subr.bf16.mxu0 0
  %308 = vmatpush1.bf16.msra.mxu0 0
  %309 = vmatprep.mubr.bf16.mxu0 0
  %310 = vmatmul.mubr.bf16.gmra.mrb[0].mxu0 %v272
  %v311 = vpop.f32.mrb[0].mxu0
  %v312 = vadd.f32 %v238, %v311
  %v313 = vpop.f32.mrb[0].mxu0
  %v314 = vpop.f32.mrb[0].mxu0
  %v315 = vadd.f32 %v243, %v314
  %v316 = vpop.f32.mrb[0].mxu0
  %317 = vmatprep.mubr.bf16.mxu0 0
  %318 = vmatmul.mubr.bf16.gmra.mrb[0].mxu0 %v275
  %v319 = vpop.f32.mrb[0].mxu0
  %v320 = vadd.f32 %v248, %v319
  %v321 = vpop.f32.mrb[0].mxu0
  %v322 = vpop.f32.mrb[0].mxu0
  %v323 = vadd.f32 %v253, %v322
  %v324 = vpop.f32.mrb[0].mxu0
  %325 = vdwg.mxu0
  %v326 = vpack.c.bf16 %v315, %v312
  %v327 = vpack.c.bf16 %v323, %v320
  %v330 = vunpack.c.l.b16 %v326
  %v331 = vunpack.c.h.b16 %v326
  %v332 = vunpack.c.l.b16 %v327
  %v333 = vunpack.c.h.b16 %v327
  %v334 = vpack.c.b16 %v330, %v330
  %v335 = vpack.c.b16 %v331, %v331
  %v336 = vpack.c.b16 %v332, %v332
  %v337 = vpack.c.b16 %v333, %v333
  %342 = vst.msk [vmem:[%s7] sm:$0xf] %vm220, %v334
  %343 = vst.msk [vmem:[%s7 + $0x4] sm:$0xf] %vm220, %v335
  %344 = vst.msk [vmem:[%s7 + $0x8] sm:$0xf] %vm220, %v336
  %345 = vst.msk [vmem:[%s7 + $0xc] sm:$0xf] %vm220, %v337
  // Predicated region
  $region26: #{resnet_forward.23} parent=0 // pred_check
    _
  $region27: #{resnet_forward.23} parent=0 // pred_check_branch
    %347 = sbr.rel (0) target = $region29
  $region28: #{resnet_forward.23} parent=0 // pred_region
    _
  $region29: #{resnet_forward.23} parent=0 // pred_fallthru
    _
  // Predicated region
  $region30: #{resnet_forward.23} parent=0 // pred_check
    _
  $region31: #{resnet_forward.23} parent=0 // pred_check_branch
    %349 = sbr.rel (0) target = $region33
  $region32: #{resnet_forward.23} parent=0 // pred_region
    _
  $region33: #{resnet_forward.23} parent=0 // pred_fallthru
    _
  // Predicated region
  $region34: #{resnet_forward.23} parent=0 // pred_check
    _
  $region35: #{resnet_forward.23} parent=0 // pred_check_branch
    %351 = sbr.rel (0) target = $region37
  $region36: #{resnet_forward.23} parent=0 // pred_region
    _
  $region37: #{resnet_forward.23} parent=0 // pred_fallthru
    _
  // Predicated region
  $region38: #{resnet_forward.23} parent=0 // pred_check
    _
  $region39: #{resnet_forward.23} parent=0 // pred_check_branch
    %353 = sbr.rel (0) target = $region41
  $region40: #{resnet_forward.23} parent=0 // pred_region
    _
  $region41: #{resnet_forward.23} parent=0 // pred_fallthru
    _

// kernel: resnet_forward.24
$region0: #{resnet_forward.24}
  #allocation0 [shape = 'u32[]', space=smem, size = 0x4, offset = 0x4, fixed_abs, tag = 'smem constant byte address 0x4 - core index']
  #allocation1 [shape = 'u32[144,128]{1,0:T(1,128)}', space=vmem, size = 0x12000, scoped, tag = 'internal scratch']
  %s0 = inlined_call_operand.vmem [shape: bf16[288,40], index: 0, kind: input, shape index: {}]
  %s1 = inlined_call_operand.vmem [shape: bf16[32,288], index: 1, kind: input, shape index: {}]
  %s2 = inlined_call_operand.vmem [shape: bf16[32,40], index: 2, kind: input, shape index: {}, may-alias: {2,3}]
  %s3 = inlined_call_operand.vmem [shape: bf16[32,40], index: 3, kind: output, shape index: {}, may-alias: {2,3}]
  %s4 = sld [smem:[#allocation0]]
  $region22: #{resnet_forward.24} parent=0
    _
  %s6 = ssub.s32 1, %s4
  %s7 = scalar_select 0, %s6, %s4
  // Predicated region
  $region2: #{resnet_forward.24} parent=0 // pred_check
    _
  $region3: #{resnet_forward.24} parent=0 // pred_check_branch
    %9 = sbr.rel (0) target = $region5
  $region4: #{resnet_forward.24} parent=0 // pred_region
    _
  $region5: #{resnet_forward.24} parent=0 // pred_fallthru
    _
  // Predicated region
  $region6: #{resnet_forward.24} parent=0 // pred_check
    _
  $region7: #{resnet_forward.24} parent=0 // pred_check_branch
    %11 = sbr.rel (0) target = $region9
  $region8: #{resnet_forward.24} parent=0 // pred_region
    _
  $region9: #{resnet_forward.24} parent=0 // pred_fallthru
    _
  // Predicated region
  $region10: #{resnet_forward.24} parent=0 // pred_check
    _
  $region11: #{resnet_forward.24} parent=0 // pred_check_branch
    %13 = sbr.rel (0) target = $region13
  $region12: #{resnet_forward.24} parent=0 // pred_region
    _
  $region13: #{resnet_forward.24} parent=0 // pred_fallthru
    _
  %v15 = vld [vmem:[%s1] sm:$0xff]
  %v16 = vld [vmem:[%s1 + $0x8] sm:$0xf]
  %v17 = vld [vmem:[%s1 + $0xc] sm:$0xff]
  %v18 = vld [vmem:[%s1 + $0x14] sm:$0xf]
  %v19 = vld [vmem:[%s1 + $0x18] sm:$0xff]
  %v20 = vld [vmem:[%s1 + $0x20] sm:$0xf]
  %v21 = vld [vmem:[%s1 + $0x24] sm:$0xff]
  %v22 = vld [vmem:[%s1 + $0x2c] sm:$0xf]
  %v23 = vld [vmem:[%s0] sm:$0xf]
  %v24 = vld [vmem:[%s0 + $0x4] sm:$0xf]
  %v25 = vld [vmem:[%s0 + $0x8] sm:$0xf]
  %v26 = vld [vmem:[%s0 + $0xc] sm:$0xf]
  %v27 = vld [vmem:[%s0 + $0x10] sm:$0xf]
  %v28 = vld [vmem:[%s0 + $0x14] sm:$0xf]
  %v29 = vld [vmem:[%s0 + $0x18] sm:$0xf]
  %v30 = vld [vmem:[%s0 + $0x1c] sm:$0xf]
  %v31 = vld [vmem:[%s0 + $0x20] sm:$0xf]
  %v32 = vld [vmem:[%s0 + $0x24] sm:$0xf]
  %v33 = vld [vmem:[%s0 + $0x28] sm:$0xf]
  %v34 = vld [vmem:[%s0 + $0x2c] sm:$0xf]
  %v35 = vld [vmem:[%s0 + $0x30] sm:$0xf]
  %v36 = vld [vmem:[%s0 + $0x34] sm:$0xf]
  %v37 = vld [vmem:[%s0 + $0x38] sm:$0xf]
  %v38 = vld [vmem:[%s0 + $0x3c] sm:$0xf]
  %v39 = vld [vmem:[%s0 + $0x40] sm:$0xf]
  %v40 = vld [vmem:[%s0 + $0x44] sm:$0xf]
  %v41 = vld [vmem:[%s0 + $0x48] sm:$0xf]
  %v42 = vld [vmem:[%s0 + $0x4c] sm:$0xf]
  %v43 = vld [vmem:[%s0 + $0x50] sm:$0xf]
  %v44 = vld [vmem:[%s0 + $0x54] sm:$0xf]
  %v45 = vld [vmem:[%s0 + $0x58] sm:$0xf]
  %v46 = vld [vmem:[%s0 + $0x5c] sm:$0xf]
  %v47 = vld [vmem:[%s0 + $0x60] sm:$0xf]
  %v48 = vld [vmem:[%s0 + $0x64] sm:$0xf]
  %v49 = vld [vmem:[%s0 + $0x68] sm:$0xf]
  %v50 = vld [vmem:[%s0 + $0x6c] sm:$0xf]
  %v51 = vld [vmem:[%s0 + $0x70] sm:$0xf]
  %v52 = vld [vmem:[%s0 + $0x74] sm:$0xf]
  %v53 = vld [vmem:[%s0 + $0x78] sm:$0xf]
  %v54 = vld [vmem:[%s0 + $0x7c] sm:$0xf]
  %v55 = vld [vmem:[%s0 + $0x80] sm:$0xf]
  %v56 = vld [vmem:[%s0 + $0x84] sm:$0xf]
  %v57 = vld [vmem:[%s0 + $0x88] sm:$0xf]
  %v58 = vld [vmem:[%s0 + $0x8c] sm:$0xf]
  %v59 = vld [vmem:[%s2] sm:$0xf]
  %v60 = vld [vmem:[%s2 + $0x4] sm:$0xf]
  %v61 = vld [vmem:[%s2 + $0x8] sm:$0xf]
  %v62 = vld [vmem:[%s2 + $0xc] sm:$0xf]
  %v63 = vunpack.c.l.bf16 %v59
  %v64 = vunpack.c.l.bf16 %v60
  %v65 = vunpack.c.l.bf16 %v61
  %v66 = vunpack.c.l.bf16 %v62
  %v75 = vunpack.c.l.b16 %v15
  %v76 = vunpack.c.h.b16 %v15
  %v77 = vunpack.c.l.b16 %v16
  %v78 = vunpack.c.l.b16 %v17
  %v79 = vunpack.c.h.b16 %v17
  %v80 = vunpack.c.l.b16 %v18
  %v81 = vunpack.c.l.b16 %v19
  %v82 = vunpack.c.h.b16 %v19
  %v83 = vunpack.c.l.b16 %v20
  %v84 = vunpack.c.l.b16 %v21
  %v85 = vunpack.c.h.b16 %v21
  %v86 = vunpack.c.l.b16 %v22
  %v87 = vpack.c.b16 %v78, %v75
  %v88 = vpack.c.b16 %v79, %v76
  %v89 = vpack.c.b16 %v80, %v77
  %v90 = vpack.c.b16 %v84, %v81
  %v91 = vpack.c.b16 %v85, %v82
  %v92 = vpack.c.b16 %v86, %v83
  %v133 = vunpack.c.l.b16 %v23
  %v134 = vunpack.c.l.b16 %v24
  %v135 = vunpack.c.l.b16 %v25
  %v136 = vunpack.c.l.b16 %v26
  %v137 = vunpack.c.l.b16 %v27
  %v138 = vunpack.c.l.b16 %v28
  %v139 = vunpack.c.l.b16 %v29
  %v140 = vunpack.c.l.b16 %v30
  %v141 = vunpack.c.l.b16 %v31
  %v142 = vunpack.c.l.b16 %v32
  %v143 = vunpack.c.l.b16 %v33
  %v144 = vunpack.c.l.b16 %v34
  %v145 = vunpack.c.l.b16 %v35
  %v146 = vunpack.c.l.b16 %v36
  %v147 = vunpack.c.l.b16 %v37
  %v148 = vunpack.c.l.b16 %v38
  %v149 = vunpack.c.l.b16 %v39
  %v150 = vunpack.c.l.b16 %v40
  %v151 = vunpack.c.l.b16 %v41
  %v152 = vunpack.c.l.b16 %v42
  %v153 = vunpack.c.l.b16 %v43
  %v154 = vunpack.c.l.b16 %v44
  %v155 = vunpack.c.l.b16 %v45
  %v156 = vunpack.c.l.b16 %v46
  %v157 = vunpack.c.l.b16 %v47
  %v158 = vunpack.c.l.b16 %v48
  %v159 = vunpack.c.l.b16 %v49
  %v160 = vunpack.c.l.b16 %v50
  %v161 = vunpack.c.l.b16 %v51
  %v162 = vunpack.c.l.b16 %v52
  %v163 = vunpack.c.l.b16 %v53
  %v164 = vunpack.c.l.b16 %v54
  %v165 = vunpack.c.l.b16 %v55
  %v166 = vunpack.c.l.b16 %v56
  %v167 = vunpack.c.l.b16 %v57
  %v168 = vunpack.c.l.b16 %v58
  %v169 = vpack.c.b16 %v134, %v133
  %v170 = vpack.c.b16 %v136, %v135
  %v171 = vpack.c.b16 %v138, %v137
  %v172 = vpack.c.b16 %v140, %v139
  %v173 = vpack.c.b16 %v142, %v141
  %v174 = vpack.c.b16 %v144, %v143
  %v175 = vpack.c.b16 %v146, %v145
  %v176 = vpack.c.b16 %v148, %v147
  %v177 = vpack.c.b16 %v150, %v149
  %v178 = vpack.c.b16 %v152, %v151
  %v179 = vpack.c.b16 %v154, %v153
  %v180 = vpack.c.b16 %v156, %v155
  %v181 = vpack.c.b16 %v158, %v157
  %v182 = vpack.c.b16 %v160, %v159
  %v183 = vpack.c.b16 %v162, %v161
  %v184 = vpack.c.b16 %v164, %v163
  %v185 = vpack.c.b16 %v166, %v165
  %v186 = vpack.c.b16 %v168, %v167
  %vm205 = vcmask 261120
  %v207 = vsel %vm205, %v89, 0
  %v210 = vsel %vm205, %v92, 0
  %212 = vmatprep.subr.bf16.mxu0 0
  %213 = vmatpush1.bf16.msra.mxu0 %v169
  %214 = vmatprep.subr.bf16.mxu0 0
  %215 = vmatpush1.bf16.msra.mxu0 %v170
  %216 = vmatprep.subr.bf16.mxu0 0
  %217 = vmatpush1.bf16.msra.mxu0 %v171
  %218 = vmatprep.subr.bf16.mxu0 0
  %219 = vmatpush1.bf16.msra.mxu0 %v172
  %220 = vmatprep.subr.bf16.mxu0 0
  %221 = vmatpush1.bf16.msra.mxu0 %v173
  %222 = vmatprep.subr.bf16.mxu0 0
  %223 = vmatpush1.bf16.msra.mxu0 %v174
  %224 = vmatprep.subr.bf16.mxu0 0
  %225 = vmatpush1.bf16.msra.mxu0 %v175
  %226 = vmatprep.subr.bf16.mxu0 0
  %227 = vmatpush1.bf16.msra.mxu0 %v176
  %228 = vmatprep.subr.bf16.mxu0 0
  %229 = vmatpush1.bf16.msra.mxu0 %v177
  %230 = vmatprep.subr.bf16.mxu0 0
  %231 = vmatpush1.bf16.msra.mxu0 %v178
  %232 = vmatprep.subr.bf16.mxu0 0
  %233 = vmatpush1.bf16.msra.mxu0 %v179
  %234 = vmatprep.subr.bf16.mxu0 0
  %235 = vmatpush1.bf16.msra.mxu0 %v180
  %236 = vmatprep.subr.bf16.mxu0 0
  %237 = vmatpush1.bf16.msra.mxu0 %v181
  %238 = vmatprep.subr.bf16.mxu0 0
  %239 = vmatpush1.bf16.msra.mxu0 %v182
  %240 = vmatprep.subr.bf16.mxu0 0
  %241 = vmatpush1.bf16.msra.mxu0 %v183
  %242 = vmatprep.subr.bf16.mxu0 0
  %243 = vmatpush1.bf16.msra.mxu0 %v184
  %244 = vmatprep.mubr.bf16.mxu0 %v88
  %245 = vmatmul.mubr.bf16.gmra.mrb[0].mxu0 %v87
  %v246 = vpop.f32.mrb[0].mxu0
  %v247 = vadd.f32 %v63, %v246
  %v248 = vpop.f32.mrb[0].mxu0
  %v249 = vpop.f32.mrb[0].mxu0
  %v250 = vadd.f32 %v64, %v249
  %v251 = vpop.f32.mrb[0].mxu0
  %252 = vmatprep.mubr.bf16.mxu0 %v91
  %253 = vmatmul.mubr.bf16.gmra.mrb[0].mxu0 %v90
  %v254 = vpop.f32.mrb[0].mxu0
  %v255 = vadd.f32 %v65, %v254
  %v256 = vpop.f32.mrb[0].mxu0
  %v257 = vpop.f32.mrb[0].mxu0
  %v258 = vadd.f32 %v66, %v257
  %v259 = vpop.f32.mrb[0].mxu0
  %260 = vdwg.mxu0
  %261 = vmatprep.subr.bf16.mxu0 0
  %262 = vmatpush1.bf16.msra.mxu0 %v185
  %263 = vmatprep.subr.bf16.mxu0 0
  %264 = vmatpush1.bf16.msra.mxu0 %v186
  %265 = vmatprep.subr.bf16.mxu0 0
  %266 = vmatpush1.bf16.msra.mxu0 0
  %267 = vmatprep.subr.bf16.mxu0 0
  %268 = vmatpush1.bf16.msra.mxu0 0
  %269 = vmatprep.subr.bf16.mxu0 0
  %270 = vmatpush1.bf16.msra.mxu0 0
  %271 = vmatprep.subr.bf16.mxu0 0
  %272 = vmatpush1.bf16.msra.mxu0 0
  %273 = vmatprep.subr.bf16.mxu0 0
  %274 = vmatpush1.bf16.msra.mxu0 0
  %275 = vmatprep.subr.bf16.mxu0 0
  %276 = vmatpush1.bf16.msra.mxu0 0
  %277 = vmatprep.subr.bf16.mxu0 0
  %278 = vmatpush1.bf16.msra.mxu0 0
  %279 = vmatprep.subr.bf16.mxu0 0
  %280 = vmatpush1.bf16.msra.mxu0 0
  %281 = vmatprep.subr.bf16.mxu0 0
  %282 = vmatpush1.bf16.msra.mxu0 0
  %283 = vmatprep.subr.bf16.mxu0 0
  %284 = vmatpush1.bf16.msra.mxu0 0
  %285 = vmatprep.subr.bf16.mxu0 0
  %286 = vmatpush1.bf16.msra.mxu0 0
  %287 = vmatprep.subr.bf16.mxu0 0
  %288 = vmatpush1.bf16.msra.mxu0 0
  %289 = vmatprep.subr.bf16.mxu0 0
  %290 = vmatpush1.bf16.msra.mxu0 0
  %291 = vmatprep.subr.bf16.mxu0 0
  %292 = vmatpush1.bf16.msra.mxu0 0
  %293 = vmatprep.mubr.bf16.mxu0 0
  %294 = vmatmul.mubr.bf16.gmra.mrb[0].mxu0 %v207
  %v295 = vpop.f32.mrb[0].mxu0
  %v296 = vadd.f32 %v247, %v295
  %v297 = vpop.f32.mrb[0].mxu0
  %v298 = vpop.f32.mrb[0].mxu0
  %v299 = vadd.f32 %v250, %v298
  %v300 = vpop.f32.mrb[0].mxu0
  %301 = vmatprep.mubr.bf16.mxu0 0
  %302 = vmatmul.mubr.bf16.gmra.mrb[0].mxu0 %v210
  %v303 = vpop.f32.mrb[0].mxu0
  %v304 = vadd.f32 %v255, %v303
  %v305 = vpop.f32.mrb[0].mxu0
  %v306 = vpop.f32.mrb[0].mxu0
  %v307 = vadd.f32 %v258, %v306
  %v308 = vpop.f32.mrb[0].mxu0
  %309 = vdwg.mxu0
  %v310 = vpack.c.bf16 %v299, %v296
  %v311 = vpack.c.bf16 %v307, %v304
  %v314 = vunpack.c.l.b16 %v310
  %v315 = vunpack.c.h.b16 %v310
  %v316 = vunpack.c.l.b16 %v311
  %v317 = vunpack.c.h.b16 %v311
  %v318 = vpack.c.b16 %v314, %v314
  %v319 = vpack.c.b16 %v315, %v315
  %v320 = vpack.c.b16 %v316, %v316
  %v321 = vpack.c.b16 %v317, %v317
  %vm326 = vcmask 322560
  %327 = vst.msk [vmem:[%s3] sm:$0xf] %vm326, %v318
  %328 = vst.msk [vmem:[%s3 + $0x4] sm:$0xf] %vm326, %v319
  %329 = vst.msk [vmem:[%s3 + $0x8] sm:$0xf] %vm326, %v320
  %330 = vst.msk [vmem:[%s3 + $0xc] sm:$0xf] %vm326, %v321
  // Predicated region
  $region14: #{resnet_forward.24} parent=0 // pred_check
    _
  $region15: #{resnet_forward.24} parent=0 // pred_check_branch
    %332 = sbr.rel (0) target = $region17
  $region16: #{resnet_forward.24} parent=0 // pred_region
    _
  $region17: #{resnet_forward.24} parent=0 // pred_fallthru
    _
  // Predicated region
  $region18: #{resnet_forward.24} parent=0 // pred_check
    _
  $region19: #{resnet_forward.24} parent=0 // pred_check_branch
    %334 = sbr.rel (0) target = $region21
  $region20: #{resnet_forward.24} parent=0 // pred_region
    _
  $region21: #{resnet_forward.24} parent=0 // pred_fallthru
    _

// kernel: resnet_forward.25
$region0: #{resnet_forward.25}
  #allocation0 [shape = 'u32[]', space=smem, size = 0x4, offset = 0x4, fixed_abs, tag = 'smem constant byte address 0x4 - core index']
  #allocation1 [shape = 'u32[144,128]{1,0:T(1,128)}', space=vmem, size = 0x12000, scoped, tag = 'internal scratch']
  %s0 = inlined_call_operand.vmem [shape: bf16[288,40], index: 0, kind: input, shape index: {}]
  %s1 = inlined_call_operand.vmem [shape: bf16[32,288], index: 1, kind: input, shape index: {}]
  %s2 = inlined_call_operand.vmem [shape: bf16[32,40], index: 2, kind: output, shape index: {}]
  %s3 = sld [smem:[#allocation0]]
  $region18: #{resnet_forward.25} parent=0
    _
  %s5 = ssub.s32 1, %s3
  %s6 = scalar_select 0, %s5, %s3
  // Predicated region
  $region2: #{resnet_forward.25} parent=0 // pred_check
    _
  $region3: #{resnet_forward.25} parent=0 // pred_check_branch
    %8 = sbr.rel (0) target = $region5
  $region4: #{resnet_forward.25} parent=0 // pred_region
    _
  $region5: #{resnet_forward.25} parent=0 // pred_fallthru
    _
  // Predicated region
  $region6: #{resnet_forward.25} parent=0 // pred_check
    _
  $region7: #{resnet_forward.25} parent=0 // pred_check_branch
    %10 = sbr.rel (0) target = $region9
  $region8: #{resnet_forward.25} parent=0 // pred_region
    _
  $region9: #{resnet_forward.25} parent=0 // pred_fallthru
    _
  %v12 = vld [vmem:[%s1] sm:$0xff]
  %v13 = vld [vmem:[%s1 + $0x8] sm:$0xf]
  %v14 = vld [vmem:[%s1 + $0xc] sm:$0xff]
  %v15 = vld [vmem:[%s1 + $0x14] sm:$0xf]
  %v16 = vld [vmem:[%s1 + $0x18] sm:$0xff]
  %v17 = vld [vmem:[%s1 + $0x20] sm:$0xf]
  %v18 = vld [vmem:[%s1 + $0x24] sm:$0xff]
  %v19 = vld [vmem:[%s1 + $0x2c] sm:$0xf]
  %v20 = vld [vmem:[%s0] sm:$0xf]
  %v21 = vld [vmem:[%s0 + $0x4] sm:$0xf]
  %v22 = vld [vmem:[%s0 + $0x8] sm:$0xf]
  %v23 = vld [vmem:[%s0 + $0xc] sm:$0xf]
  %v24 = vld [vmem:[%s0 + $0x10] sm:$0xf]
  %v25 = vld [vmem:[%s0 + $0x14] sm:$0xf]
  %v26 = vld [vmem:[%s0 + $0x18] sm:$0xf]
  %v27 = vld [vmem:[%s0 + $0x1c] sm:$0xf]
  %v28 = vld [vmem:[%s0 + $0x20] sm:$0xf]
  %v29 = vld [vmem:[%s0 + $0x24] sm:$0xf]
  %v30 = vld [vmem:[%s0 + $0x28] sm:$0xf]
  %v31 = vld [vmem:[%s0 + $0x2c] sm:$0xf]
  %v32 = vld [vmem:[%s0 + $0x30] sm:$0xf]
  %v33 = vld [vmem:[%s0 + $0x34] sm:$0xf]
  %v34 = vld [vmem:[%s0 + $0x38] sm:$0xf]
  %v35 = vld [vmem:[%s0 + $0x3c] sm:$0xf]
  %v36 = vld [vmem:[%s0 + $0x40] sm:$0xf]
  %v37 = vld [vmem:[%s0 + $0x44] sm:$0xf]
  %v38 = vld [vmem:[%s0 + $0x48] sm:$0xf]
  %v39 = vld [vmem:[%s0 + $0x4c] sm:$0xf]
  %v40 = vld [vmem:[%s0 + $0x50] sm:$0xf]
  %v41 = vld [vmem:[%s0 + $0x54] sm:$0xf]
  %v42 = vld [vmem:[%s0 + $0x58] sm:$0xf]
  %v43 = vld [vmem:[%s0 + $0x5c] sm:$0xf]
  %v44 = vld [vmem:[%s0 + $0x60] sm:$0xf]
  %v45 = vld [vmem:[%s0 + $0x64] sm:$0xf]
  %v46 = vld [vmem:[%s0 + $0x68] sm:$0xf]
  %v47 = vld [vmem:[%s0 + $0x6c] sm:$0xf]
  %v48 = vld [vmem:[%s0 + $0x70] sm:$0xf]
  %v49 = vld [vmem:[%s0 + $0x74] sm:$0xf]
  %v50 = vld [vmem:[%s0 + $0x78] sm:$0xf]
  %v51 = vld [vmem:[%s0 + $0x7c] sm:$0xf]
  %v52 = vld [vmem:[%s0 + $0x80] sm:$0xf]
  %v53 = vld [vmem:[%s0 + $0x84] sm:$0xf]
  %v54 = vld [vmem:[%s0 + $0x88] sm:$0xf]
  %v55 = vld [vmem:[%s0 + $0x8c] sm:$0xf]
  %v64 = vunpack.c.l.b16 %v12
  %v65 = vunpack.c.h.b16 %v12
  %v66 = vunpack.c.l.b16 %v13
  %v67 = vunpack.c.l.b16 %v14
  %v68 = vunpack.c.h.b16 %v14
  %v69 = vunpack.c.l.b16 %v15
  %v70 = vunpack.c.l.b16 %v16
  %v71 = vunpack.c.h.b16 %v16
  %v72 = vunpack.c.l.b16 %v17
  %v73 = vunpack.c.l.b16 %v18
  %v74 = vunpack.c.h.b16 %v18
  %v75 = vunpack.c.l.b16 %v19
  %v76 = vpack.c.b16 %v67, %v64
  %v77 = vpack.c.b16 %v68, %v65
  %v78 = vpack.c.b16 %v69, %v66
  %v79 = vpack.c.b16 %v73, %v70
  %v80 = vpack.c.b16 %v74, %v71
  %v81 = vpack.c.b16 %v75, %v72
  %v122 = vunpack.c.l.b16 %v20
  %v123 = vunpack.c.l.b16 %v21
  %v124 = vunpack.c.l.b16 %v22
  %v125 = vunpack.c.l.b16 %v23
  %v126 = vunpack.c.l.b16 %v24
  %v127 = vunpack.c.l.b16 %v25
  %v128 = vunpack.c.l.b16 %v26
  %v129 = vunpack.c.l.b16 %v27
  %v130 = vunpack.c.l.b16 %v28
  %v131 = vunpack.c.l.b16 %v29
  %v132 = vunpack.c.l.b16 %v30
  %v133 = vunpack.c.l.b16 %v31
  %v134 = vunpack.c.l.b16 %v32
  %v135 = vunpack.c.l.b16 %v33
  %v136 = vunpack.c.l.b16 %v34
  %v137 = vunpack.c.l.b16 %v35
  %v138 = vunpack.c.l.b16 %v36
  %v139 = vunpack.c.l.b16 %v37
  %v140 = vunpack.c.l.b16 %v38
  %v141 = vunpack.c.l.b16 %v39
  %v142 = vunpack.c.l.b16 %v40
  %v143 = vunpack.c.l.b16 %v41
  %v144 = vunpack.c.l.b16 %v42
  %v145 = vunpack.c.l.b16 %v43
  %v146 = vunpack.c.l.b16 %v44
  %v147 = vunpack.c.l.b16 %v45
  %v148 = vunpack.c.l.b16 %v46
  %v149 = vunpack.c.l.b16 %v47
  %v150 = vunpack.c.l.b16 %v48
  %v151 = vunpack.c.l.b16 %v49
  %v152 = vunpack.c.l.b16 %v50
  %v153 = vunpack.c.l.b16 %v51
  %v154 = vunpack.c.l.b16 %v52
  %v155 = vunpack.c.l.b16 %v53
  %v156 = vunpack.c.l.b16 %v54
  %v157 = vunpack.c.l.b16 %v55
  %v158 = vpack.c.b16 %v123, %v122
  %v159 = vpack.c.b16 %v125, %v124
  %v160 = vpack.c.b16 %v127, %v126
  %v161 = vpack.c.b16 %v129, %v128
  %v162 = vpack.c.b16 %v131, %v130
  %v163 = vpack.c.b16 %v133, %v132
  %v164 = vpack.c.b16 %v135, %v134
  %v165 = vpack.c.b16 %v137, %v136
  %v166 = vpack.c.b16 %v139, %v138
  %v167 = vpack.c.b16 %v141, %v140
  %v168 = vpack.c.b16 %v143, %v142
  %v169 = vpack.c.b16 %v145, %v144
  %v170 = vpack.c.b16 %v147, %v146
  %v171 = vpack.c.b16 %v149, %v148
  %v172 = vpack.c.b16 %v151, %v150
  %v173 = vpack.c.b16 %v153, %v152
  %v174 = vpack.c.b16 %v155, %v154
  %v175 = vpack.c.b16 %v157, %v156
  %vm194 = vcmask 261120
  %v196 = vsel %vm194, %v78, 0
  %v199 = vsel %vm194, %v81, 0
  %201 = vmatprep.subr.bf16.mxu0 0
  %202 = vmatpush1.bf16.msra.mxu0 %v158
  %203 = vmatprep.subr.bf16.mxu0 0
  %204 = vmatpush1.bf16.msra.mxu0 %v159
  %205 = vmatprep.subr.bf16.mxu0 0
  %206 = vmatpush1.bf16.msra.mxu0 %v160
  %207 = vmatprep.subr.bf16.mxu0 0
  %208 = vmatpush1.bf16.msra.mxu0 %v161
  %209 = vmatprep.subr.bf16.mxu0 0
  %210 = vmatpush1.bf16.msra.mxu0 %v162
  %211 = vmatprep.subr.bf16.mxu0 0
  %212 = vmatpush1.bf16.msra.mxu0 %v163
  %213 = vmatprep.subr.bf16.mxu0 0
  %214 = vmatpush1.bf16.msra.mxu0 %v164
  %215 = vmatprep.subr.bf16.mxu0 0
  %216 = vmatpush1.bf16.msra.mxu0 %v165
  %217 = vmatprep.subr.bf16.mxu0 0
  %218 = vmatpush1.bf16.msra.mxu0 %v166
  %219 = vmatprep.subr.bf16.mxu0 0
  %220 = vmatpush1.bf16.msra.mxu0 %v167
  %221 = vmatprep.subr.bf16.mxu0 0
  %222 = vmatpush1.bf16.msra.mxu0 %v168
  %223 = vmatprep.subr.bf16.mxu0 0
  %224 = vmatpush1.bf16.msra.mxu0 %v169
  %225 = vmatprep.subr.bf16.mxu0 0
  %226 = vmatpush1.bf16.msra.mxu0 %v170
  %227 = vmatprep.subr.bf16.mxu0 0
  %228 = vmatpush1.bf16.msra.mxu0 %v171
  %229 = vmatprep.subr.bf16.mxu0 0
  %230 = vmatpush1.bf16.msra.mxu0 %v172
  %231 = vmatprep.subr.bf16.mxu0 0
  %232 = vmatpush1.bf16.msra.mxu0 %v173
  %233 = vmatprep.mubr.bf16.mxu0 %v77
  %234 = vmatmul.mubr.bf16.gmra.mrb[0].mxu0 %v76
  %v235 = vpop.f32.mrb[0].mxu0
  %v236 = vadd.f32 0.0, %v235
  %v237 = vpop.f32.mrb[0].mxu0
  %v238 = vpop.f32.mrb[0].mxu0
  %v239 = vadd.f32 0.0, %v238
  %v240 = vpop.f32.mrb[0].mxu0
  %241 = vmatprep.mubr.bf16.mxu0 %v80
  %242 = vmatmul.mubr.bf16.gmra.mrb[0].mxu0 %v79
  %v243 = vpop.f32.mrb[0].mxu0
  %v244 = vadd.f32 0.0, %v243
  %v245 = vpop.f32.mrb[0].mxu0
  %v246 = vpop.f32.mrb[0].mxu0
  %v247 = vadd.f32 0.0, %v246
  %v248 = vpop.f32.mrb[0].mxu0
  %249 = vdwg.mxu0
  %250 = vmatprep.subr.bf16.mxu0 0
  %251 = vmatpush1.bf16.msra.mxu0 %v174
  %252 = vmatprep.subr.bf16.mxu0 0
  %253 = vmatpush1.bf16.msra.mxu0 %v175
  %254 = vmatprep.subr.bf16.mxu0 0
  %255 = vmatpush1.bf16.msra.mxu0 0
  %256 = vmatprep.subr.bf16.mxu0 0
  %257 = vmatpush1.bf16.msra.mxu0 0
  %258 = vmatprep.subr.bf16.mxu0 0
  %259 = vmatpush1.bf16.msra.mxu0 0
  %260 = vmatprep.subr.bf16.mxu0 0
  %261 = vmatpush1.bf16.msra.mxu0 0
  %262 = vmatprep.subr.bf16.mxu0 0
  %263 = vmatpush1.bf16.msra.mxu0 0
  %264 = vmatprep.subr.bf16.mxu0 0
  %265 = vmatpush1.bf16.msra.mxu0 0
  %266 = vmatprep.subr.bf16.mxu0 0
  %267 = vmatpush1.bf16.msra.mxu0 0
  %268 = vmatprep.subr.bf16.mxu0 0
  %269 = vmatpush1.bf16.msra.mxu0 0
  %270 = vmatprep.subr.bf16.mxu0 0
  %271 = vmatpush1.bf16.msra.mxu0 0
  %272 = vmatprep.subr.bf16.mxu0 0
  %273 = vmatpush1.bf16.msra.mxu0 0
  %274 = vmatprep.subr.bf16.mxu0 0
  %275 = vmatpush1.bf16.msra.mxu0 0
  %276 = vmatprep.subr.bf16.mxu0 0
  %277 = vmatpush1.bf16.msra.mxu0 0
  %278 = vmatprep.subr.bf16.mxu0 0
  %279 = vmatpush1.bf16.msra.mxu0 0
  %280 = vmatprep.subr.bf16.mxu0 0
  %281 = vmatpush1.bf16.msra.mxu0 0
  %282 = vmatprep.mubr.bf16.mxu0 0
  %283 = vmatmul.mubr.bf16.gmra.mrb[0].mxu0 %v196
  %v284 = vpop.f32.mrb[0].mxu0
  %v285 = vadd.f32 %v236, %v284
  %v286 = vpop.f32.mrb[0].mxu0
  %v287 = vpop.f32.mrb[0].mxu0
  %v288 = vadd.f32 %v239, %v287
  %v289 = vpop.f32.mrb[0].mxu0
  %290 = vmatprep.mubr.bf16.mxu0 0
  %291 = vmatmul.mubr.bf16.gmra.mrb[0].mxu0 %v199
  %v292 = vpop.f32.mrb[0].mxu0
  %v293 = vadd.f32 %v244, %v292
  %v294 = vpop.f32.mrb[0].mxu0
  %v295 = vpop.f32.mrb[0].mxu0
  %v296 = vadd.f32 %v247, %v295
  %v297 = vpop.f32.mrb[0].mxu0
  %298 = vdwg.mxu0
  %v299 = vpack.c.bf16 %v288, %v285
  %v300 = vpack.c.bf16 %v296, %v293
  %v303 = vunpack.c.l.b16 %v299
  %v304 = vunpack.c.h.b16 %v299
  %v305 = vunpack.c.l.b16 %v300
  %v306 = vunpack.c.h.b16 %v300
  %v307 = vpack.c.b16 %v303, %v303
  %v308 = vpack.c.b16 %v304, %v304
  %v309 = vpack.c.b16 %v305, %v305
  %v310 = vpack.c.b16 %v306, %v306
  %vm315 = vcmask 322560
  %316 = vst.msk [vmem:[%s2] sm:$0xf] %vm315, %v307
  %317 = vst.msk [vmem:[%s2 + $0x4] sm:$0xf] %vm315, %v308
  %318 = vst.msk [vmem:[%s2 + $0x8] sm:$0xf] %vm315, %v309
  %319 = vst.msk [vmem:[%s2 + $0xc] sm:$0xf] %vm315, %v310
  // Predicated region
  $region10: #{resnet_forward.25} parent=0 // pred_check
    _
  $region11: #{resnet_forward.25} parent=0 // pred_check_branch
    %321 = sbr.rel (0) target = $region13
  $region12: #{resnet_forward.25} parent=0 // pred_region
    _
  $region13: #{resnet_forward.25} parent=0 // pred_fallthru
    _
  // Predicated region
  $region14: #{resnet_forward.25} parent=0 // pred_check
    _
  $region15: #{resnet_forward.25} parent=0 // pred_check_branch
    %323 = sbr.rel (0) target = $region17
  $region16: #{resnet_forward.25} parent=0 // pred_region
    _
  $region17: #{resnet_forward.25} parent=0 // pred_fallthru
    _

// kernel: resnet_forward.26
$region0: #{resnet_forward.26}
  #allocation0 [shape = 'u32[]', space=smem, size = 0x4, offset = 0x4, fixed_abs, tag = 'smem constant byte address 0x4 - core index']
  #allocation1 [shape = 'u32[144,128]{1,0:T(1,128)}', space=vmem, size = 0x12000, scoped, tag = 'internal scratch']
  %s0 = inlined_call_operand.vmem [shape: bf16[288,40], index: 0, kind: input, shape index: {}]
  %s1 = inlined_call_operand.vmem [shape: bf16[32,288], index: 1, kind: input, shape index: {}]
  %s2 = inlined_call_operand.vmem [shape: f32[32,1], index: 2, kind: input, shape index: {}]
  %s3 = inlined_call_operand.vmem [shape: bf16[32,40], index: 3, kind: output, shape index: {}]
  %s4 = sld [smem:[#allocation0]]
  $region22: #{resnet_forward.26} parent=0
    _
  %s6 = ssub.s32 1, %s4
  %s7 = scalar_select 0, %s6, %s4
  // Predicated region
  $region2: #{resnet_forward.26} parent=0 // pred_check
    _
  $region3: #{resnet_forward.26} parent=0 // pred_check_branch
    %9 = sbr.rel (0) target = $region5
  $region4: #{resnet_forward.26} parent=0 // pred_region
    _
  $region5: #{resnet_forward.26} parent=0 // pred_fallthru
    _
  // Predicated region
  $region6: #{resnet_forward.26} parent=0 // pred_check
    _
  $region7: #{resnet_forward.26} parent=0 // pred_check_branch
    %11 = sbr.rel (0) target = $region9
  $region8: #{resnet_forward.26} parent=0 // pred_region
    _
  $region9: #{resnet_forward.26} parent=0 // pred_fallthru
    _
  // Predicated region
  $region10: #{resnet_forward.26} parent=0 // pred_check
    _
  $region11: #{resnet_forward.26} parent=0 // pred_check_branch
    %13 = sbr.rel (0) target = $region13
  $region12: #{resnet_forward.26} parent=0 // pred_region
    _
  $region13: #{resnet_forward.26} parent=0 // pred_fallthru
    _
  %v15 = vld [vmem:[%s1] sm:$0xff]
  %v16 = vld [vmem:[%s1 + $0x8] sm:$0xf]
  %v17 = vld [vmem:[%s1 + $0xc] sm:$0xff]
  %v18 = vld [vmem:[%s1 + $0x14] sm:$0xf]
  %v19 = vld [vmem:[%s1 + $0x18] sm:$0xff]
  %v20 = vld [vmem:[%s1 + $0x20] sm:$0xf]
  %v21 = vld [vmem:[%s1 + $0x24] sm:$0xff]
  %v22 = vld [vmem:[%s1 + $0x2c] sm:$0xf]
  %v23 = vld [vmem:[%s0] sm:$0xf]
  %v24 = vld [vmem:[%s0 + $0x4] sm:$0xf]
  %v25 = vld [vmem:[%s0 + $0x8] sm:$0xf]
  %v26 = vld [vmem:[%s0 + $0xc] sm:$0xf]
  %v27 = vld [vmem:[%s0 + $0x10] sm:$0xf]
  %v28 = vld [vmem:[%s0 + $0x14] sm:$0xf]
  %v29 = vld [vmem:[%s0 + $0x18] sm:$0xf]
  %v30 = vld [vmem:[%s0 + $0x1c] sm:$0xf]
  %v31 = vld [vmem:[%s0 + $0x20] sm:$0xf]
  %v32 = vld [vmem:[%s0 + $0x24] sm:$0xf]
  %v33 = vld [vmem:[%s0 + $0x28] sm:$0xf]
  %v34 = vld [vmem:[%s0 + $0x2c] sm:$0xf]
  %v35 = vld [vmem:[%s0 + $0x30] sm:$0xf]
  %v36 = vld [vmem:[%s0 + $0x34] sm:$0xf]
  %v37 = vld [vmem:[%s0 + $0x38] sm:$0xf]
  %v38 = vld [vmem:[%s0 + $0x3c] sm:$0xf]
  %v39 = vld [vmem:[%s0 + $0x40] sm:$0xf]
  %v40 = vld [vmem:[%s0 + $0x44] sm:$0xf]
  %v41 = vld [vmem:[%s0 + $0x48] sm:$0xf]
  %v42 = vld [vmem:[%s0 + $0x4c] sm:$0xf]
  %v43 = vld [vmem:[%s0 + $0x50] sm:$0xf]
  %v44 = vld [vmem:[%s0 + $0x54] sm:$0xf]
  %v45 = vld [vmem:[%s0 + $0x58] sm:$0xf]
  %v46 = vld [vmem:[%s0 + $0x5c] sm:$0xf]
  %v47 = vld [vmem:[%s0 + $0x60] sm:$0xf]
  %v48 = vld [vmem:[%s0 + $0x64] sm:$0xf]
  %v49 = vld [vmem:[%s0 + $0x68] sm:$0xf]
  %v50 = vld [vmem:[%s0 + $0x6c] sm:$0xf]
  %v51 = vld [vmem:[%s0 + $0x70] sm:$0xf]
  %v52 = vld [vmem:[%s0 + $0x74] sm:$0xf]
  %v53 = vld [vmem:[%s0 + $0x78] sm:$0xf]
  %v54 = vld [vmem:[%s0 + $0x7c] sm:$0xf]
  %v55 = vld [vmem:[%s0 + $0x80] sm:$0xf]
  %v56 = vld [vmem:[%s0 + $0x84] sm:$0xf]
  %v57 = vld [vmem:[%s0 + $0x88] sm:$0xf]
  %v58 = vld [vmem:[%s0 + $0x8c] sm:$0xf]
  %v59 = vld [vmem:[%s2] sm:$0xff]
  %v60 = vld [vmem:[%s2 + $0x8] sm:$0xff]
  %v61 = vld [vmem:[%s2 + $0x10] sm:$0xff]
  %v62 = vld [vmem:[%s2 + $0x18] sm:$0xff]
  %64 = vset.pattern.permute.xlu0 0
  %65 = vperm.xlu0 %64, %v59
  %v66 = vpop.permute.xlu0 %65
  %69 = vset.pattern.permute.xlu0 0
  %70 = vperm.xlu0 %69, %v60
  %v71 = vpop.permute.xlu0 %70
  %74 = vset.pattern.permute.xlu0 0
  %75 = vperm.xlu0 %74, %v61
  %v76 = vpop.permute.xlu0 %75
  %79 = vset.pattern.permute.xlu0 0
  %80 = vperm.xlu0 %79, %v62
  %v81 = vpop.permute.xlu0 %80
  %v91 = vunpack.c.l.b16 %v15
  %v92 = vunpack.c.h.b16 %v15
  %v93 = vunpack.c.l.b16 %v16
  %v94 = vunpack.c.l.b16 %v17
  %v95 = vunpack.c.h.b16 %v17
  %v96 = vunpack.c.l.b16 %v18
  %v97 = vunpack.c.l.b16 %v19
  %v98 = vunpack.c.h.b16 %v19
  %v99 = vunpack.c.l.b16 %v20
  %v100 = vunpack.c.l.b16 %v21
  %v101 = vunpack.c.h.b16 %v21
  %v102 = vunpack.c.l.b16 %v22
  %v103 = vpack.c.b16 %v94, %v91
  %v104 = vpack.c.b16 %v95, %v92
  %v105 = vpack.c.b16 %v96, %v93
  %v106 = vpack.c.b16 %v100, %v97
  %v107 = vpack.c.b16 %v101, %v98
  %v108 = vpack.c.b16 %v102, %v99
  %v149 = vunpack.c.l.b16 %v23
  %v150 = vunpack.c.l.b16 %v24
  %v151 = vunpack.c.l.b16 %v25
  %v152 = vunpack.c.l.b16 %v26
  %v153 = vunpack.c.l.b16 %v27
  %v154 = vunpack.c.l.b16 %v28
  %v155 = vunpack.c.l.b16 %v29
  %v156 = vunpack.c.l.b16 %v30
  %v157 = vunpack.c.l.b16 %v31
  %v158 = vunpack.c.l.b16 %v32
  %v159 = vunpack.c.l.b16 %v33
  %v160 = vunpack.c.l.b16 %v34
  %v161 = vunpack.c.l.b16 %v35
  %v162 = vunpack.c.l.b16 %v36
  %v163 = vunpack.c.l.b16 %v37
  %v164 = vunpack.c.l.b16 %v38
  %v165 = vunpack.c.l.b16 %v39
  %v166 = vunpack.c.l.b16 %v40
  %v167 = vunpack.c.l.b16 %v41
  %v168 = vunpack.c.l.b16 %v42
  %v169 = vunpack.c.l.b16 %v43
  %v170 = vunpack.c.l.b16 %v44
  %v171 = vunpack.c.l.b16 %v45
  %v172 = vunpack.c.l.b16 %v46
  %v173 = vunpack.c.l.b16 %v47
  %v174 = vunpack.c.l.b16 %v48
  %v175 = vunpack.c.l.b16 %v49
  %v176 = vunpack.c.l.b16 %v50
  %v177 = vunpack.c.l.b16 %v51
  %v178 = vunpack.c.l.b16 %v52
  %v179 = vunpack.c.l.b16 %v53
  %v180 = vunpack.c.l.b16 %v54
  %v181 = vunpack.c.l.b16 %v55
  %v182 = vunpack.c.l.b16 %v56
  %v183 = vunpack.c.l.b16 %v57
  %v184 = vunpack.c.l.b16 %v58
  %v185 = vpack.c.b16 %v150, %v149
  %v186 = vpack.c.b16 %v152, %v151
  %v187 = vpack.c.b16 %v154, %v153
  %v188 = vpack.c.b16 %v156, %v155
  %v189 = vpack.c.b16 %v158, %v157
  %v190 = vpack.c.b16 %v160, %v159
  %v191 = vpack.c.b16 %v162, %v161
  %v192 = vpack.c.b16 %v164, %v163
  %v193 = vpack.c.b16 %v166, %v165
  %v194 = vpack.c.b16 %v168, %v167
  %v195 = vpack.c.b16 %v170, %v169
  %v196 = vpack.c.b16 %v172, %v171
  %v197 = vpack.c.b16 %v174, %v173
  %v198 = vpack.c.b16 %v176, %v175
  %v199 = vpack.c.b16 %v178, %v177
  %v200 = vpack.c.b16 %v180, %v179
  %v201 = vpack.c.b16 %v182, %v181
  %v202 = vpack.c.b16 %v184, %v183
  %vm221 = vcmask 261120
  %v223 = vsel %vm221, %v105, 0
  %v226 = vsel %vm221, %v108, 0
  %228 = vmatprep.subr.bf16.mxu0 0
  %229 = vmatpush1.bf16.msra.mxu0 %v185
  %230 = vmatprep.subr.bf16.mxu0 0
  %231 = vmatpush1.bf16.msra.mxu0 %v186
  %232 = vmatprep.subr.bf16.mxu0 0
  %233 = vmatpush1.bf16.msra.mxu0 %v187
  %234 = vmatprep.subr.bf16.mxu0 0
  %235 = vmatpush1.bf16.msra.mxu0 %v188
  %236 = vmatprep.subr.bf16.mxu0 0
  %237 = vmatpush1.bf16.msra.mxu0 %v189
  %238 = vmatprep.subr.bf16.mxu0 0
  %239 = vmatpush1.bf16.msra.mxu0 %v190
  %240 = vmatprep.subr.bf16.mxu0 0
  %241 = vmatpush1.bf16.msra.mxu0 %v191
  %242 = vmatprep.subr.bf16.mxu0 0
  %243 = vmatpush1.bf16.msra.mxu0 %v192
  %244 = vmatprep.subr.bf16.mxu0 0
  %245 = vmatpush1.bf16.msra.mxu0 %v193
  %246 = vmatprep.subr.bf16.mxu0 0
  %247 = vmatpush1.bf16.msra.mxu0 %v194
  %248 = vmatprep.subr.bf16.mxu0 0
  %249 = vmatpush1.bf16.msra.mxu0 %v195
  %250 = vmatprep.subr.bf16.mxu0 0
  %251 = vmatpush1.bf16.msra.mxu0 %v196
  %252 = vmatprep.subr.bf16.mxu0 0
  %253 = vmatpush1.bf16.msra.mxu0 %v197
  %254 = vmatprep.subr.bf16.mxu0 0
  %255 = vmatpush1.bf16.msra.mxu0 %v198
  %256 = vmatprep.subr.bf16.mxu0 0
  %257 = vmatpush1.bf16.msra.mxu0 %v199
  %258 = vmatprep.subr.bf16.mxu0 0
  %259 = vmatpush1.bf16.msra.mxu0 %v200
  %260 = vmatprep.mubr.bf16.mxu0 %v104
  %261 = vmatmul.mubr.bf16.gmra.mrb[0].mxu0 %v103
  %v262 = vpop.f32.mrb[0].mxu0
  %v263 = vadd.f32 %v66, %v262
  %v264 = vpop.f32.mrb[0].mxu0
  %v265 = vpop.f32.mrb[0].mxu0
  %v266 = vadd.f32 %v71, %v265
  %v267 = vpop.f32.mrb[0].mxu0
  %268 = vmatprep.mubr.bf16.mxu0 %v107
  %269 = vmatmul.mubr.bf16.gmra.mrb[0].mxu0 %v106
  %v270 = vpop.f32.mrb[0].mxu0
  %v271 = vadd.f32 %v76, %v270
  %v272 = vpop.f32.mrb[0].mxu0
  %v273 = vpop.f32.mrb[0].mxu0
  %v274 = vadd.f32 %v81, %v273
  %v275 = vpop.f32.mrb[0].mxu0
  %276 = vdwg.mxu0
  %277 = vmatprep.subr.bf16.mxu0 0
  %278 = vmatpush1.bf16.msra.mxu0 %v201
  %279 = vmatprep.subr.bf16.mxu0 0
  %280 = vmatpush1.bf16.msra.mxu0 %v202
  %281 = vmatprep.subr.bf16.mxu0 0
  %282 = vmatpush1.bf16.msra.mxu0 0
  %283 = vmatprep.subr.bf16.mxu0 0
  %284 = vmatpush1.bf16.msra.mxu0 0
  %285 = vmatprep.subr.bf16.mxu0 0
  %286 = vmatpush1.bf16.msra.mxu0 0
  %287 = vmatprep.subr.bf16.mxu0 0
  %288 = vmatpush1.bf16.msra.mxu0 0
  %289 = vmatprep.subr.bf16.mxu0 0
  %290 = vmatpush1.bf16.msra.mxu0 0
  %291 = vmatprep.subr.bf16.mxu0 0
  %292 = vmatpush1.bf16.msra.mxu0 0
  %293 = vmatprep.subr.bf16.mxu0 0
  %294 = vmatpush1.bf16.msra.mxu0 0
  %295 = vmatprep.subr.bf16.mxu0 0
  %296 = vmatpush1.bf16.msra.mxu0 0
  %297 = vmatprep.subr.bf16.mxu0 0
  %298 = vmatpush1.bf16.msra.mxu0 0
  %299 = vmatprep.subr.bf16.mxu0 0
  %300 = vmatpush1.bf16.msra.mxu0 0
  %301 = vmatprep.subr.bf16.mxu0 0
  %302 = vmatpush1.bf16.msra.mxu0 0
  %303 = vmatprep.subr.bf16.mxu0 0
  %304 = vmatpush1.bf16.msra.mxu0 0
  %305 = vmatprep.subr.bf16.mxu0 0
  %306 = vmatpush1.bf16.msra.mxu0 0
  %307 = vmatprep.subr.bf16.mxu0 0
  %308 = vmatpush1.bf16.msra.mxu0 0
  %309 = vmatprep.mubr.bf16.mxu0 0
  %310 = vmatmul.mubr.bf16.gmra.mrb[0].mxu0 %v223
  %v311 = vpop.f32.mrb[0].mxu0
  %v312 = vadd.f32 %v263, %v311
  %v313 = vpop.f32.mrb[0].mxu0
  %v314 = vpop.f32.mrb[0].mxu0
  %v315 = vadd.f32 %v266, %v314
  %v316 = vpop.f32.mrb[0].mxu0
  %317 = vmatprep.mubr.bf16.mxu0 0
  %318 = vmatmul.mubr.bf16.gmra.mrb[0].mxu0 %v226
  %v319 = vpop.f32.mrb[0].mxu0
  %v320 = vadd.f32 %v271, %v319
  %v321 = vpop.f32.mrb[0].mxu0
  %v322 = vpop.f32.mrb[0].mxu0
  %v323 = vadd.f32 %v274, %v322
  %v324 = vpop.f32.mrb[0].mxu0
  %325 = vdwg.mxu0
  %v326 = vmax.f32 %v312, 0.0
  %v327 = vmax.f32 %v315, 0.0
  %v328 = vmax.f32 %v320, 0.0
  %v329 = vmax.f32 %v323, 0.0
  %v330 = vpack.c.bf16 %v327, %v326
  %v331 = vpack.c.bf16 %v329, %v328
  %v334 = vunpack.c.l.b16 %v330
  %v335 = vunpack.c.h.b16 %v330
  %v336 = vunpack.c.l.b16 %v331
  %v337 = vunpack.c.h.b16 %v331
  %v338 = vpack.c.b16 %v334, %v334
  %v339 = vpack.c.b16 %v335, %v335
  %v340 = vpack.c.b16 %v336, %v336
  %v341 = vpack.c.b16 %v337, %v337
  %vm346 = vcmask 322560
  %347 = vst.msk [vmem:[%s3] sm:$0xf] %vm346, %v338
  %348 = vst.msk [vmem:[%s3 + $0x4] sm:$0xf] %vm346, %v339
  %349 = vst.msk [vmem:[%s3 + $0x8] sm:$0xf] %vm346, %v340
  %350 = vst.msk [vmem:[%s3 + $0xc] sm:$0xf] %vm346, %v341
  // Predicated region
  $region14: #{resnet_forward.26} parent=0 // pred_check
    _
  $region15: #{resnet_forward.26} parent=0 // pred_check_branch
    %352 = sbr.rel (0) target = $region17
  $region16: #{resnet_forward.26} parent=0 // pred_region
    _
  $region17: #{resnet_forward.26} parent=0 // pred_fallthru
    _
  // Predicated region
  $region18: #{resnet_forward.26} parent=0 // pred_check
    _
  $region19: #{resnet_forward.26} parent=0 // pred_check_branch
    %354 = sbr.rel (0) target = $region21
  $region20: #{resnet_forward.26} parent=0 // pred_region
    _
  $region21: #{resnet_forward.26} parent=0 // pred_fallthru
    _

// kernel: resnet_forward.28
$region0: #{resnet_forward.28}
  #allocation0 [shape = 'u32[]', space=smem, size = 0x4, offset = 0x4, fixed_abs, tag = 'smem constant byte address 0x4 - core index']
  #allocation1 [shape = 'u32[144,128]{1,0:T(1,128)}', space=vmem, size = 0x12000, scoped, tag = 'internal scratch']
  %s0 = inlined_call_operand.vmem [shape: bf16[128,24], index: 0, kind: input, shape index: {}]
  %s1 = inlined_call_operand.vmem [shape: bf16[32,128], index: 1, kind: input, shape index: {}]
  %s2 = inlined_call_operand.vmem [shape: f32[32,1], index: 2, kind: input, shape index: {}]
  %s3 = inlined_call_operand.vmem [shape: bf16[32,24], index: 3, kind: output, shape index: {}]
  %s4 = sld [smem:[#allocation0]]
  $region22: #{resnet_forward.28} parent=0
    _
  %s6 = ssub.s32 1, %s4
  %s7 = scalar_select 0, %s6, %s4
  // Predicated region
  $region2: #{resnet_forward.28} parent=0 // pred_check
    _
  $region3: #{resnet_forward.28} parent=0 // pred_check_branch
    %9 = sbr.rel (0) target = $region5
  $region4: #{resnet_forward.28} parent=0 // pred_region
    _
  $region5: #{resnet_forward.28} parent=0 // pred_fallthru
    _
  // Predicated region
  $region6: #{resnet_forward.28} parent=0 // pred_check
    _
  $region7: #{resnet_forward.28} parent=0 // pred_check_branch
    %11 = sbr.rel (0) target = $region9
  $region8: #{resnet_forward.28} parent=0 // pred_region
    _
  $region9: #{resnet_forward.28} parent=0 // pred_fallthru
    _
  // Predicated region
  $region10: #{resnet_forward.28} parent=0 // pred_check
    _
  $region11: #{resnet_forward.28} parent=0 // pred_check_branch
    %13 = sbr.rel (0) target = $region13
  $region12: #{resnet_forward.28} parent=0 // pred_region
    _
  $region13: #{resnet_forward.28} parent=0 // pred_fallthru
    _
  %v15 = vld [vmem:[%s1] sm:$0xf]
  %v16 = vld [vmem:[%s1 + $0x4] sm:$0xf]
  %v17 = vld [vmem:[%s1 + $0x8] sm:$0xf]
  %v18 = vld [vmem:[%s1 + $0xc] sm:$0xf]
  %v19 = vld [vmem:[%s0] sm:$0xf]
  %v20 = vld [vmem:[%s0 + $0x4] sm:$0xf]
  %v21 = vld [vmem:[%s0 + $0x8] sm:$0xf]
  %v22 = vld [vmem:[%s0 + $0xc] sm:$0xf]
  %v23 = vld [vmem:[%s0 + $0x10] sm:$0xf]
  %v24 = vld [vmem:[%s0 + $0x14] sm:$0xf]
  %v25 = vld [vmem:[%s0 + $0x18] sm:$0xf]
  %v26 = vld [vmem:[%s0 + $0x1c] sm:$0xf]
  %v27 = vld [vmem:[%s0 + $0x20] sm:$0xf]
  %v28 = vld [vmem:[%s0 + $0x24] sm:$0xf]
  %v29 = vld [vmem:[%s0 + $0x28] sm:$0xf]
  %v30 = vld [vmem:[%s0 + $0x2c] sm:$0xf]
  %v31 = vld [vmem:[%s0 + $0x30] sm:$0xf]
  %v32 = vld [vmem:[%s0 + $0x34] sm:$0xf]
  %v33 = vld [vmem:[%s0 + $0x38] sm:$0xf]
  %v34 = vld [vmem:[%s0 + $0x3c] sm:$0xf]
  %v35 = vld [vmem:[%s2] sm:$0xff]
  %v36 = vld [vmem:[%s2 + $0x8] sm:$0xff]
  %v37 = vld [vmem:[%s2 + $0x10] sm:$0xff]
  %v38 = vld [vmem:[%s2 + $0x18] sm:$0xff]
  %40 = vset.pattern.permute.xlu0 0
  %41 = vperm.xlu0 %40, %v35
  %v42 = vpop.permute.xlu0 %41
  %45 = vset.pattern.permute.xlu0 0
  %46 = vperm.xlu0 %45, %v36
  %v47 = vpop.permute.xlu0 %46
  %50 = vset.pattern.permute.xlu0 0
  %51 = vperm.xlu0 %50, %v37
  %v52 = vpop.permute.xlu0 %51
  %55 = vset.pattern.permute.xlu0 0
  %56 = vperm.xlu0 %55, %v38
  %v57 = vpop.permute.xlu0 %56
  %v63 = vunpack.c.l.b16 %v15
  %v64 = vunpack.c.l.b16 %v16
  %v65 = vunpack.c.l.b16 %v17
  %v66 = vunpack.c.l.b16 %v18
  %v67 = vpack.c.b16 %v64, %v63
  %v68 = vpack.c.b16 %v66, %v65
  %v87 = vunpack.c.l.b16 %v19
  %v88 = vunpack.c.l.b16 %v20
  %v89 = vunpack.c.l.b16 %v21
  %v90 = vunpack.c.l.b16 %v22
  %v91 = vunpack.c.l.b16 %v23
  %v92 = vunpack.c.l.b16 %v24
  %v93 = vunpack.c.l.b16 %v25
  %v94 = vunpack.c.l.b16 %v26
  %v95 = vunpack.c.l.b16 %v27
  %v96 = vunpack.c.l.b16 %v28
  %v97 = vunpack.c.l.b16 %v29
  %v98 = vunpack.c.l.b16 %v30
  %v99 = vunpack.c.l.b16 %v31
  %v100 = vunpack.c.l.b16 %v32
  %v101 = vunpack.c.l.b16 %v33
  %v102 = vunpack.c.l.b16 %v34
  %v103 = vpack.c.b16 %v88, %v87
  %v104 = vpack.c.b16 %v90, %v89
  %v105 = vpack.c.b16 %v92, %v91
  %v106 = vpack.c.b16 %v94, %v93
  %v107 = vpack.c.b16 %v96, %v95
  %v108 = vpack.c.b16 %v98, %v97
  %v109 = vpack.c.b16 %v100, %v99
  %v110 = vpack.c.b16 %v102, %v101
  %119 = vmatprep.subr.bf16.mxu0 0
  %120 = vmatpush1.bf16.msra.mxu0 %v103
  %121 = vmatprep.subr.bf16.mxu0 0
  %122 = vmatpush1.bf16.msra.mxu0 %v104
  %123 = vmatprep.subr.bf16.mxu0 0
  %124 = vmatpush1.bf16.msra.mxu0 %v105
  %125 = vmatprep.subr.bf16.mxu0 0
  %126 = vmatpush1.bf16.msra.mxu0 %v106
  %127 = vmatprep.subr.bf16.mxu0 0
  %128 = vmatpush1.bf16.msra.mxu0 %v107
  %129 = vmatprep.subr.bf16.mxu0 0
  %130 = vmatpush1.bf16.msra.mxu0 %v108
  %131 = vmatprep.subr.bf16.mxu0 0
  %132 = vmatpush1.bf16.msra.mxu0 %v109
  %133 = vmatprep.subr.bf16.mxu0 0
  %134 = vmatpush1.bf16.msra.mxu0 %v110
  %135 = vmatprep.subr.bf16.mxu0 0
  %136 = vmatpush1.bf16.msra.mxu0 0
  %137 = vmatprep.subr.bf16.mxu0 0
  %138 = vmatpush1.bf16.msra.mxu0 0
  %139 = vmatprep.subr.bf16.mxu0 0
  %140 = vmatpush1.bf16.msra.mxu0 0
  %141 = vmatprep.subr.bf16.mxu0 0
  %142 = vmatpush1.bf16.msra.mxu0 0
  %143 = vmatprep.subr.bf16.mxu0 0
  %144 = vmatpush1.bf16.msra.mxu0 0
  %145 = vmatprep.subr.bf16.mxu0 0
  %146 = vmatpush1.bf16.msra.mxu0 0
  %147 = vmatprep.subr.bf16.mxu0 0
  %148 = vmatpush1.bf16.msra.mxu0 0
  %149 = vmatprep.subr.bf16.mxu0 0
  %150 = vmatpush1.bf16.msra.mxu0 0
  %151 = vmatprep.mubr.bf16.mxu0 0
  %152 = vmatmul.mubr.bf16.gmra.mrb[0].mxu0 %v67
  %v153 = vpop.f32.mrb[0].mxu0
  %v154 = vadd.f32 %v42, %v153
  %v155 = vpop.f32.mrb[0].mxu0
  %v156 = vpop.f32.mrb[0].mxu0
  %v157 = vadd.f32 %v47, %v156
  %v158 = vpop.f32.mrb[0].mxu0
  %159 = vmatprep.mubr.bf16.mxu0 0
  %160 = vmatmul.mubr.bf16.gmra.mrb[0].mxu0 %v68
  %v161 = vpop.f32.mrb[0].mxu0
  %v162 = vadd.f32 %v52, %v161
  %v163 = vpop.f32.mrb[0].mxu0
  %v164 = vpop.f32.mrb[0].mxu0
  %v165 = vadd.f32 %v57, %v164
  %v166 = vpop.f32.mrb[0].mxu0
  %167 = vdwg.mxu0
  %v168 = vmax.f32 %v154, 0.0
  %v169 = vmax.f32 %v157, 0.0
  %v170 = vmax.f32 %v162, 0.0
  %v171 = vmax.f32 %v165, 0.0
  %v172 = vpack.c.bf16 %v169, %v168
  %v173 = vpack.c.bf16 %v171, %v170
  %v176 = vunpack.c.l.b16 %v172
  %v177 = vunpack.c.h.b16 %v172
  %v178 = vunpack.c.l.b16 %v173
  %v179 = vunpack.c.h.b16 %v173
  %v180 = vpack.c.b16 %v176, %v176
  %v181 = vpack.c.b16 %v177, %v177
  %v182 = vpack.c.b16 %v178, %v178
  %v183 = vpack.c.b16 %v179, %v179
  %vm188 = vcmask 191488
  %189 = vst.msk [vmem:[%s3] sm:$0xf] %vm188, %v180
  %190 = vst.msk [vmem:[%s3 + $0x4] sm:$0xf] %vm188, %v181
  %191 = vst.msk [vmem:[%s3 + $0x8] sm:$0xf] %vm188, %v182
  %192 = vst.msk [vmem:[%s3 + $0xc] sm:$0xf] %vm188, %v183
  // Predicated region
  $region14: #{resnet_forward.28} parent=0 // pred_check
    _
  $region15: #{resnet_forward.28} parent=0 // pred_check_branch
    %194 = sbr.rel (0) target = $region17
  $region16: #{resnet_forward.28} parent=0 // pred_region
    _
  $region17: #{resnet_forward.28} parent=0 // pred_fallthru
    _
  // Predicated region
  $region18: #{resnet_forward.28} parent=0 // pred_check
    _
  $region19: #{resnet_forward.28} parent=0 // pred_check_branch
    %196 = sbr.rel (0) target = $region21
  $region20: #{resnet_forward.28} parent=0 // pred_region
    _
  $region21: #{resnet_forward.28} parent=0 // pred_fallthru
    _

// kernel: resnet_forward.29
$region0: #{resnet_forward.29}
  #allocation0 [shape = 'u32[]', space=smem, size = 0x4, offset = 0x4, fixed_abs, tag = 'smem constant byte address 0x4 - core index']
  #allocation1 [shape = 'u32[144,128]{1,0:T(1,128)}', space=vmem, size = 0x12000, scoped, tag = 'internal scratch']
  %s0 = inlined_call_operand.vmem [shape: bf16[128,10], index: 0, kind: input, shape index: {}]
  %s1 = inlined_call_operand.vmem [shape: bf16[32,128], index: 1, kind: input, shape index: {}]
  %s2 = inlined_call_operand.vmem [shape: f32[32,1], index: 2, kind: input, shape index: {}]
  %s3 = inlined_call_operand.vmem [shape: f32[32,10], index: 3, kind: output, shape index: {}]
  %s4 = sld [smem:[#allocation0]]
  $region22: #{resnet_forward.29} parent=0
    _
  %s6 = ssub.s32 1, %s4
  %s7 = scalar_select 0, %s6, %s4
  // Predicated region
  $region2: #{resnet_forward.29} parent=0 // pred_check
    _
  $region3: #{resnet_forward.29} parent=0 // pred_check_branch
    %9 = sbr.rel (0) target = $region5
  $region4: #{resnet_forward.29} parent=0 // pred_region
    _
  $region5: #{resnet_forward.29} parent=0 // pred_fallthru
    _
  // Predicated region
  $region6: #{resnet_forward.29} parent=0 // pred_check
    _
  $region7: #{resnet_forward.29} parent=0 // pred_check_branch
    %11 = sbr.rel (0) target = $region9
  $region8: #{resnet_forward.29} parent=0 // pred_region
    _
  $region9: #{resnet_forward.29} parent=0 // pred_fallthru
    _
  // Predicated region
  $region10: #{resnet_forward.29} parent=0 // pred_check
    _
  $region11: #{resnet_forward.29} parent=0 // pred_check_branch
    %13 = sbr.rel (0) target = $region13
  $region12: #{resnet_forward.29} parent=0 // pred_region
    _
  $region13: #{resnet_forward.29} parent=0 // pred_fallthru
    _
  %v15 = vld [vmem:[%s1] sm:$0xf]
  %v16 = vld [vmem:[%s1 + $0x4] sm:$0xf]
  %v17 = vld [vmem:[%s1 + $0x8] sm:$0xf]
  %v18 = vld [vmem:[%s1 + $0xc] sm:$0xf]
  %v19 = vld [vmem:[%s0] sm:$0xf]
  %v20 = vld [vmem:[%s0 + $0x4] sm:$0xf]
  %v21 = vld [vmem:[%s0 + $0x8] sm:$0xf]
  %v22 = vld [vmem:[%s0 + $0xc] sm:$0xf]
  %v23 = vld [vmem:[%s0 + $0x10] sm:$0xf]
  %v24 = vld [vmem:[%s0 + $0x14] sm:$0xf]
  %v25 = vld [vmem:[%s0 + $0x18] sm:$0xf]
  %v26 = vld [vmem:[%s0 + $0x1c] sm:$0xf]
  %v27 = vld [vmem:[%s0 + $0x20] sm:$0xf]
  %v28 = vld [vmem:[%s0 + $0x24] sm:$0xf]
  %v29 = vld [vmem:[%s0 + $0x28] sm:$0xf]
  %v30 = vld [vmem:[%s0 + $0x2c] sm:$0xf]
  %v31 = vld [vmem:[%s0 + $0x30] sm:$0xf]
  %v32 = vld [vmem:[%s0 + $0x34] sm:$0xf]
  %v33 = vld [vmem:[%s0 + $0x38] sm:$0xf]
  %v34 = vld [vmem:[%s0 + $0x3c] sm:$0xf]
  %v35 = vld [vmem:[%s2] sm:$0xff]
  %v36 = vld [vmem:[%s2 + $0x8] sm:$0xff]
  %v37 = vld [vmem:[%s2 + $0x10] sm:$0xff]
  %v38 = vld [vmem:[%s2 + $0x18] sm:$0xff]
  %40 = vset.pattern.permute.xlu0 0
  %41 = vperm.xlu0 %40, %v35
  %v42 = vpop.permute.xlu0 %41
  %45 = vset.pattern.permute.xlu0 0
  %46 = vperm.xlu0 %45, %v36
  %v47 = vpop.permute.xlu0 %46
  %50 = vset.pattern.permute.xlu0 0
  %51 = vperm.xlu0 %50, %v37
  %v52 = vpop.permute.xlu0 %51
  %55 = vset.pattern.permute.xlu0 0
  %56 = vperm.xlu0 %55, %v38
  %v57 = vpop.permute.xlu0 %56
  %v63 = vunpack.c.l.b16 %v15
  %v64 = vunpack.c.l.b16 %v16
  %v65 = vunpack.c.l.b16 %v17
  %v66 = vunpack.c.l.b16 %v18
  %v67 = vpack.c.b16 %v64, %v63
  %v68 = vpack.c.b16 %v66, %v65
  %v87 = vunpack.c.l.b16 %v19
  %v88 = vunpack.c.l.b16 %v20
  %v89 = vunpack.c.l.b16 %v21
  %v90 = vunpack.c.l.b16 %v22
  %v91 = vunpack.c.l.b16 %v23
  %v92 = vunpack.c.l.b16 %v24
  %v93 = vunpack.c.l.b16 %v25
  %v94 = vunpack.c.l.b16 %v26
  %v95 = vunpack.c.l.b16 %v27
  %v96 = vunpack.c.l.b16 %v28
  %v97 = vunpack.c.l.b16 %v29
  %v98 = vunpack.c.l.b16 %v30
  %v99 = vunpack.c.l.b16 %v31
  %v100 = vunpack.c.l.b16 %v32
  %v101 = vunpack.c.l.b16 %v33
  %v102 = vunpack.c.l.b16 %v34
  %v103 = vpack.c.b16 %v88, %v87
  %v104 = vpack.c.b16 %v90, %v89
  %v105 = vpack.c.b16 %v92, %v91
  %v106 = vpack.c.b16 %v94, %v93
  %v107 = vpack.c.b16 %v96, %v95
  %v108 = vpack.c.b16 %v98, %v97
  %v109 = vpack.c.b16 %v100, %v99
  %v110 = vpack.c.b16 %v102, %v101
  %119 = vmatprep.subr.bf16.mxu0 0
  %120 = vmatpush1.bf16.msra.mxu0 %v103
  %121 = vmatprep.subr.bf16.mxu0 0
  %122 = vmatpush1.bf16.msra.mxu0 %v104
  %123 = vmatprep.subr.bf16.mxu0 0
  %124 = vmatpush1.bf16.msra.mxu0 %v105
  %125 = vmatprep.subr.bf16.mxu0 0
  %126 = vmatpush1.bf16.msra.mxu0 %v106
  %127 = vmatprep.subr.bf16.mxu0 0
  %128 = vmatpush1.bf16.msra.mxu0 %v107
  %129 = vmatprep.subr.bf16.mxu0 0
  %130 = vmatpush1.bf16.msra.mxu0 %v108
  %131 = vmatprep.subr.bf16.mxu0 0
  %132 = vmatpush1.bf16.msra.mxu0 %v109
  %133 = vmatprep.subr.bf16.mxu0 0
  %134 = vmatpush1.bf16.msra.mxu0 %v110
  %135 = vmatprep.subr.bf16.mxu0 0
  %136 = vmatpush1.bf16.msra.mxu0 0
  %137 = vmatprep.subr.bf16.mxu0 0
  %138 = vmatpush1.bf16.msra.mxu0 0
  %139 = vmatprep.subr.bf16.mxu0 0
  %140 = vmatpush1.bf16.msra.mxu0 0
  %141 = vmatprep.subr.bf16.mxu0 0
  %142 = vmatpush1.bf16.msra.mxu0 0
  %143 = vmatprep.subr.bf16.mxu0 0
  %144 = vmatpush1.bf16.msra.mxu0 0
  %145 = vmatprep.subr.bf16.mxu0 0
  %146 = vmatpush1.bf16.msra.mxu0 0
  %147 = vmatprep.subr.bf16.mxu0 0
  %148 = vmatpush1.bf16.msra.mxu0 0
  %149 = vmatprep.subr.bf16.mxu0 0
  %150 = vmatpush1.bf16.msra.mxu0 0
  %151 = vmatprep.mubr.bf16.mxu0 0
  %152 = vmatmul.mubr.bf16.gmra.mrb[0].mxu0 %v67
  %v153 = vpop.f32.mrb[0].mxu0
  %v154 = vadd.f32 %v42, %v153
  %v155 = vpop.f32.mrb[0].mxu0
  %v156 = vpop.f32.mrb[0].mxu0
  %v157 = vadd.f32 %v47, %v156
  %v158 = vpop.f32.mrb[0].mxu0
  %159 = vmatprep.mubr.bf16.mxu0 0
  %160 = vmatmul.mubr.bf16.gmra.mrb[0].mxu0 %v68
  %v161 = vpop.f32.mrb[0].mxu0
  %v162 = vadd.f32 %v52, %v161
  %v163 = vpop.f32.mrb[0].mxu0
  %v164 = vpop.f32.mrb[0].mxu0
  %v165 = vadd.f32 %v57, %v164
  %v166 = vpop.f32.mrb[0].mxu0
  %167 = vdwg.mxu0
  %vm168 = vcmask 80896
  %169 = vst.msk [vmem:[%s3] sm:$0xff] %vm168, %v154
  %170 = vst.msk [vmem:[%s3 + $0x8] sm:$0xff] %vm168, %v157
  %171 = vst.msk [vmem:[%s3 + $0x10] sm:$0xff] %vm168, %v162
  %172 = vst.msk [vmem:[%s3 + $0x18] sm:$0xff] %vm168, %v165
  // Predicated region
  $region14: #{resnet_forward.29} parent=0 // pred_check
    _
  $region15: #{resnet_forward.29} parent=0 // pred_check_branch
    %174 = sbr.rel (0) target = $region17
  $region16: #{resnet_forward.29} parent=0 // pred_region
    _
  $region17: #{resnet_forward.29} parent=0 // pred_fallthru
    _
  // Predicated region
  $region18: #{resnet_forward.29} parent=0 // pred_check
    _
  $region19: #{resnet_forward.29} parent=0 // pred_check_branch
    %176 = sbr.rel (0) target = $region21
  $region20: #{resnet_forward.29} parent=0 // pred_region
    _
  $region21: #{resnet_forward.29} parent=0 // pred_fallthru
    _

</llo_original>
